<compile_context>
chip_gen: v7x
topology: tpu7x:2x2x1
jax: 0.10.0
libtpu: 0.0.40
codegen_flags: <defaults>
</compile_context>

<pallas_src>
import functools

import jax
import jax.numpy as jnp
from jax.experimental import pallas as pl
from jax.experimental.pallas import tpu as pltpu


# ----------------------------------------------------------------------------
# Fused residual stack: all L residual blocks in one pallas_call
# ----------------------------------------------------------------------------
def _make_residual_stack_kernel(H, W, D, has_condition):
    """D = max dilation halo (2**(L-1)); dilation per layer comes from offs."""
    HW = H * W

    def kernel(*refs):
        if has_condition:
            (offs_ref, x_ref, c_ref, temb_ref,
             dil_w_ref, dil_b_ref, cond_w_ref, cond_b_ref,
             out_w_ref, out_b_ref,
             skip_ref, xpad, xs) = refs
        else:
            (offs_ref, x_ref, temb_ref,
             dil_w_ref, dil_b_ref,
             out_w_ref, out_b_ref,
             skip_ref, xpad, xs) = refs
            c_ref = cond_w_ref = cond_b_ref = None

        l = pl.program_id(1)

        # Layer 0: zero the padded activation scratch (halo stays zero for the
        # whole stack), load x into its center, zero the skip accumulator.
        @pl.when(l == 0)
        def _init():
            xpad[...] = jnp.zeros_like(xpad)
            xpad[D:D + H, D:D + W, :] = x_ref[0].reshape(H, W, 128)
            skip_ref[...] = jnp.zeros_like(skip_ref)

        # 3 kx-pre-shifted, compacted bf16 copies of the padded tile (shared by
        # the 3 ky taps) -> only 3 misaligned slice/cast copies per layer
        # instead of 9.  Offsets D + (k-1)*2**l come from the SMEM table.
        for kx in range(3):
            col = offs_ref[l * 3 + kx]
            xs[:, :, kx * 128:(kx + 1) * 128] = (
                xpad[:, pl.ds(col, W), :].astype(jnp.bfloat16))

        # Dilated 3x3 conv == 3 accumulated (HW,384)@(384,256) MXU matmuls
        # (kx folded into K), f32 accumulation.
        acc = None
        for ky in range(3):
            row = offs_ref[l * 3 + ky]
            tap = xs[pl.ds(row, H), :, :].reshape(HW, 384)
            part = jnp.dot(tap, dil_w_ref[0, ky],
                           preferred_element_type=jnp.float32)
            acc = part if acc is None else acc + part

        h = acc + dil_b_ref[0] + temb_ref[0]          # (HW,256) + (1,256) bcasts
        if has_condition:
            h = h + jnp.dot(c_ref[0], cond_w_ref[0],
                            preferred_element_type=jnp.float32)
            h = h + cond_b_ref[0]

        # Gated activation — f32 elementwise (v5e has no bf16 VPU/EUP path).
        g = jnp.tanh(h) * jax.nn.sigmoid(h)

        # 1x1 output conv (bf16 MXU, f32 accumulate).
        res = jnp.dot(g.astype(jnp.bfloat16), out_w_ref[0],
                      preferred_element_type=jnp.float32) + out_b_ref[0]

        # Residual update of x (stays in the padded VMEM scratch, never
        # touches HBM between layers) + skip accumulation.
        x_center = xpad[D:D + H, D:D + W, :].reshape(HW, 128)
        xpad[D:D + H, D:D + W, :] = (x_center + res).reshape(H, W, 128)
        skip_ref[...] = skip_ref[...] + res.reshape(1, HW, 128)

    return kernel


def residual_stack(x, c, temb, lp, H, W):
    """Run all residual blocks fused; returns skip_sum (B, H*W, 128) f32.

    x    : (B, H*W, 128) f32     activations from the input block
    c    : (B, H*W, 256) bf16    processed condition, or None
    temb : (B, 1, 256)   f32     timestep embedding (per batch)
    lp   : dict of stacked per-layer weights (leading axis L)
    """
    B, HW, CH = x.shape
    assert CH == 128 and HW == H * W
    assert W % 8 == 0, "W must be a multiple of 8 for in-kernel window reshapes"
    L = lp["dil_w"].shape[0]
    D = 2 ** (L - 1)                                   # max dilation halo
    Hp = H + 2 * D
    Wp = -(-(W + 2 * D) // 8) * 8                      # sublane-aligned width
    has_condition = c is not None

    # Per-(layer, tap) spatial offsets into the max-dilation-padded tile,
    # prefetched into SMEM:  offs[3*l + k] = D + (k - 1) * 2**l.
    offs = jnp.asarray(
        [D + (k - 1) * (2 ** l) for l in range(L) for k in range(3)],
        dtype=jnp.int32)

    # Batch-resident operands (block index constant along the layer axis).
    in_specs = [pl.BlockSpec((1, HW, 128), lambda b, l, o: (b, 0, 0))]
    operands = [x]
    if has_condition:
        in_specs.append(pl.BlockSpec((1, HW, 256), lambda b, l, o: (b, 0, 0)))
        operands.append(c)
    in_specs.append(pl.BlockSpec((1, 1, 256), lambda b, l, o: (b, 0, 0)))
    operands.append(temb)

    # Stacked per-layer weights (blocked along L -> pipelined across layers).
    in_specs += [
        pl.BlockSpec((1, 3, 384, 256), lambda b, l, o: (l, 0, 0, 0)),
        pl.BlockSpec((1, 1, 256), lambda b, l, o: (l, 0, 0)),
    ]
    operands += [lp["dil_w"], lp["dil_b"]]
    if has_condition:
        in_specs += [
            pl.BlockSpec((1, 256, 256), lambda b, l, o: (l, 0, 0)),
            pl.BlockSpec((1, 1, 256), lambda b, l, o: (l, 0, 0)),
        ]
        operands += [lp["cond_w"], lp["cond_b"]]
    in_specs += [
        pl.BlockSpec((1, 256, 128), lambda b, l, o: (l, 0, 0)),
        pl.BlockSpec((1, 1, 128), lambda b, l, o: (l, 0, 0)),
    ]
    operands += [lp["out_w"], lp["out_b"]]

    # Scoped-VMEM limit derived from the actual footprint (double-buffered
    # blocks + scratch).  TODO(synk): for production H*W on v7x (64 MiB
    # physical VMEM) add an HW-tile grid axis with halo handling (also gives
    # its 2 TensorCores more parallel steps) instead of growing this limit.
    blk = HW * 128 * 4 + 256 * 4 + HW * 128 * 4            # x + temb + skip out
    blk += 3 * 384 * 256 * 2 + 256 * 4                      # dil_w + dil_b
    blk += 256 * 128 * 2 + 128 * 4                          # out_w + out_b
    if has_condition:
        blk += HW * 256 * 2 + 256 * 256 * 2 + 256 * 4       # c + cond_w + cond_b
    scratch = Hp * Wp * 128 * 4 + Hp * W * 384 * 2
    vmem_limit = max(32 * 1024 * 1024,
                     min(int(1.5 * (2 * blk + scratch)), 100 * 1024 * 1024))

    kernel = _make_residual_stack_kernel(H, W, D, has_condition)
    skip_sum = pl.pallas_call(
        kernel,
        out_shape=jax.ShapeDtypeStruct((B, HW, 128), jnp.float32),
        grid_spec=pltpu.PrefetchScalarGridSpec(
            num_scalar_prefetch=1,
            grid=(B, L),
            in_specs=in_specs,
            out_specs=pl.BlockSpec((1, HW, 128), lambda b, l, o: (b, 0, 0)),
            scratch_shapes=[
                pltpu.VMEM((Hp, Wp, 128), jnp.float32),     # padded x (halo=0)
                pltpu.VMEM((Hp, W, 3 * 128), jnp.bfloat16),  # kx-shifted taps
            ],
        ),
        compiler_params=pltpu.CompilerParams(
            dimension_semantics=("parallel", "arbitrary"),
            vmem_limit_bytes=vmem_limit,
        ),
    )(offs, *operands)
    return skip_sum


# ----------------------------------------------------------------------------
# Fused condition block (3x3 conv 1->256  +  1x1 conv 256->256), bf16 output
# ----------------------------------------------------------------------------
def _condition_kernel(p_ref, w1_ref, b1_ref, w2_ref, b2_ref, c_ref):
    p = p_ref[0].astype(jnp.bfloat16)                              # (HW,16)
    h = jnp.dot(p, w1_ref[...], preferred_element_type=jnp.float32) + b1_ref[...]
    c = jnp.dot(h.astype(jnp.bfloat16), w2_ref[...],
                preferred_element_type=jnp.float32) + b2_ref[...]
    c_ref[...] = c.reshape(c_ref.shape).astype(c_ref.dtype)


def condition_block(condition_nchw, params):
    B, _, H, W = condition_nchw.shape
    HW = H * W
    cond = jnp.transpose(condition_nchw, (0, 2, 3, 1))              # (B,H,W,1)
    # im2col of the single-channel condition (tiny: 9 lanes); contraction dim
    # zero-padded to 16 so the bf16 MXU contraction is tile-aligned.
    cp = jnp.pad(cond, ((0, 0), (1, 1), (1, 1), (0, 0)))
    taps = [cp[:, ky:ky + H, kx:kx + W, 0]
            for ky in range(3) for kx in range(3)]
    patches = jnp.stack(taps, axis=-1).reshape(B, HW, 9)
    patches = jnp.pad(patches, ((0, 0), (0, 0), (0, 7)))            # (B,HW,16)

    return pl.pallas_call(
        _condition_kernel,
        out_shape=jax.ShapeDtypeStruct((B, HW, 256), jnp.bfloat16),  # bf16 I/O
        grid_spec=pltpu.PrefetchScalarGridSpec(
            num_scalar_prefetch=0,
            grid=(B,),
            in_specs=[
                pl.BlockSpec((1, HW, 16), lambda b: (b, 0, 0)),
                pl.BlockSpec((16, 256), lambda b: (0, 0)),
                pl.BlockSpec((1, 256), lambda b: (0, 0)),
                pl.BlockSpec((256, 256), lambda b: (0, 0)),
                pl.BlockSpec((1, 256), lambda b: (0, 0)),
            ],
            out_specs=pl.BlockSpec((1, HW, 256), lambda b: (b, 0, 0)),
        ),
        compiler_params=pltpu.CompilerParams(
            dimension_semantics=("parallel",)),
    )(patches, params["cond1_w"], params["cond1_b"],
      params["cond2_w"], params["cond2_b"])


# ----------------------------------------------------------------------------
# Fused output block (1x1 conv 128->128, relu, 1x1 conv 128->C), lane-dense
# transposed output: writes (B, C, HW) == NCHW after a free reshape.
# ----------------------------------------------------------------------------
def _output_kernel(s_ref, w1t_ref, b1_ref, w2t_ref, b2_ref, o_ref):
    st = s_ref[0].T.astype(jnp.bfloat16)                            # (128,HW)
    h = jnp.dot(w1t_ref[...], st, preferred_element_type=jnp.float32)
    h = jnp.maximum(h + b1_ref[...], 0.0)                           # (128,HW)
    o = jnp.dot(w2t_ref[...], h.astype(jnp.bfloat16),
                preferred_element_type=jnp.float32) + b2_ref[...]   # (C,HW)
    o_ref[...] = o.reshape(o_ref.shape).astype(o_ref.dtype)


def output_block(skip_sum, params, n_channels):
    B, HW, _ = skip_sum.shape
    return pl.pallas_call(
        _output_kernel,
        out_shape=jax.ShapeDtypeStruct((B, n_channels, HW), jnp.float32),
        grid_spec=pltpu.PrefetchScalarGridSpec(
            num_scalar_prefetch=0,
            grid=(B,),
            in_specs=[
                pl.BlockSpec((1, HW, 128), lambda b: (b, 0, 0)),
                pl.BlockSpec((128, 128), lambda b: (0, 0)),
                pl.BlockSpec((128, 1), lambda b: (0, 0)),
                pl.BlockSpec((n_channels, 128), lambda b: (0, 0)),
                pl.BlockSpec((n_channels, 1), lambda b: (0, 0)),
            ],
            out_specs=pl.BlockSpec((1, n_channels, HW), lambda b: (b, 0, 0)),
        ),
        compiler_params=pltpu.CompilerParams(
            dimension_semantics=("parallel",)),
    )(skip_sum, params["skip1_wt"], params["skip1_b"],
      params["skip2_wt"], params["skip2_b"])


# ----------------------------------------------------------------------------
# Parameter initialization (deterministic, synthetic)
# ----------------------------------------------------------------------------
def init_params(key, n_channels, n_residual_layers, n_timesteps):
    bf16 = jnp.bfloat16
    L = n_residual_layers

    def nrm(k, shape, dtype=jnp.float32, scale=0.05):
        return (scale * jax.random.normal(k, shape, jnp.float32)).astype(dtype)

    keys = iter(jax.random.split(key, 20 + 6 * L))
    p = {
        # _InputBlock: Conv2d(n_channels, 128, 1x1) — tiny K, plain JAX.
        "in_w": nrm(next(keys), (n_channels, 128)),
        "in_b": nrm(next(keys), (128,)),
        # _StepEmbedding: Linear(n_timesteps,512), Linear(512,512) — plain JAX.
        "fc1_w": nrm(next(keys), (n_timesteps, 512)),
        "fc1_b": nrm(next(keys), (512,)),
        "fc2_w": nrm(next(keys), (512, 512)),
        "fc2_b": nrm(next(keys), (512,)),
        # _ConditionBlock (3x3 taps stored (9,256), K zero-padded to 16).
        "cond1_w": jnp.pad(nrm(next(keys), (3, 3, 1, 256)).reshape(9, 256),
                           ((0, 7), (0, 0))).astype(bf16),
        "cond1_b": nrm(next(keys), (1, 256)),
        "cond2_w": nrm(next(keys), (256, 256), dtype=bf16),
        "cond2_b": nrm(next(keys), (1, 256)),
        # _OutputBlock — stored transposed so the kernel emits (C,HW) lane-dense.
        "skip1_wt": nrm(next(keys), (128, 128), dtype=bf16),   # = W1^T
        "skip1_b": nrm(next(keys), (128, 1)),
        "skip2_wt": nrm(next(keys), (n_channels, 128), dtype=bf16),  # = W2^T
        "skip2_b": nrm(next(keys), (n_channels, 1)),
    }

    # Per-layer weights, stacked along a leading L axis for the fused kernel.
    dil_w, dil_b, cond_w, cond_b, out_w, out_b = [], [], [], [], [], []
    for _ in range(L):
        # dilated Conv2d(128,256,3x3): taps (ky,kx,cin,cout) -> per-ky (384,256)
        # with kx folded into the contraction dim (matches the kernel's xs layout).
        dil_w.append(nrm(next(keys), (3, 3, 128, 256))
                     .reshape(3, 384, 256).astype(bf16))
        dil_b.append(nrm(next(keys), (1, 256)))
        cond_w.append(nrm(next(keys), (256, 256), dtype=bf16))
        cond_b.append(nrm(next(keys), (1, 256)))
        out_w.append(nrm(next(keys), (256, 128), dtype=bf16))
        out_b.append(nrm(next(keys), (1, 128)))
    p["res"] = {
        "dil_w": jnp.stack(dil_w), "dil_b": jnp.stack(dil_b),
        "cond_w": jnp.stack(cond_w), "cond_b": jnp.stack(cond_b),
        "out_w": jnp.stack(out_w), "out_b": jnp.stack(out_b),
    }
    return p


# ----------------------------------------------------------------------------
# DiffEEG forward
# ----------------------------------------------------------------------------
def diffeeg_forward(params, eeg_input, noise, timestep, condition=None):
    """
    eeg_input, noise : (B, C, H, W)  NCHW (PyTorch convention)
    timestep         : (B,) int32 timestep indices
    condition        : (B, 1, H, W) or None
    returns          : (B, C, H, W)
    """
    B, C, H, W = eeg_input.shape
    HW = H * W

    # ----- _InputBlock (K = C is tiny -> plain JAX/XLA) -----
    xin = jnp.transpose(eeg_input + noise, (0, 2, 3, 1)).reshape(B * HW, C)
    x = jax.nn.relu(xin @ params["in_w"] + params["in_b"]).reshape(B, HW, 128)

    # ----- _StepEmbedding (tiny -> plain JAX; one-hot matmul == row gather) -----
    # TODO(synk): PyTorch feeds a (B,) timestep into Linear(n_timesteps, 512);
    # that only type-checks if the timestep is one-hot encoded, so the integer
    # timestep is treated as an index (gather of fc1_w rows == one-hot @ fc1_w).
    t = params["fc1_w"][timestep] + params["fc1_b"]
    t = jax.nn.sigmoid(t @ params["fc2_w"] + params["fc2_b"])        # (B,512)
    # TODO(synk): the reference adds a 512-channel t_emb to a 256-channel h
    # (invalid broadcast in PyTorch); we use the first 256 channels.
    temb = t[:, :256].reshape(B, 1, 256)

    # ----- _ConditionBlock (one fused kernel, bf16 output kept for all layers) -----
    c = condition_block(condition, params) if condition is not None else None

    # ----- residual stack: ALL layers in one fused Pallas kernel -----
    skip_sum = residual_stack(x, c, temb, params["res"], H, W)

    # ----- _OutputBlock (fused, lane-dense transposed output == NCHW) -----
    out_t = output_block(skip_sum, params, C)                        # (B,C,HW)
    return out_t.reshape(B, C, H, W)


# ----------------------------------------------------------------------------
# Demo
# ----------------------------------------------------------------------------
if __name__ == "__main__":
    B, C, H, W = 2, 4, 8, 16
    n_timesteps = 8
    n_residual_layers = 3

    key = jax.random.PRNGKey(0)
    kp, k1, k2, k3, k4 = jax.random.split(key, 5)

    params = init_params(kp, n_channels=C,
                         n_residual_layers=n_residual_layers,
                         n_timesteps=n_timesteps)

    eeg = jax.random.normal(k1, (B, C, H, W), dtype=jnp.float32)
    noise = jax.random.normal(k2, (B, C, H, W), dtype=jnp.float32)
    timestep = jax.random.randint(k3, (B,), 0, n_timesteps)
    condition = jax.random.normal(k4, (B, 1, H, W), dtype=jnp.float32)

    fwd = jax.jit(functools.partial(diffeeg_forward, params))
    out = fwd(eeg, noise, timestep, condition)
    jax.block_until_ready(out)
    assert out.shape == (B, C, H, W)
    print("KERNEL_OK")
</pallas_src>

<mosaic_0001>
module attributes {stable_mosaic.version = 11 : i64} {
  func.func @_condition_kernel(%arg0: i32, %arg1: memref<1x128x16xf32, #tpu.memory_space<vmem>>, %arg2: memref<16x256xbf16, #tpu.memory_space<vmem>>, %arg3: memref<1x256xf32, #tpu.memory_space<vmem>>, %arg4: memref<256x256xbf16, #tpu.memory_space<vmem>>, %arg5: memref<1x256xf32, #tpu.memory_space<vmem>>, %arg6: memref<1x128x256xbf16, #tpu.memory_space<vmem>>) attributes {dimension_semantics = [#tpu.dimension_semantics<parallel>], iteration_bounds = array<i64: 2>, scalar_prefetch = 0 : i64, scratch_operands = 0 : i64, tpu.core_type = #tpu.core_type<tc>, window_params = [{transform_indices = @transform_0, window_bounds = array<i64: 1, 128, 16>}, {pipeline_mode = #tpu.pipeline_mode<synchronous>, transform_indices = @transform_1, window_bounds = array<i64: 16, 256>}, {pipeline_mode = #tpu.pipeline_mode<synchronous>, transform_indices = @transform_2, window_bounds = array<i64: 1, 256>}, {pipeline_mode = #tpu.pipeline_mode<synchronous>, transform_indices = @transform_3, window_bounds = array<i64: 256, 256>}, {pipeline_mode = #tpu.pipeline_mode<synchronous>, transform_indices = @transform_4, window_bounds = array<i64: 1, 256>}, {transform_indices = @transform_5, window_bounds = array<i64: 1, 128, 256>}]} {
    %c0 = arith.constant 0 : index
    %c0_0 = arith.constant 0 : index
    %c0_1 = arith.constant 0 : index
    %0 = vector.load %arg1[%c0, %c0_0, %c0_1] : memref<1x128x16xf32, #tpu.memory_space<vmem>>, vector<1x128x16xf32>
    %1 = vector.shape_cast %0 : vector<1x128x16xf32> to vector<128x16xf32>
    %2 = arith.truncf %1 : vector<128x16xf32> to vector<128x16xbf16>
    %c0_2 = arith.constant 0 : index
    %c0_3 = arith.constant 0 : index
    %3 = vector.load %arg2[%c0_2, %c0_3] : memref<16x256xbf16, #tpu.memory_space<vmem>>, vector<16x256xbf16>
    %cst = arith.constant dense<0.000000e+00> : vector<128x256xf32>
    %4 = tpu.matmul %2, %3, %cst {dimension_numbers = #tpu.dot_dimension_numbers<[1], [0], [0], [1], [0, 0, 1, 1], [], []>} : vector<128x16xbf16>, vector<16x256xbf16>, vector<128x256xf32> -> vector<128x256xf32>
    %c0_4 = arith.constant 0 : index
    %c0_5 = arith.constant 0 : index
    %5 = vector.load %arg3[%c0_4, %c0_5] : memref<1x256xf32, #tpu.memory_space<vmem>>, vector<1x256xf32>
    %6 = vector.broadcast %5 : vector<1x256xf32> to vector<128x256xf32>
    %7 = arith.addf %4, %6 : vector<128x256xf32>
    %8 = arith.truncf %7 : vector<128x256xf32> to vector<128x256xbf16>
    %c0_6 = arith.constant 0 : index
    %c0_7 = arith.constant 0 : index
    %9 = vector.load %arg4[%c0_6, %c0_7] : memref<256x256xbf16, #tpu.memory_space<vmem>>, vector<256x256xbf16>
    %cst_8 = arith.constant dense<0.000000e+00> : vector<128x256xf32>
    %10 = tpu.matmul %8, %9, %cst_8 {dimension_numbers = #tpu.dot_dimension_numbers<[1], [0], [0], [1], [0, 0, 1, 1], [], []>} : vector<128x256xbf16>, vector<256x256xbf16>, vector<128x256xf32> -> vector<128x256xf32>
    %c0_9 = arith.constant 0 : index
    %c0_10 = arith.constant 0 : index
    %11 = vector.load %arg5[%c0_9, %c0_10] : memref<1x256xf32, #tpu.memory_space<vmem>>, vector<1x256xf32>
    %12 = vector.broadcast %11 : vector<1x256xf32> to vector<128x256xf32>
    %13 = arith.addf %10, %12 : vector<128x256xf32>
    %14 = vector.shape_cast %13 : vector<128x256xf32> to vector<1x128x256xf32>
    %15 = arith.truncf %14 : vector<1x128x256xf32> to vector<1x128x256xbf16>
    %c0_11 = arith.constant 0 : index
    %c0_12 = arith.constant 0 : index
    %c0_13 = arith.constant 0 : index
    %16 = vector.load %arg6[%c0_11, %c0_12, %c0_13] : memref<1x128x256xbf16, #tpu.memory_space<vmem>>, vector<1x128x256xbf16>
    tpu.vector_store %arg6[%c0_11, %c0_12, %c0_13], %15 {strides = array<i32>} : memref<1x128x256xbf16, #tpu.memory_space<vmem>>, vector<1x128x256xbf16>,
    return
  }
  func.func @transform_0(%arg0: i32) -> (i32, i32, i32) {
    %c0_i32 = arith.constant 0 : i32
    %c0_i32_0 = arith.constant 0 : i32
    %c0_i32_1 = arith.constant 0 : i32
    return %arg0, %c0_i32, %c0_i32_0 : i32, i32, i32
  }
  func.func @transform_1(%arg0: i32) -> (i32, i32) {
    %c0_i32 = arith.constant 0 : i32
    %c0_i32_0 = arith.constant 0 : i32
    %c0_i32_1 = arith.constant 0 : i32
    return %c0_i32, %c0_i32_0 : i32, i32
  }
  func.func @transform_2(%arg0: i32) -> (i32, i32) {
    %c0_i32 = arith.constant 0 : i32
    %c0_i32_0 = arith.constant 0 : i32
    %c0_i32_1 = arith.constant 0 : i32
    return %c0_i32, %c0_i32_0 : i32, i32
  }
  func.func @transform_3(%arg0: i32) -> (i32, i32) {
    %c0_i32 = arith.constant 0 : i32
    %c0_i32_0 = arith.constant 0 : i32
    %c0_i32_1 = arith.constant 0 : i32
    return %c0_i32, %c0_i32_0 : i32, i32
  }
  func.func @transform_4(%arg0: i32) -> (i32, i32) {
    %c0_i32 = arith.constant 0 : i32
    %c0_i32_0 = arith.constant 0 : i32
    %c0_i32_1 = arith.constant 0 : i32
    return %c0_i32, %c0_i32_0 : i32, i32
  }
  func.func @transform_5(%arg0: i32) -> (i32, i32, i32) {
    %c0_i32 = arith.constant 0 : i32
    %c0_i32_0 = arith.constant 0 : i32
    %c0_i32_1 = arith.constant 0 : i32
    return %arg0, %c0_i32, %c0_i32_0 : i32, i32, i32
  }
}

module attributes {stable_mosaic.version = 11 : i64} {
  func.func @kernel(%arg0: i32, %arg1: i32, %arg2: memref<9xi32, #tpu.memory_space<smem>>, %arg3: memref<1x128x128xf32, #tpu.memory_space<vmem>>, %arg4: memref<1x128x256xbf16, #tpu.memory_space<vmem>>, %arg5: memref<1x1x256xf32, #tpu.memory_space<vmem>>, %arg6: memref<1x3x384x256xbf16, #tpu.memory_space<vmem>>, %arg7: memref<1x1x256xf32, #tpu.memory_space<vmem>>, %arg8: memref<1x256x256xbf16, #tpu.memory_space<vmem>>, %arg9: memref<1x1x256xf32, #tpu.memory_space<vmem>>, %arg10: memref<1x256x128xbf16, #tpu.memory_space<vmem>>, %arg11: memref<1x1x128xf32, #tpu.memory_space<vmem>>, %arg12: memref<1x128x128xf32, #tpu.memory_space<vmem>>, %arg13: memref<16x24x128xf32, #tpu.memory_space<vmem>>, %arg14: memref<16x16x384xbf16, #tpu.memory_space<vmem>>) attributes {dimension_semantics = [#tpu.dimension_semantics<parallel>, #tpu.dimension_semantics<arbitrary>], iteration_bounds = array<i64: 2, 3>, scalar_prefetch = 1 : i64, scratch_operands = 2 : i64, tpu.core_type = #tpu.core_type<tc>, window_params = [{transform_indices = @transform_0, window_bounds = array<i64: 1, 128, 128>}, {transform_indices = @transform_1, window_bounds = array<i64: 1, 128, 256>}, {transform_indices = @transform_2, window_bounds = array<i64: 1, 1, 256>}, {transform_indices = @transform_3, window_bounds = array<i64: 1, 3, 384, 256>}, {transform_indices = @transform_4, window_bounds = array<i64: 1, 1, 256>}, {transform_indices = @transform_5, window_bounds = array<i64: 1, 256, 256>}, {transform_indices = @transform_6, window_bounds = array<i64: 1, 1, 256>}, {transform_indices = @transform_7, window_bounds = array<i64: 1, 256, 128>}, {transform_indices = @transform_8, window_bounds = array<i64: 1, 1, 128>}, {transform_indices = @transform_9, window_bounds = array<i64: 1, 128, 128>}]} {
    %c0_i32 = arith.constant 0 : i32
    %0 = arith.cmpi eq, %arg1, %c0_i32 : i32
    %1 = arith.extui %0 : i1 to i32
    %c0_i32_0 = arith.constant 0 : i32
    %2 = arith.cmpi ne, %1, %c0_i32_0 : i32
    scf.if %2 {
      %cst_75 = arith.constant 0.000000e+00 : f32
      %101 = vector.broadcast %cst_75 : f32 to vector<16x24x128xf32>
      %c0_76 = arith.constant 0 : index
      %c0_77 = arith.constant 0 : index
      %c0_78 = arith.constant 0 : index
      %102 = vector.load %arg13[%c0_76, %c0_77, %c0_78] : memref<16x24x128xf32, #tpu.memory_space<vmem>>, vector<16x24x128xf32>
      tpu.vector_store %arg13[%c0_76, %c0_77, %c0_78], %101 {strides = array<i32>} : memref<16x24x128xf32, #tpu.memory_space<vmem>>, vector<16x24x128xf32>,
      %c0_79 = arith.constant 0 : index
      %c0_80 = arith.constant 0 : index
      %c0_81 = arith.constant 0 : index
      %103 = vector.load %arg3[%c0_79, %c0_80, %c0_81] : memref<1x128x128xf32, #tpu.memory_space<vmem>>, vector<1x128x128xf32>
      %104 = vector.shape_cast %103 : vector<1x128x128xf32> to vector<128x128xf32>
      %105 = vector.shape_cast %104 : vector<128x128xf32> to vector<8x16x128xf32>
      %c4_82 = arith.constant 4 : index
      %c4_83 = arith.constant 4 : index
      %c0_84 = arith.constant 0 : index
      %106 = vector.load %arg13[%c4_82, %c4_83, %c0_84] : memref<16x24x128xf32, #tpu.memory_space<vmem>>, vector<8x16x128xf32>
      tpu.vector_store %arg13[%c4_82, %c4_83, %c0_84], %105 {strides = array<i32>} : memref<16x24x128xf32, #tpu.memory_space<vmem>>, vector<8x16x128xf32>,
      %cst_85 = arith.constant 0.000000e+00 : f32
      %107 = vector.broadcast %cst_85 : f32 to vector<1x128x128xf32>
      %c0_86 = arith.constant 0 : index
      %c0_87 = arith.constant 0 : index
      %c0_88 = arith.constant 0 : index
      %108 = vector.load %arg12[%c0_86, %c0_87, %c0_88] : memref<1x128x128xf32, #tpu.memory_space<vmem>>, vector<1x128x128xf32>
      tpu.vector_store %arg12[%c0_86, %c0_87, %c0_88], %107 {strides = array<i32>} : memref<1x128x128xf32, #tpu.memory_space<vmem>>, vector<1x128x128xf32>,
    } else {
    }
    %c3_i32 = arith.constant 3 : i32
    %3 = arith.muli %arg1, %c3_i32 : i32
    %c0_i32_1 = arith.constant 0 : i32
    %4 = arith.addi %3, %c0_i32_1 : i32
    %5 = arith.index_cast %4 : i32 to index
    %6 = memref.load %arg2[%5] : memref<9xi32, #tpu.memory_space<smem>>
    %c0 = arith.constant 0 : index
    %7 = arith.index_cast %6 : i32 to index
    %c0_2 = arith.constant 0 : index
    %8 = vector.load %arg13[%c0, %7, %c0_2] : memref<16x24x128xf32, #tpu.memory_space<vmem>>, vector<16x16x128xf32>
    %9 = arith.truncf %8 : vector<16x16x128xf32> to vector<16x16x128xbf16>
    %c0_3 = arith.constant 0 : index
    %c0_4 = arith.constant 0 : index
    %c0_5 = arith.constant 0 : index
    %10 = vector.load %arg14[%c0_3, %c0_4, %c0_5] : memref<16x16x384xbf16, #tpu.memory_space<vmem>>, vector<16x16x128xbf16>
    tpu.vector_store %arg14[%c0_3, %c0_4, %c0_5], %9 {strides = array<i32>} : memref<16x16x384xbf16, #tpu.memory_space<vmem>>, vector<16x16x128xbf16>,
    %c3_i32_6 = arith.constant 3 : i32
    %11 = arith.muli %arg1, %c3_i32_6 : i32
    %c1_i32 = arith.constant 1 : i32
    %12 = arith.addi %11, %c1_i32 : i32
    %13 = arith.index_cast %12 : i32 to index
    %14 = memref.load %arg2[%13] : memref<9xi32, #tpu.memory_space<smem>>
    %c0_7 = arith.constant 0 : index
    %15 = arith.index_cast %14 : i32 to index
    %c0_8 = arith.constant 0 : index
    %16 = vector.load %arg13[%c0_7, %15, %c0_8] : memref<16x24x128xf32, #tpu.memory_space<vmem>>, vector<16x16x128xf32>
    %17 = arith.truncf %16 : vector<16x16x128xf32> to vector<16x16x128xbf16>
    %c0_9 = arith.constant 0 : index
    %c0_10 = arith.constant 0 : index
    %c128 = arith.constant 128 : index
    %18 = vector.load %arg14[%c0_9, %c0_10, %c128] : memref<16x16x384xbf16, #tpu.memory_space<vmem>>, vector<16x16x128xbf16>
    tpu.vector_store %arg14[%c0_9, %c0_10, %c128], %17 {strides = array<i32>} : memref<16x16x384xbf16, #tpu.memory_space<vmem>>, vector<16x16x128xbf16>,
    %c3_i32_11 = arith.constant 3 : i32
    %19 = arith.muli %arg1, %c3_i32_11 : i32
    %c2_i32 = arith.constant 2 : i32
    %20 = arith.addi %19, %c2_i32 : i32
    %21 = arith.index_cast %20 : i32 to index
    %22 = memref.load %arg2[%21] : memref<9xi32, #tpu.memory_space<smem>>
    %c0_12 = arith.constant 0 : index
    %23 = arith.index_cast %22 : i32 to index
    %c0_13 = arith.constant 0 : index
    %24 = vector.load %arg13[%c0_12, %23, %c0_13] : memref<16x24x128xf32, #tpu.memory_space<vmem>>, vector<16x16x128xf32>
    %25 = arith.truncf %24 : vector<16x16x128xf32> to vector<16x16x128xbf16>
    %c0_14 = arith.constant 0 : index
    %c0_15 = arith.constant 0 : index
    %c256 = arith.constant 256 : index
    %26 = vector.load %arg14[%c0_14, %c0_15, %c256] : memref<16x16x384xbf16, #tpu.memory_space<vmem>>, vector<16x16x128xbf16>
    tpu.vector_store %arg14[%c0_14, %c0_15, %c256], %25 {strides = array<i32>} : memref<16x16x384xbf16, #tpu.memory_space<vmem>>, vector<16x16x128xbf16>,
    %c3_i32_16 = arith.constant 3 : i32
    %27 = arith.muli %arg1, %c3_i32_16 : i32
    %c0_i32_17 = arith.constant 0 : i32
    %28 = arith.addi %27, %c0_i32_17 : i32
    %29 = arith.index_cast %28 : i32 to index
    %30 = memref.load %arg2[%29] : memref<9xi32, #tpu.memory_space<smem>>
    %31 = arith.index_cast %30 : i32 to index
    %c0_18 = arith.constant 0 : index
    %c0_19 = arith.constant 0 : index
    %32 = vector.load %arg14[%31, %c0_18, %c0_19] : memref<16x16x384xbf16, #tpu.memory_space<vmem>>, vector<8x16x384xbf16>
    %33 = vector.shape_cast %32 : vector<8x16x384xbf16> to vector<128x384xbf16>
    %c0_20 = arith.constant 0 : index
    %c0_21 = arith.constant 0 : index
    %c0_22 = arith.constant 0 : index
    %c0_23 = arith.constant 0 : index
    %34 = vector.load %arg6[%c0_20, %c0_21, %c0_22, %c0_23] : memref<1x3x384x256xbf16, #tpu.memory_space<vmem>>, vector<1x1x384x256xbf16>
    %35 = vector.shape_cast %34 : vector<1x1x384x256xbf16> to vector<384x256xbf16>
    %cst = arith.constant dense<0.000000e+00> : vector<128x256xf32>
    %36 = tpu.matmul %33, %35, %cst {dimension_numbers = #tpu.dot_dimension_numbers<[1], [0], [0], [1], [0, 0, 1, 1], [], []>} : vector<128x384xbf16>, vector<384x256xbf16>, vector<128x256xf32> -> vector<128x256xf32>
    %c3_i32_24 = arith.constant 3 : i32
    %37 = arith.muli %arg1, %c3_i32_24 : i32
    %c1_i32_25 = arith.constant 1 : i32
    %38 = arith.addi %37, %c1_i32_25 : i32
    %39 = arith.index_cast %38 : i32 to index
    %40 = memref.load %arg2[%39] : memref<9xi32, #tpu.memory_space<smem>>
    %41 = arith.index_cast %40 : i32 to index
    %c0_26 = arith.constant 0 : index
    %c0_27 = arith.constant 0 : index
    %42 = vector.load %arg14[%41, %c0_26, %c0_27] : memref<16x16x384xbf16, #tpu.memory_space<vmem>>, vector<8x16x384xbf16>
    %43 = vector.shape_cast %42 : vector<8x16x384xbf16> to vector<128x384xbf16>
    %c0_28 = arith.constant 0 : index
    %c1 = arith.constant 1 : index
    %c0_29 = arith.constant 0 : index
    %c0_30 = arith.constant 0 : index
    %44 = vector.load %arg6[%c0_28, %c1, %c0_29, %c0_30] : memref<1x3x384x256xbf16, #tpu.memory_space<vmem>>, vector<1x1x384x256xbf16>
    %45 = vector.shape_cast %44 : vector<1x1x384x256xbf16> to vector<384x256xbf16>
    %cst_31 = arith.constant dense<0.000000e+00> : vector<128x256xf32>
    %46 = tpu.matmul %43, %45, %cst_31 {dimension_numbers = #tpu.dot_dimension_numbers<[1], [0], [0], [1], [0, 0, 1, 1], [], []>} : vector<128x384xbf16>, vector<384x256xbf16>, vector<128x256xf32> -> vector<128x256xf32>
    %47 = arith.addf %36, %46 : vector<128x256xf32>
    %c3_i32_32 = arith.constant 3 : i32
    %48 = arith.muli %arg1, %c3_i32_32 : i32
    %c2_i32_33 = arith.constant 2 : i32
    %49 = arith.addi %48, %c2_i32_33 : i32
    %50 = arith.index_cast %49 : i32 to index
    %51 = memref.load %arg2[%50] : memref<9xi32, #tpu.memory_space<smem>>
    %52 = arith.index_cast %51 : i32 to index
    %c0_34 = arith.constant 0 : index
    %c0_35 = arith.constant 0 : index
    %53 = vector.load %arg14[%52, %c0_34, %c0_35] : memref<16x16x384xbf16, #tpu.memory_space<vmem>>, vector<8x16x384xbf16>
    %54 = vector.shape_cast %53 : vector<8x16x384xbf16> to vector<128x384xbf16>
    %c0_36 = arith.constant 0 : index
    %c2 = arith.constant 2 : index
    %c0_37 = arith.constant 0 : index
    %c0_38 = arith.constant 0 : index
    %55 = vector.load %arg6[%c0_36, %c2, %c0_37, %c0_38] : memref<1x3x384x256xbf16, #tpu.memory_space<vmem>>, vector<1x1x384x256xbf16>
    %56 = vector.shape_cast %55 : vector<1x1x384x256xbf16> to vector<384x256xbf16>
    %cst_39 = arith.constant dense<0.000000e+00> : vector<128x256xf32>
    %57 = tpu.matmul %54, %56, %cst_39 {dimension_numbers = #tpu.dot_dimension_numbers<[1], [0], [0], [1], [0, 0, 1, 1], [], []>} : vector<128x384xbf16>, vector<384x256xbf16>, vector<128x256xf32> -> vector<128x256xf32>
    %58 = arith.addf %47, %57 : vector<128x256xf32>
    %c0_40 = arith.constant 0 : index
    %c0_41 = arith.constant 0 : index
    %c0_42 = arith.constant 0 : index
    %59 = vector.load %arg7[%c0_40, %c0_41, %c0_42] : memref<1x1x256xf32, #tpu.memory_space<vmem>>, vector<1x1x256xf32>
    %60 = vector.shape_cast %59 : vector<1x1x256xf32> to vector<1x256xf32>
    %61 = vector.broadcast %60 : vector<1x256xf32> to vector<128x256xf32>
    %62 = arith.addf %58, %61 : vector<128x256xf32>
    %c0_43 = arith.constant 0 : index
    %c0_44 = arith.constant 0 : index
    %c0_45 = arith.constant 0 : index
    %63 = vector.load %arg5[%c0_43, %c0_44, %c0_45] : memref<1x1x256xf32, #tpu.memory_space<vmem>>, vector<1x1x256xf32>
    %64 = vector.shape_cast %63 : vector<1x1x256xf32> to vector<1x256xf32>
    %65 = vector.broadcast %64 : vector<1x256xf32> to vector<128x256xf32>
    %66 = arith.addf %62, %65 : vector<128x256xf32>
    %c0_46 = arith.constant 0 : index
    %c0_47 = arith.constant 0 : index
    %c0_48 = arith.constant 0 : index
    %67 = vector.load %arg4[%c0_46, %c0_47, %c0_48] : memref<1x128x256xbf16, #tpu.memory_space<vmem>>, vector<1x128x256xbf16>
    %68 = vector.shape_cast %67 : vector<1x128x256xbf16> to vector<128x256xbf16>
    %c0_49 = arith.constant 0 : index
    %c0_50 = arith.constant 0 : index
    %c0_51 = arith.constant 0 : index
    %69 = vector.load %arg8[%c0_49, %c0_50, %c0_51] : memref<1x256x256xbf16, #tpu.memory_space<vmem>>, vector<1x256x256xbf16>
    %70 = vector.shape_cast %69 : vector<1x256x256xbf16> to vector<256x256xbf16>
    %cst_52 = arith.constant dense<0.000000e+00> : vector<128x256xf32>
    %71 = tpu.matmul %68, %70, %cst_52 {dimension_numbers = #tpu.dot_dimension_numbers<[1], [0], [0], [1], [0, 0, 1, 1], [], []>} : vector<128x256xbf16>, vector<256x256xbf16>, vector<128x256xf32> -> vector<128x256xf32>
    %72 = arith.addf %66, %71 : vector<128x256xf32>
    %c0_53 = arith.constant 0 : index
    %c0_54 = arith.constant 0 : index
    %c0_55 = arith.constant 0 : index
    %73 = vector.load %arg9[%c0_53, %c0_54, %c0_55] : memref<1x1x256xf32, #tpu.memory_space<vmem>>, vector<1x1x256xf32>
    %74 = vector.shape_cast %73 : vector<1x1x256xf32> to vector<1x256xf32>
    %75 = vector.broadcast %74 : vector<1x256xf32> to vector<128x256xf32>
    %76 = arith.addf %72, %75 : vector<128x256xf32>
    %77 = math.tanh %76 : vector<128x256xf32>
    %78 = arith.negf %76 : vector<128x256xf32>
    %79 = math.exp %78 : vector<128x256xf32>
    %cst_56 = arith.constant 1.000000e+00 : f32
    %80 = vector.broadcast %cst_56 : f32 to vector<128x256xf32>
    %81 = arith.addf %80, %79 : vector<128x256xf32>
    %82 = arith.divf %80, %81 : vector<128x256xf32>
    %83 = arith.mulf %77, %82 : vector<128x256xf32>
    %84 = arith.truncf %83 : vector<128x256xf32> to vector<128x256xbf16>
    %c0_57 = arith.constant 0 : index
    %c0_58 = arith.constant 0 : index
    %c0_59 = arith.constant 0 : index
    %85 = vector.load %arg10[%c0_57, %c0_58, %c0_59] : memref<1x256x128xbf16, #tpu.memory_space<vmem>>, vector<1x256x128xbf16>
    %86 = vector.shape_cast %85 : vector<1x256x128xbf16> to vector<256x128xbf16>
    %cst_60 = arith.constant dense<0.000000e+00> : vector<128x128xf32>
    %87 = tpu.matmul %84, %86, %cst_60 {dimension_numbers = #tpu.dot_dimension_numbers<[1], [0], [0], [1], [0, 0, 1, 1], [], []>} : vector<128x256xbf16>, vector<256x128xbf16>, vector<128x128xf32> -> vector<128x128xf32>
    %c0_61 = arith.constant 0 : index
    %c0_62 = arith.constant 0 : index
    %c0_63 = arith.constant 0 : index
    %88 = vector.load %arg11[%c0_61, %c0_62, %c0_63] : memref<1x1x128xf32, #tpu.memory_space<vmem>>, vector<1x1x128xf32>
    %89 = vector.shape_cast %88 : vector<1x1x128xf32> to vector<1x128xf32>
    %90 = vector.broadcast %89 : vector<1x128xf32> to vector<128x128xf32>
    %91 = arith.addf %87, %90 : vector<128x128xf32>
    %c4 = arith.constant 4 : index
    %c4_64 = arith.constant 4 : index
    %c0_65 = arith.constant 0 : index
    %92 = vector.load %arg13[%c4, %c4_64, %c0_65] : memref<16x24x128xf32, #tpu.memory_space<vmem>>, vector<8x16x128xf32>
    %93 = vector.shape_cast %92 : vector<8x16x128xf32> to vector<128x128xf32>
    %94 = arith.addf %93, %91 : vector<128x128xf32>
    %95 = vector.shape_cast %94 : vector<128x128xf32> to vector<8x16x128xf32>
    %c4_66 = arith.constant 4 : index
    %c4_67 = arith.constant 4 : index
    %c0_68 = arith.constant 0 : index
    %96 = vector.load %arg13[%c4_66, %c4_67, %c0_68] : memref<16x24x128xf32, #tpu.memory_space<vmem>>, vector<8x16x128xf32>
    tpu.vector_store %arg13[%c4_66, %c4_67, %c0_68], %95 {strides = array<i32>} : memref<16x24x128xf32, #tpu.memory_space<vmem>>, vector<8x16x128xf32>,
    %c0_69 = arith.constant 0 : index
    %c0_70 = arith.constant 0 : index
    %c0_71 = arith.constant 0 : index
    %97 = vector.load %arg12[%c0_69, %c0_70, %c0_71] : memref<1x128x128xf32, #tpu.memory_space<vmem>>, vector<1x128x128xf32>
    %98 = vector.shape_cast %91 : vector<128x128xf32> to vector<1x128x128xf32>
    %99 = arith.addf %97, %98 : vector<1x128x128xf32>
    %c0_72 = arith.constant 0 : index
    %c0_73 = arith.constant 0 : index
    %c0_74 = arith.constant 0 : index
    %100 = vector.load %arg12[%c0_72, %c0_73, %c0_74] : memref<1x128x128xf32, #tpu.memory_space<vmem>>, vector<1x128x128xf32>
    tpu.vector_store %arg12[%c0_72, %c0_73, %c0_74], %99 {strides = array<i32>} : memref<1x128x128xf32, #tpu.memory_space<vmem>>, vector<1x128x128xf32>,
    return
  }
  func.func @transform_0(%arg0: i32, %arg1: i32, %arg2: memref<9xi32, #tpu.memory_space<smem>>) -> (i32, i32, i32) {
    %c0_i32 = arith.constant 0 : i32
    %c0_i32_0 = arith.constant 0 : i32
    %c0_i32_1 = arith.constant 0 : i32
    return %arg0, %c0_i32, %c0_i32_0 : i32, i32, i32
  }
  func.func @transform_1(%arg0: i32, %arg1: i32, %arg2: memref<9xi32, #tpu.memory_space<smem>>) -> (i32, i32, i32) {
    %c0_i32 = arith.constant 0 : i32
    %c0_i32_0 = arith.constant 0 : i32
    %c0_i32_1 = arith.constant 0 : i32
    return %arg0, %c0_i32, %c0_i32_0 : i32, i32, i32
  }
  func.func @transform_2(%arg0: i32, %arg1: i32, %arg2: memref<9xi32, #tpu.memory_space<smem>>) -> (i32, i32, i32) {
    %c0_i32 = arith.constant 0 : i32
    %c0_i32_0 = arith.constant 0 : i32
    %c0_i32_1 = arith.constant 0 : i32
    return %arg0, %c0_i32, %c0_i32_0 : i32, i32, i32
  }
  func.func @transform_3(%arg0: i32, %arg1: i32, %arg2: memref<9xi32, #tpu.memory_space<smem>>) -> (i32, i32, i32, i32) {
    %c0_i32 = arith.constant 0 : i32
    %c0_i32_0 = arith.constant 0 : i32
    %c0_i32_1 = arith.constant 0 : i32
    %c0_i32_2 = arith.constant 0 : i32
    return %arg1, %c0_i32, %c0_i32_0, %c0_i32_1 : i32, i32, i32, i32
  }
  func.func @transform_4(%arg0: i32, %arg1: i32, %arg2: memref<9xi32, #tpu.memory_space<smem>>) -> (i32, i32, i32) {
    %c0_i32 = arith.constant 0 : i32
    %c0_i32_0 = arith.constant 0 : i32
    %c0_i32_1 = arith.constant 0 : i32
    return %arg1, %c0_i32, %c0_i32_0 : i32, i32, i32
  }
  func.func @transform_5(%arg0: i32, %arg1: i32, %arg2: memref<9xi32, #tpu.memory_space<smem>>) -> (i32, i32, i32) {
    %c0_i32 = arith.constant 0 : i32
    %c0_i32_0 = arith.constant 0 : i32
    %c0_i32_1 = arith.constant 0 : i32
    return %arg1, %c0_i32, %c0_i32_0 : i32, i32, i32
  }
  func.func @transform_6(%arg0: i32, %arg1: i32, %arg2: memref<9xi32, #tpu.memory_space<smem>>) -> (i32, i32, i32) {
    %c0_i32 = arith.constant 0 : i32
    %c0_i32_0 = arith.constant 0 : i32
    %c0_i32_1 = arith.constant 0 : i32
    return %arg1, %c0_i32, %c0_i32_0 : i32, i32, i32
  }
  func.func @transform_7(%arg0: i32, %arg1: i32, %arg2: memref<9xi32, #tpu.memory_space<smem>>) -> (i32, i32, i32) {
    %c0_i32 = arith.constant 0 : i32
    %c0_i32_0 = arith.constant 0 : i32
    %c0_i32_1 = arith.constant 0 : i32
    return %arg1, %c0_i32, %c0_i32_0 : i32, i32, i32
  }
  func.func @transform_8(%arg0: i32, %arg1: i32, %arg2: memref<9xi32, #tpu.memory_space<smem>>) -> (i32, i32, i32) {
    %c0_i32 = arith.constant 0 : i32
    %c0_i32_0 = arith.constant 0 : i32
    %c0_i32_1 = arith.constant 0 : i32
    return %arg1, %c0_i32, %c0_i32_0 : i32, i32, i32
  }
  func.func @transform_9(%arg0: i32, %arg1: i32, %arg2: memref<9xi32, #tpu.memory_space<smem>>) -> (i32, i32, i32) {
    %c0_i32 = arith.constant 0 : i32
    %c0_i32_0 = arith.constant 0 : i32
    %c0_i32_1 = arith.constant 0 : i32
    return %arg0, %c0_i32, %c0_i32_0 : i32, i32, i32
  }
}

module attributes {stable_mosaic.version = 11 : i64} {
  func.func @_output_kernel(%arg0: i32, %arg1: memref<1x128x128xf32, #tpu.memory_space<vmem>>, %arg2: memref<128x128xbf16, #tpu.memory_space<vmem>>, %arg3: memref<128x1xf32, #tpu.memory_space<vmem>>, %arg4: memref<4x128xbf16, #tpu.memory_space<vmem>>, %arg5: memref<4x1xf32, #tpu.memory_space<vmem>>, %arg6: memref<1x4x128xf32, #tpu.memory_space<vmem>>) attributes {dimension_semantics = [#tpu.dimension_semantics<parallel>], iteration_bounds = array<i64: 2>, scalar_prefetch = 0 : i64, scratch_operands = 0 : i64, tpu.core_type = #tpu.core_type<tc>, window_params = [{transform_indices = @transform_0, window_bounds = array<i64: 1, 128, 128>}, {pipeline_mode = #tpu.pipeline_mode<synchronous>, transform_indices = @transform_1, window_bounds = array<i64: 128, 128>}, {pipeline_mode = #tpu.pipeline_mode<synchronous>, transform_indices = @transform_2, window_bounds = array<i64: 128, 1>}, {pipeline_mode = #tpu.pipeline_mode<synchronous>, transform_indices = @transform_3, window_bounds = array<i64: 4, 128>}, {pipeline_mode = #tpu.pipeline_mode<synchronous>, transform_indices = @transform_4, window_bounds = array<i64: 4, 1>}, {transform_indices = @transform_5, window_bounds = array<i64: 1, 4, 128>}]} {
    %c0 = arith.constant 0 : index
    %c0_0 = arith.constant 0 : index
    %c0_1 = arith.constant 0 : index
    %0 = vector.load %arg1[%c0, %c0_0, %c0_1] : memref<1x128x128xf32, #tpu.memory_space<vmem>>, vector<1x128x128xf32>
    %1 = vector.shape_cast %0 : vector<1x128x128xf32> to vector<128x128xf32>
    %2 = tpu.transpose %1, [1, 0] : vector<128x128xf32> -> vector<128x128xf32>
    %3 = arith.truncf %2 : vector<128x128xf32> to vector<128x128xbf16>
    %c0_2 = arith.constant 0 : index
    %c0_3 = arith.constant 0 : index
    %4 = vector.load %arg2[%c0_2, %c0_3] : memref<128x128xbf16, #tpu.memory_space<vmem>>, vector<128x128xbf16>
    %cst = arith.constant dense<0.000000e+00> : vector<128x128xf32>
    %5 = tpu.matmul %4, %3, %cst {dimension_numbers = #tpu.dot_dimension_numbers<[1], [0], [0], [1], [0, 0, 1, 1], [], []>} : vector<128x128xbf16>, vector<128x128xbf16>, vector<128x128xf32> -> vector<128x128xf32>
    %c0_4 = arith.constant 0 : index
    %c0_5 = arith.constant 0 : index
    %6 = vector.load %arg3[%c0_4, %c0_5] : memref<128x1xf32, #tpu.memory_space<vmem>>, vector<128x1xf32>
    %7 = vector.broadcast %6 : vector<128x1xf32> to vector<128x128xf32>
    %8 = arith.addf %5, %7 : vector<128x128xf32>
    %cst_6 = arith.constant 0.000000e+00 : f32
    %9 = vector.broadcast %cst_6 : f32 to vector<128x128xf32>
    %10 = arith.maximumf %8, %9 : vector<128x128xf32>
    %c0_7 = arith.constant 0 : index
    %c0_8 = arith.constant 0 : index
    %11 = vector.load %arg4[%c0_7, %c0_8] : memref<4x128xbf16, #tpu.memory_space<vmem>>, vector<4x128xbf16>
    %12 = arith.truncf %10 : vector<128x128xf32> to vector<128x128xbf16>
    %cst_9 = arith.constant dense<0.000000e+00> : vector<4x128xf32>
    %13 = tpu.matmul %11, %12, %cst_9 {dimension_numbers = #tpu.dot_dimension_numbers<[1], [0], [0], [1], [0, 0, 1, 1], [], []>} : vector<4x128xbf16>, vector<128x128xbf16>, vector<4x128xf32> -> vector<4x128xf32>
    %c0_10 = arith.constant 0 : index
    %c0_11 = arith.constant 0 : index
    %14 = vector.load %arg5[%c0_10, %c0_11] : memref<4x1xf32, #tpu.memory_space<vmem>>, vector<4x1xf32>
    %15 = vector.broadcast %14 : vector<4x1xf32> to vector<4x128xf32>
    %16 = arith.addf %13, %15 : vector<4x128xf32>
    %17 = vector.shape_cast %16 : vector<4x128xf32> to vector<1x4x128xf32>
    %c0_12 = arith.constant 0 : index
    %c0_13 = arith.constant 0 : index
    %c0_14 = arith.constant 0 : index
    %18 = vector.load %arg6[%c0_12, %c0_13, %c0_14] : memref<1x4x128xf32, #tpu.memory_space<vmem>>, vector<1x4x128xf32>
    tpu.vector_store %arg6[%c0_12, %c0_13, %c0_14], %17 {strides = array<i32>} : memref<1x4x128xf32, #tpu.memory_space<vmem>>, vector<1x4x128xf32>,
    return
  }
  func.func @transform_0(%arg0: i32) -> (i32, i32, i32) {
    %c0_i32 = arith.constant 0 : i32
    %c0_i32_0 = arith.constant 0 : i32
    %c0_i32_1 = arith.constant 0 : i32
    return %arg0, %c0_i32, %c0_i32_0 : i32, i32, i32
  }
  func.func @transform_1(%arg0: i32) -> (i32, i32) {
    %c0_i32 = arith.constant 0 : i32
    %c0_i32_0 = arith.constant 0 : i32
    %c0_i32_1 = arith.constant 0 : i32
    return %c0_i32, %c0_i32_0 : i32, i32
  }
  func.func @transform_2(%arg0: i32) -> (i32, i32) {
    %c0_i32 = arith.constant 0 : i32
    %c0_i32_0 = arith.constant 0 : i32
    %c0_i32_1 = arith.constant 0 : i32
    return %c0_i32, %c0_i32_0 : i32, i32
  }
  func.func @transform_3(%arg0: i32) -> (i32, i32) {
    %c0_i32 = arith.constant 0 : i32
    %c0_i32_0 = arith.constant 0 : i32
    %c0_i32_1 = arith.constant 0 : i32
    return %c0_i32, %c0_i32_0 : i32, i32
  }
  func.func @transform_4(%arg0: i32) -> (i32, i32) {
    %c0_i32 = arith.constant 0 : i32
    %c0_i32_0 = arith.constant 0 : i32
    %c0_i32_1 = arith.constant 0 : i32
    return %c0_i32, %c0_i32_0 : i32, i32
  }
  func.func @transform_5(%arg0: i32) -> (i32, i32, i32) {
    %c0_i32 = arith.constant 0 : i32
    %c0_i32_0 = arith.constant 0 : i32
    %c0_i32_1 = arith.constant 0 : i32
    return %arg0, %c0_i32, %c0_i32_0 : i32, i32, i32
  }
}

</mosaic_0001>

<llo_original>
// kernel: diffeeg_forward.3
$region0: #{diffeeg_forward.3}
  #allocation0 [shape = 'u32[]', space=smem, size = 0x4, offset = 0x4, fixed_abs, tag = 'smem constant byte address 0x4 - core index']
  #allocation1 [shape = 'u32[144,128]{1,0:T(1,128)}', space=vmem, size = 0x12000, scoped, tag = 'internal scratch']
  %s0 = inlined_call_operand.vmem [shape: f32[2,128,16], index: 0, kind: input, shape index: {}]
  %s1 = inlined_call_operand.vmem [shape: bf16[16,256], index: 1, kind: input, shape index: {}]
  %s2 = inlined_call_operand.hbm [shape: f32[1,256], index: 2, kind: input, shape index: {}]
  %s3 = inlined_call_operand.vmem [shape: bf16[256,256], index: 3, kind: input, shape index: {}]
  %s4 = inlined_call_operand.hbm [shape: f32[1,256], index: 4, kind: input, shape index: {}]
  %s5 = inlined_call_operand.vmem [shape: bf16[2,128,256], index: 5, kind: output, shape index: {}]
  %s6 = sld [smem:[#allocation0]]
  $region61: #{diffeeg_forward.3} parent=0
    _
  %s8 = ssub.s32 1, %s6
  %s9 = scalar_select 0, %s8, %s6
  $region1: #{diffeeg_forward.3} parent=0
    #allocation2 [shape = 'u8[1024]{0}', space=vmem, size = 0x400, scoped, tag = 'input window, operand 2, single buffered']
    #allocation3 [shape = 's32[2]{0}', space=sflag, size = 0x8, scoped, tag = 'scoped memory for diffeeg_forward.3']
    #allocation4 [shape = 'u8[1024]{0}', space=vmem, size = 0x400, scoped, tag = 'input window, operand 4, single buffered']
    #allocation5 [shape = 's32[1]{0}', space=sflag, size = 0x4, scoped, tag = 'scoped memory for diffeeg_forward.3']
    %10 = vsyncpa [#allocation3], 0
    %11 = vsyncpa [#allocation5], 0
    loop: start=0, step=1, limit=4
    $region2: #{diffeeg_forward.3} parent=1 // loop_pre_header
      _
    $region3: #{diffeeg_forward.3} parent=1 // loop_header
      %s13 = sphi 0, %s17
      %p14 = scmp.ge.s32.totalorder %s13, 4
      %s23 = sphi 0, %s25
      %s26 = sphi 0, %s23
      %s27 = sphi 0, %s26
      %s43 = sphi 0, %s27
      %s47 = sphi 0, %s47
      %s49 = sphi 0, %s47
      %s50 = sphi 0, %s49
      %s64 = sphi 0, %s50
      %s68 = sphi 0, %s68
      %s70 = sphi 0, %s68
      %s71 = sphi 0, %s70
      %s85 = sphi 0, %s71
      %s89 = sphi 0, %s89
      %s91 = sphi 0, %s89
      %s92 = sphi 0, %s91
      %s106 = sphi 0, %s92
      %s110 = sphi 0, %s110
      %s112 = sphi 0, %s110
      %s113 = sphi 0, %s112
      %s127 = sphi 0, %s113
      %s133 = sphi 0, %s135
      %s136 = sphi 0, %s133
      %s137 = sphi 0, %s136
      %s153 = sphi 0, %s137
    $region4: #{diffeeg_forward.3} parent=1 // loop_header_branch
      %16 = sbr.rel (%p14) target = $region8
    $region5: #{diffeeg_forward.3} parent=1 // loop_body
      %s18 = ssub.s32 %s13, 1
      %s19 = ssub.s32 %s13, 2
      %s20 = sadd.s32 %s13, 1
      %s21 = ssub.s32 %s13, %s20
      %p22 = scmp.eq.s32.totalorder %s21, 0
      %s24 = sadd.s32 %s23, 1
      %s25 = scalar_select %p22, %s23, %s24
      %p28 = pneg %p22
      %p29 = scmp.eq.s32.totalorder %s13, 1
      %p30 = por %p28, %p29
      %p31 = scmp.ne.s32.totalorder %s23, %s26
      %p32 = scmp.eq.s32.totalorder %s13, 0
      %p33 = por %p31, %p32
      %p34 = scmp.ne.s32.totalorder %s23, %s26
      %p35 = scmp.eq.s32.totalorder %s18, 1
      %p36 = por %p34, %p35
      %p37 = scmp.ne.s32.totalorder %s26, %s27
      %p38 = scmp.eq.s32.totalorder %s18, 0
      %p39 = por %p37, %p38
      %p40 = scmp.ne.s32.totalorder %s26, %s27
      %p41 = scmp.eq.s32.totalorder %s19, 1
      %p42 = por %p40, %p41
      %p44 = scmp.ne.s32.totalorder %s27, %s43
      %p45 = scmp.eq.s32.totalorder %s19, 0
      %p46 = por %p44, %p45
      %s48 = sadd.s32 %s47, 1
      %p51 = scmp.eq.s32.totalorder %s13, 1
      %p52 = scmp.ne.s32.totalorder %s47, %s49
      %p53 = scmp.eq.s32.totalorder %s13, 0
      %p54 = por %p52, %p53
      %p55 = scmp.ne.s32.totalorder %s47, %s49
      %p56 = scmp.eq.s32.totalorder %s18, 1
      %p57 = por %p55, %p56
      %p58 = scmp.ne.s32.totalorder %s49, %s50
      %p59 = scmp.eq.s32.totalorder %s18, 0
      %p60 = por %p58, %p59
      %p61 = scmp.ne.s32.totalorder %s49, %s50
      %p62 = scmp.eq.s32.totalorder %s19, 1
      %p63 = por %p61, %p62
      %p65 = scmp.ne.s32.totalorder %s50, %s64
      %p66 = scmp.eq.s32.totalorder %s19, 0
      %p67 = por %p65, %p66
      %s69 = sadd.s32 %s68, 1
      %p72 = scmp.eq.s32.totalorder %s13, 1
      %p73 = scmp.ne.s32.totalorder %s68, %s70
      %p74 = scmp.eq.s32.totalorder %s13, 0
      %p75 = por %p73, %p74
      %p76 = scmp.ne.s32.totalorder %s68, %s70
      %p77 = scmp.eq.s32.totalorder %s18, 1
      %p78 = por %p76, %p77
      %p79 = scmp.ne.s32.totalorder %s70, %s71
      %p80 = scmp.eq.s32.totalorder %s18, 0
      %p81 = por %p79, %p80
      %p82 = scmp.ne.s32.totalorder %s70, %s71
      %p83 = scmp.eq.s32.totalorder %s19, 1
      %p84 = por %p82, %p83
      %p86 = scmp.ne.s32.totalorder %s71, %s85
      %p87 = scmp.eq.s32.totalorder %s19, 0
      %p88 = por %p86, %p87
      %s90 = sadd.s32 %s89, 1
      %p93 = scmp.eq.s32.totalorder %s13, 1
      %p94 = scmp.ne.s32.totalorder %s89, %s91
      %p95 = scmp.eq.s32.totalorder %s13, 0
      %p96 = por %p94, %p95
      %p97 = scmp.ne.s32.totalorder %s89, %s91
      %p98 = scmp.eq.s32.totalorder %s18, 1
      %p99 = por %p97, %p98
      %p100 = scmp.ne.s32.totalorder %s91, %s92
      %p101 = scmp.eq.s32.totalorder %s18, 0
      %p102 = por %p100, %p101
      %p103 = scmp.ne.s32.totalorder %s91, %s92
      %p104 = scmp.eq.s32.totalorder %s19, 1
      %p105 = por %p103, %p104
      %p107 = scmp.ne.s32.totalorder %s92, %s106
      %p108 = scmp.eq.s32.totalorder %s19, 0
      %p109 = por %p107, %p108
      %s111 = sadd.s32 %s110, 1
      %p114 = scmp.eq.s32.totalorder %s13, 1
      %p115 = scmp.ne.s32.totalorder %s110, %s112
      %p116 = scmp.eq.s32.totalorder %s13, 0
      %p117 = por %p115, %p116
      %p118 = scmp.ne.s32.totalorder %s110, %s112
      %p119 = scmp.eq.s32.totalorder %s18, 1
      %p120 = por %p118, %p119
      %p121 = scmp.ne.s32.totalorder %s112, %s113
      %p122 = scmp.eq.s32.totalorder %s18, 0
      %p123 = por %p121, %p122
      %p124 = scmp.ne.s32.totalorder %s112, %s113
      %p125 = scmp.eq.s32.totalorder %s19, 1
      %p126 = por %p124, %p125
      %p128 = scmp.ne.s32.totalorder %s113, %s127
      %p129 = scmp.eq.s32.totalorder %s19, 0
      %p130 = por %p128, %p129
      %s131 = ssub.s32 %s13, %s20
      %p132 = scmp.eq.s32.totalorder %s131, 0
      %s134 = sadd.s32 %s133, 1
      %s135 = scalar_select %p132, %s133, %s134
      %p138 = pneg %p132
      %p139 = scmp.eq.s32.totalorder %s13, 1
      %p140 = por %p138, %p139
      %p141 = scmp.ne.s32.totalorder %s133, %s136
      %p142 = scmp.eq.s32.totalorder %s13, 0
      %p143 = por %p141, %p142
      %p144 = scmp.ne.s32.totalorder %s133, %s136
      %p145 = scmp.eq.s32.totalorder %s18, 1
      %p146 = por %p144, %p145
      %p147 = scmp.ne.s32.totalorder %s136, %s137
      %p148 = scmp.eq.s32.totalorder %s18, 0
      %p149 = por %p147, %p148
      %p150 = scmp.ne.s32.totalorder %s136, %s137
      %p151 = scmp.eq.s32.totalorder %s19, 1
      %p152 = por %p150, %p151
      %p154 = scmp.ne.s32.totalorder %s137, %s153
      %p155 = scmp.eq.s32.totalorder %s19, 0
      %p156 = por %p154, %p155
      %p157 = scmp.le.s32.totalorder 1, %s13
      %p158 = scmp.lt.s32.totalorder %s13, 3
      %p159 = pnand %p157, %p158
      %p160 = pneg %p159
      // Predicated region
      $region9: #{diffeeg_forward.3} parent=5 // pred_check
        _
      $region10: #{diffeeg_forward.3} parent=5 // pred_check_branch
        %162 = sbr.rel (%p159) target = $region12
      $region11: #{diffeeg_forward.3} parent=5 // pred_region
        %s163 = ssub.s32 %s13, 1
        // Predicated region
        $region13: #{diffeeg_forward.3} parent=11 // pred_check
          %p164 = pneg %p60
        $region14: #{diffeeg_forward.3} parent=11 // pred_check_branch
          %166 = sbr.rel (%p164) target = $region16
        $region15: #{diffeeg_forward.3} parent=11 // pred_region
          _
        $region16: #{diffeeg_forward.3} parent=11 // pred_fallthru
          _
        // Predicated region
        $region17: #{diffeeg_forward.3} parent=11 // pred_check
          %p167 = pneg %p81
        $region18: #{diffeeg_forward.3} parent=11 // pred_check_branch
          %169 = sbr.rel (%p167) target = $region20
        $region19: #{diffeeg_forward.3} parent=11 // pred_region
          %s171 = ssub.s32 32, 32
          %172 = vsyncadd [#allocation3], %s171
          %s174 = sshll.u32 [#allocation2], 4
          %s175 = int_to_ptr.vmem [resolvable:$true] %s174
          %177 = dma.hbm_to_vmem [thread:$0]  %s2, 32, %s175, [#allocation3]
        $region20: #{diffeeg_forward.3} parent=11 // pred_fallthru
          _
        // Predicated region
        $region21: #{diffeeg_forward.3} parent=11 // pred_check
          %p178 = pneg %p102
        $region22: #{diffeeg_forward.3} parent=11 // pred_check_branch
          %180 = sbr.rel (%p178) target = $region24
        $region23: #{diffeeg_forward.3} parent=11 // pred_region
          _
        $region24: #{diffeeg_forward.3} parent=11 // pred_fallthru
          _
        // Predicated region
        $region25: #{diffeeg_forward.3} parent=11 // pred_check
          %p181 = pneg %p123
        $region26: #{diffeeg_forward.3} parent=11 // pred_check_branch
          %183 = sbr.rel (%p181) target = $region28
        $region27: #{diffeeg_forward.3} parent=11 // pred_region
          %s185 = ssub.s32 32, 32
          %186 = vsyncadd [#allocation5], %s185
          %s188 = sshll.u32 [#allocation4], 4
          %s189 = int_to_ptr.vmem [resolvable:$true] %s188
          %191 = dma.hbm_to_vmem [thread:$0]  %s4, 32, %s189, [#allocation5]
        $region28: #{diffeeg_forward.3} parent=11 // pred_fallthru
          _
      $region12: #{diffeeg_forward.3} parent=5 // pred_fallthru
        _
      %p192 = scmp.lt.s32.totalorder %s13, 2
      // Predicated region
      $region29: #{diffeeg_forward.3} parent=5 // pred_check
        %p193 = pneg %p192
      $region30: #{diffeeg_forward.3} parent=5 // pred_check_branch
        %195 = sbr.rel (%p193) target = $region32
      $region31: #{diffeeg_forward.3} parent=5 // pred_region
        // Predicated region
        $region33: #{diffeeg_forward.3} parent=31 // pred_check
          %p196 = pneg %p33
        $region34: #{diffeeg_forward.3} parent=31 // pred_check_branch
          %198 = sbr.rel (%p196) target = $region36
        $region35: #{diffeeg_forward.3} parent=31 // pred_region
          %p199 = scmp.lt.s32.totalorder %s13, 1
          %s200 = scalar_select %p199, %s13, 1
          %s201 = smul.addr %s200, 16
          %s202 = smul.addr %s201, 8
          %s203 = scalar_lea.vmem %s0, %s202
        $region36: #{diffeeg_forward.3} parent=31 // pred_fallthru
          _
      $region32: #{diffeeg_forward.3} parent=5 // pred_fallthru
        _
      %p204 = scmp.le.s32.totalorder 1, %s13
      %p205 = scmp.lt.s32.totalorder %s13, 3
      %p206 = pnand %p204, %p205
      %p207 = pneg %p206
      // Predicated region
      $region37: #{diffeeg_forward.3} parent=5 // pred_check
        _
      $region38: #{diffeeg_forward.3} parent=5 // pred_check_branch
        %209 = sbr.rel (%p206) target = $region40
      $region39: #{diffeeg_forward.3} parent=5 // pred_region
        %s210 = ssub.s32 %s13, 1
        // Predicated region
        $region41: #{diffeeg_forward.3} parent=39 // pred_check
          %p211 = pneg %p81
        $region42: #{diffeeg_forward.3} parent=39 // pred_check_branch
          %213 = sbr.rel (%p211) target = $region44
        $region43: #{diffeeg_forward.3} parent=39 // pred_region
          %214 = dma.done [#allocation3], 32
        $region44: #{diffeeg_forward.3} parent=39 // pred_fallthru
          _
        // Predicated region
        $region45: #{diffeeg_forward.3} parent=39 // pred_check
          %p215 = pneg %p123
        $region46: #{diffeeg_forward.3} parent=39 // pred_check_branch
          %217 = sbr.rel (%p215) target = $region48
        $region47: #{diffeeg_forward.3} parent=39 // pred_region
          %218 = dma.done [#allocation5], 32
        $region48: #{diffeeg_forward.3} parent=39 // pred_fallthru
          _
        %p219 = scmp.lt.s32.totalorder %s18, 1
        %s220 = scalar_select %p219, %s18, 1
        %s221 = smul.addr %s220, 16
        %s222 = smul.addr %s221, 8
        %s223 = scalar_lea.vmem %s0, %s222
        %p224 = pneg %p39
        %p225 = pneg %p36
        %p226 = pneg %p60
        %p227 = pneg %p57
        %p228 = pneg %p81
        %p229 = pneg %p78
        %p230 = pneg %p102
        %p231 = pneg %p99
        %p232 = pneg %p123
        %p233 = pneg %p120
        %p234 = pneg %p149
        %p235 = pneg %p146
        %p236 = scmp.lt.s32.totalorder %s18, 1
        %s237 = scalar_select %p236, %s18, 1
        %s238 = smul.addr %s237, 32
        %s239 = smul.addr %s238, 4
        %s240 = scalar_lea.vmem %s5, %s239
        %p241 = scmp.lt.s32.totalorder %s18, 1
        %s242 = scalar_select %p241, %s18, 1
        %s243 = smul.addr %s242, 16
        %s244 = smul.addr %s243, 8
        %s245 = scalar_lea.vmem %s0, %s244
        %p246 = scmp.lt.s32.totalorder %s18, 1
        %s247 = scalar_select %p246, %s18, 1
        %s248 = smul.addr %s247, 32
        %s249 = smul.addr %s248, 4
        %s250 = scalar_lea.vmem %s5, %s249
        %v252 = vld [vmem:[%s245] sm:$0xff]
        %v253 = vld [vmem:[%s245 + $0x8] sm:$0xff]
        %v254 = vld [vmem:[%s245 + $0x10] sm:$0xff]
        %v255 = vld [vmem:[%s245 + $0x18] sm:$0xff]
        %v256 = vld [vmem:[%s245 + $0x20] sm:$0xff]
        %v257 = vld [vmem:[%s245 + $0x28] sm:$0xff]
        %v258 = vld [vmem:[%s245 + $0x30] sm:$0xff]
        %v259 = vld [vmem:[%s245 + $0x38] sm:$0xff]
        %v260 = vld [vmem:[%s245 + $0x40] sm:$0xff]
        %v261 = vld [vmem:[%s245 + $0x48] sm:$0xff]
        %v262 = vld [vmem:[%s245 + $0x50] sm:$0xff]
        %v263 = vld [vmem:[%s245 + $0x58] sm:$0xff]
        %v264 = vld [vmem:[%s245 + $0x60] sm:$0xff]
        %v265 = vld [vmem:[%s245 + $0x68] sm:$0xff]
        %v266 = vld [vmem:[%s245 + $0x70] sm:$0xff]
        %v267 = vld [vmem:[%s245 + $0x78] sm:$0xff]
        %v268 = vpack.c.bf16 %v253, %v252
        %v269 = vpack.c.bf16 %v255, %v254
        %v270 = vpack.c.bf16 %v257, %v256
        %v271 = vpack.c.bf16 %v259, %v258
        %v272 = vpack.c.bf16 %v261, %v260
        %v273 = vpack.c.bf16 %v263, %v262
        %v274 = vpack.c.bf16 %v265, %v264
        %v275 = vpack.c.bf16 %v267, %v266
        %v276 = vld [vmem:[%s1] sm:$0xff]
        %v277 = vld [vmem:[%s1 + $0x8] sm:$0xff]
        %v278 = vld [vmem:[#allocation2] sm:$0x3]
        %v280 = vlaneseq
        %v281 = vshrl.u32 %v280, 7
        %v282 = vsub.s32 0, %v281
        %v283 = vrot.slane %v278, %v282
        %v284 = vlaneseq
        %v285 = vshrl.u32 %v284, 7
        %v286 = vsub.s32 1, %v285
        %v287 = vrot.slane %v278, %v286
        %v292 = vunpack.c.l.b16 %v276
        %v293 = vunpack.c.h.b16 %v276
        %v294 = vunpack.c.l.b16 %v277
        %v295 = vunpack.c.h.b16 %v277
        %v296 = vpack.c.b16 %v294, %v292
        %v297 = vpack.c.b16 %v295, %v293
        %vm300 = vcmask 130048
        %v302 = vsel %vm300, %v268, 0
        %v305 = vsel %vm300, %v269, 0
        %v308 = vsel %vm300, %v270, 0
        %v311 = vsel %vm300, %v271, 0
        %v314 = vsel %vm300, %v272, 0
        %v317 = vsel %vm300, %v273, 0
        %v320 = vsel %vm300, %v274, 0
        %v323 = vsel %vm300, %v275, 0
        %325 = vmatprep.subr.bf16.mxu0 %v297
        %326 = vmatpush1.bf16.msra.mxu0 %v296
        %327 = vmatprep.subr.bf16.mxu0 0
        %328 = vmatpush1.bf16.msra.mxu0 0
        %329 = vmatprep.subr.bf16.mxu0 0
        %330 = vmatpush1.bf16.msra.mxu0 0
        %331 = vmatprep.subr.bf16.mxu0 0
        %332 = vmatpush1.bf16.msra.mxu0 0
        %333 = vmatprep.subr.bf16.mxu0 0
        %334 = vmatpush1.bf16.msra.mxu0 0
        %335 = vmatprep.subr.bf16.mxu0 0
        %336 = vmatpush1.bf16.msra.mxu0 0
        %337 = vmatprep.subr.bf16.mxu0 0
        %338 = vmatpush1.bf16.msra.mxu0 0
        %339 = vmatprep.subr.bf16.mxu0 0
        %340 = vmatpush1.bf16.msra.mxu0 0
        %341 = vmatprep.subr.bf16.mxu0 0
        %342 = vmatpush1.bf16.msra.mxu0 0
        %343 = vmatprep.subr.bf16.mxu0 0
        %344 = vmatpush1.bf16.msra.mxu0 0
        %345 = vmatprep.subr.bf16.mxu0 0
        %346 = vmatpush1.bf16.msra.mxu0 0
        %347 = vmatprep.subr.bf16.mxu0 0
        %348 = vmatpush1.bf16.msra.mxu0 0
        %349 = vmatprep.subr.bf16.mxu0 0
        %350 = vmatpush1.bf16.msra.mxu0 0
        %351 = vmatprep.subr.bf16.mxu0 0
        %352 = vmatpush1.bf16.msra.mxu0 0
        %353 = vmatprep.subr.bf16.mxu0 0
        %354 = vmatpush1.bf16.msra.mxu0 0
        %355 = vmatprep.subr.bf16.mxu0 0
        %356 = vmatpush1.bf16.msra.mxu0 0
        %357 = vmatprep.mubr.bf16.mxu0 0
        %358 = vmatmul.mubr.bf16.gmra.mrb[0].mxu0 %v302
        %v359 = vpop.f32.mrb[0].mxu0
        %v360 = vadd.f32 %v283, %v359
        %v361 = vpop.f32.mrb[0].mxu0
        %v362 = vadd.f32 %v287, %v361
        %v363 = vpop.f32.mrb[0].mxu0
        %v364 = vadd.f32 %v283, %v363
        %v365 = vpop.f32.mrb[0].mxu0
        %v366 = vadd.f32 %v287, %v365
        %367 = vmatprep.mubr.bf16.mxu0 0
        %368 = vmatmul.mubr.bf16.gmra.mrb[0].mxu0 %v305
        %v369 = vpop.f32.mrb[0].mxu0
        %v370 = vadd.f32 %v283, %v369
        %v371 = vpop.f32.mrb[0].mxu0
        %v372 = vadd.f32 %v287, %v371
        %v373 = vpop.f32.mrb[0].mxu0
        %v374 = vadd.f32 %v283, %v373
        %v375 = vpop.f32.mrb[0].mxu0
        %v376 = vadd.f32 %v287, %v375
        %377 = vmatprep.mubr.bf16.mxu0 0
        %378 = vmatmul.mubr.bf16.gmra.mrb[0].mxu0 %v308
        %v379 = vpop.f32.mrb[0].mxu0
        %v380 = vadd.f32 %v283, %v379
        %v381 = vpop.f32.mrb[0].mxu0
        %v382 = vadd.f32 %v287, %v381
        %v383 = vpop.f32.mrb[0].mxu0
        %v384 = vadd.f32 %v283, %v383
        %v385 = vpop.f32.mrb[0].mxu0
        %v386 = vadd.f32 %v287, %v385
        %387 = vmatprep.mubr.bf16.mxu0 0
        %388 = vmatmul.mubr.bf16.gmra.mrb[0].mxu0 %v311
        %v389 = vpop.f32.mrb[0].mxu0
        %v390 = vadd.f32 %v283, %v389
        %v391 = vpop.f32.mrb[0].mxu0
        %v392 = vadd.f32 %v287, %v391
        %v393 = vpop.f32.mrb[0].mxu0
        %v394 = vadd.f32 %v283, %v393
        %v395 = vpop.f32.mrb[0].mxu0
        %v396 = vadd.f32 %v287, %v395
        %397 = vmatprep.mubr.bf16.mxu0 0
        %398 = vmatmul.mubr.bf16.gmra.mrb[0].mxu0 %v314
        %v399 = vpop.f32.mrb[0].mxu0
        %v400 = vadd.f32 %v283, %v399
        %v401 = vpop.f32.mrb[0].mxu0
        %v402 = vadd.f32 %v287, %v401
        %v403 = vpop.f32.mrb[0].mxu0
        %v404 = vadd.f32 %v283, %v403
        %v405 = vpop.f32.mrb[0].mxu0
        %v406 = vadd.f32 %v287, %v405
        %407 = vmatprep.mubr.bf16.mxu0 0
        %408 = vmatmul.mubr.bf16.gmra.mrb[0].mxu0 %v317
        %v409 = vpop.f32.mrb[0].mxu0
        %v410 = vadd.f32 %v283, %v409
        %v411 = vpop.f32.mrb[0].mxu0
        %v412 = vadd.f32 %v287, %v411
        %v413 = vpop.f32.mrb[0].mxu0
        %v414 = vadd.f32 %v283, %v413
        %v415 = vpop.f32.mrb[0].mxu0
        %v416 = vadd.f32 %v287, %v415
        %417 = vmatprep.mubr.bf16.mxu0 0
        %418 = vmatmul.mubr.bf16.gmra.mrb[0].mxu0 %v320
        %v419 = vpop.f32.mrb[0].mxu0
        %v420 = vadd.f32 %v283, %v419
        %v421 = vpop.f32.mrb[0].mxu0
        %v422 = vadd.f32 %v287, %v421
        %v423 = vpop.f32.mrb[0].mxu0
        %v424 = vadd.f32 %v283, %v423
        %v425 = vpop.f32.mrb[0].mxu0
        %v426 = vadd.f32 %v287, %v425
        %427 = vmatprep.mubr.bf16.mxu0 0
        %428 = vmatmul.mubr.bf16.gmra.mrb[0].mxu0 %v323
        %v429 = vpop.f32.mrb[0].mxu0
        %v430 = vadd.f32 %v283, %v429
        %v431 = vpop.f32.mrb[0].mxu0
        %v432 = vadd.f32 %v287, %v431
        %v433 = vpop.f32.mrb[0].mxu0
        %v434 = vadd.f32 %v283, %v433
        %v435 = vpop.f32.mrb[0].mxu0
        %v436 = vadd.f32 %v287, %v435
        %437 = vdwg.mxu0
        %v438 = vpack.c.bf16 %v364, %v360
        %v439 = vpack.c.bf16 %v366, %v362
        %v440 = vpack.c.bf16 %v374, %v370
        %v441 = vpack.c.bf16 %v376, %v372
        %v442 = vpack.c.bf16 %v384, %v380
        %v443 = vpack.c.bf16 %v386, %v382
        %v444 = vpack.c.bf16 %v394, %v390
        %v445 = vpack.c.bf16 %v396, %v392
        %v446 = vpack.c.bf16 %v404, %v400
        %v447 = vpack.c.bf16 %v406, %v402
        %v448 = vpack.c.bf16 %v414, %v410
        %v449 = vpack.c.bf16 %v416, %v412
        %v450 = vpack.c.bf16 %v424, %v420
        %v451 = vpack.c.bf16 %v426, %v422
        %v452 = vpack.c.bf16 %v434, %v430
        %v453 = vpack.c.bf16 %v436, %v432
        %v454 = vld [vmem:[%s3] sm:$0xff]
        %v455 = vld [vmem:[%s3 + $0x8] sm:$0xff]
        %v456 = vld [vmem:[%s3 + $0x10] sm:$0xff]
        %v457 = vld [vmem:[%s3 + $0x18] sm:$0xff]
        %v458 = vld [vmem:[%s3 + $0x20] sm:$0xff]
        %v459 = vld [vmem:[%s3 + $0x28] sm:$0xff]
        %v460 = vld [vmem:[%s3 + $0x30] sm:$0xff]
        %v461 = vld [vmem:[%s3 + $0x38] sm:$0xff]
        %v462 = vld [vmem:[%s3 + $0x40] sm:$0xff]
        %v463 = vld [vmem:[%s3 + $0x48] sm:$0xff]
        %v464 = vld [vmem:[%s3 + $0x50] sm:$0xff]
        %v465 = vld [vmem:[%s3 + $0x58] sm:$0xff]
        %v466 = vld [vmem:[%s3 + $0x60] sm:$0xff]
        %v467 = vld [vmem:[%s3 + $0x68] sm:$0xff]
        %v468 = vld [vmem:[%s3 + $0x70] sm:$0xff]
        %v469 = vld [vmem:[%s3 + $0x78] sm:$0xff]
        %v470 = vld [vmem:[%s3 + $0x80] sm:$0xff]
        %v471 = vld [vmem:[%s3 + $0x88] sm:$0xff]
        %v472 = vld [vmem:[%s3 + $0x90] sm:$0xff]
        %v473 = vld [vmem:[%s3 + $0x98] sm:$0xff]
        %v474 = vld [vmem:[%s3 + $0xa0] sm:$0xff]
        %v475 = vld [vmem:[%s3 + $0xa8] sm:$0xff]
        %v476 = vld [vmem:[%s3 + $0xb0] sm:$0xff]
        %v477 = vld [vmem:[%s3 + $0xb8] sm:$0xff]
        %v478 = vld [vmem:[%s3 + $0xc0] sm:$0xff]
        %v479 = vld [vmem:[%s3 + $0xc8] sm:$0xff]
        %v480 = vld [vmem:[%s3 + $0xd0] sm:$0xff]
        %v481 = vld [vmem:[%s3 + $0xd8] sm:$0xff]
        %v482 = vld [vmem:[%s3 + $0xe0] sm:$0xff]
        %v483 = vld [vmem:[%s3 + $0xe8] sm:$0xff]
        %v484 = vld [vmem:[%s3 + $0xf0] sm:$0xff]
        %v485 = vld [vmem:[%s3 + $0xf8] sm:$0xff]
        %v486 = vld [vmem:[#allocation4] sm:$0x3]
        %v488 = vlaneseq
        %v489 = vshrl.u32 %v488, 7
        %v490 = vsub.s32 0, %v489
        %v491 = vrot.slane %v486, %v490
        %v492 = vlaneseq
        %v493 = vshrl.u32 %v492, 7
        %v494 = vsub.s32 1, %v493
        %v495 = vrot.slane %v486, %v494
        %v530 = vunpack.c.l.b16 %v454
        %v531 = vunpack.c.h.b16 %v454
        %v532 = vunpack.c.l.b16 %v455
        %v533 = vunpack.c.h.b16 %v455
        %v534 = vunpack.c.l.b16 %v456
        %v535 = vunpack.c.h.b16 %v456
        %v536 = vunpack.c.l.b16 %v457
        %v537 = vunpack.c.h.b16 %v457
        %v538 = vunpack.c.l.b16 %v458
        %v539 = vunpack.c.h.b16 %v458
        %v540 = vunpack.c.l.b16 %v459
        %v541 = vunpack.c.h.b16 %v459
        %v542 = vunpack.c.l.b16 %v460
        %v543 = vunpack.c.h.b16 %v460
        %v544 = vunpack.c.l.b16 %v461
        %v545 = vunpack.c.h.b16 %v461
        %v546 = vunpack.c.l.b16 %v462
        %v547 = vunpack.c.h.b16 %v462
        %v548 = vunpack.c.l.b16 %v463
        %v549 = vunpack.c.h.b16 %v463
        %v550 = vunpack.c.l.b16 %v464
        %v551 = vunpack.c.h.b16 %v464
        %v552 = vunpack.c.l.b16 %v465
        %v553 = vunpack.c.h.b16 %v465
        %v554 = vunpack.c.l.b16 %v466
        %v555 = vunpack.c.h.b16 %v466
        %v556 = vunpack.c.l.b16 %v467
        %v557 = vunpack.c.h.b16 %v467
        %v558 = vunpack.c.l.b16 %v468
        %v559 = vunpack.c.h.b16 %v468
        %v560 = vunpack.c.l.b16 %v469
        %v561 = vunpack.c.h.b16 %v469
        %v562 = vunpack.c.l.b16 %v470
        %v563 = vunpack.c.h.b16 %v470
        %v564 = vunpack.c.l.b16 %v471
        %v565 = vunpack.c.h.b16 %v471
        %v566 = vunpack.c.l.b16 %v472
        %v567 = vunpack.c.h.b16 %v472
        %v568 = vunpack.c.l.b16 %v473
        %v569 = vunpack.c.h.b16 %v473
        %v570 = vunpack.c.l.b16 %v474
        %v571 = vunpack.c.h.b16 %v474
        %v572 = vunpack.c.l.b16 %v475
        %v573 = vunpack.c.h.b16 %v475
        %v574 = vunpack.c.l.b16 %v476
        %v575 = vunpack.c.h.b16 %v476
        %v576 = vunpack.c.l.b16 %v477
        %v577 = vunpack.c.h.b16 %v477
        %v578 = vunpack.c.l.b16 %v478
        %v579 = vunpack.c.h.b16 %v478
        %v580 = vunpack.c.l.b16 %v479
        %v581 = vunpack.c.h.b16 %v479
        %v582 = vunpack.c.l.b16 %v480
        %v583 = vunpack.c.h.b16 %v480
        %v584 = vunpack.c.l.b16 %v481
        %v585 = vunpack.c.h.b16 %v481
        %v586 = vunpack.c.l.b16 %v482
        %v587 = vunpack.c.h.b16 %v482
        %v588 = vunpack.c.l.b16 %v483
        %v589 = vunpack.c.h.b16 %v483
        %v590 = vunpack.c.l.b16 %v484
        %v591 = vunpack.c.h.b16 %v484
        %v592 = vunpack.c.l.b16 %v485
        %v593 = vunpack.c.h.b16 %v485
        %v594 = vpack.c.b16 %v532, %v530
        %v595 = vpack.c.b16 %v533, %v531
        %v596 = vpack.c.b16 %v536, %v534
        %v597 = vpack.c.b16 %v537, %v535
        %v598 = vpack.c.b16 %v540, %v538
        %v599 = vpack.c.b16 %v541, %v539
        %v600 = vpack.c.b16 %v544, %v542
        %v601 = vpack.c.b16 %v545, %v543
        %v602 = vpack.c.b16 %v548, %v546
        %v603 = vpack.c.b16 %v549, %v547
        %v604 = vpack.c.b16 %v552, %v550
        %v605 = vpack.c.b16 %v553, %v551
        %v606 = vpack.c.b16 %v556, %v554
        %v607 = vpack.c.b16 %v557, %v555
        %v608 = vpack.c.b16 %v560, %v558
        %v609 = vpack.c.b16 %v561, %v559
        %v610 = vpack.c.b16 %v564, %v562
        %v611 = vpack.c.b16 %v565, %v563
        %v612 = vpack.c.b16 %v568, %v566
        %v613 = vpack.c.b16 %v569, %v567
        %v614 = vpack.c.b16 %v572, %v570
        %v615 = vpack.c.b16 %v573, %v571
        %v616 = vpack.c.b16 %v576, %v574
        %v617 = vpack.c.b16 %v577, %v575
        %v618 = vpack.c.b16 %v580, %v578
        %v619 = vpack.c.b16 %v581, %v579
        %v620 = vpack.c.b16 %v584, %v582
        %v621 = vpack.c.b16 %v585, %v583
        %v622 = vpack.c.b16 %v588, %v586
        %v623 = vpack.c.b16 %v589, %v587
        %v624 = vpack.c.b16 %v592, %v590
        %v625 = vpack.c.b16 %v593, %v591
        %658 = vmatprep.subr.bf16.mxu0 %v595
        %659 = vmatpush1.bf16.msra.mxu0 %v594
        %660 = vmatprep.subr.bf16.mxu0 %v597
        %661 = vmatpush1.bf16.msra.mxu0 %v596
        %662 = vmatprep.subr.bf16.mxu0 %v599
        %663 = vmatpush1.bf16.msra.mxu0 %v598
        %664 = vmatprep.subr.bf16.mxu0 %v601
        %665 = vmatpush1.bf16.msra.mxu0 %v600
        %666 = vmatprep.subr.bf16.mxu0 %v603
        %667 = vmatpush1.bf16.msra.mxu0 %v602
        %668 = vmatprep.subr.bf16.mxu0 %v605
        %669 = vmatpush1.bf16.msra.mxu0 %v604
        %670 = vmatprep.subr.bf16.mxu0 %v607
        %671 = vmatpush1.bf16.msra.mxu0 %v606
        %672 = vmatprep.subr.bf16.mxu0 %v609
        %673 = vmatpush1.bf16.msra.mxu0 %v608
        %674 = vmatprep.subr.bf16.mxu0 %v611
        %675 = vmatpush1.bf16.msra.mxu0 %v610
        %676 = vmatprep.subr.bf16.mxu0 %v613
        %677 = vmatpush1.bf16.msra.mxu0 %v612
        %678 = vmatprep.subr.bf16.mxu0 %v615
        %679 = vmatpush1.bf16.msra.mxu0 %v614
        %680 = vmatprep.subr.bf16.mxu0 %v617
        %681 = vmatpush1.bf16.msra.mxu0 %v616
        %682 = vmatprep.subr.bf16.mxu0 %v619
        %683 = vmatpush1.bf16.msra.mxu0 %v618
        %684 = vmatprep.subr.bf16.mxu0 %v621
        %685 = vmatpush1.bf16.msra.mxu0 %v620
        %686 = vmatprep.subr.bf16.mxu0 %v623
        %687 = vmatpush1.bf16.msra.mxu0 %v622
        %688 = vmatprep.subr.bf16.mxu0 %v625
        %689 = vmatpush1.bf16.msra.mxu0 %v624
        %690 = vmatprep.mubr.bf16.mxu0 %v439
        %691 = vmatmul.mubr.bf16.gmra.mrb[0].mxu0 %v438
        %v692 = vpop.f32.mrb[0].mxu0
        %v693 = vadd.f32 %v491, %v692
        %v694 = vpop.f32.mrb[0].mxu0
        %v695 = vadd.f32 %v495, %v694
        %v696 = vpop.f32.mrb[0].mxu0
        %v697 = vadd.f32 %v491, %v696
        %v698 = vpop.f32.mrb[0].mxu0
        %v699 = vadd.f32 %v495, %v698
        %700 = vmatprep.mubr.bf16.mxu0 %v441
        %701 = vmatmul.mubr.bf16.gmra.mrb[0].mxu0 %v440
        %v702 = vpop.f32.mrb[0].mxu0
        %v703 = vadd.f32 %v491, %v702
        %v704 = vpop.f32.mrb[0].mxu0
        %v705 = vadd.f32 %v495, %v704
        %v706 = vpop.f32.mrb[0].mxu0
        %v707 = vadd.f32 %v491, %v706
        %v708 = vpop.f32.mrb[0].mxu0
        %v709 = vadd.f32 %v495, %v708
        %710 = vmatprep.mubr.bf16.mxu0 %v443
        %711 = vmatmul.mubr.bf16.gmra.mrb[0].mxu0 %v442
        %v712 = vpop.f32.mrb[0].mxu0
        %v713 = vadd.f32 %v491, %v712
        %v714 = vpop.f32.mrb[0].mxu0
        %v715 = vadd.f32 %v495, %v714
        %v716 = vpop.f32.mrb[0].mxu0
        %v717 = vadd.f32 %v491, %v716
        %v718 = vpop.f32.mrb[0].mxu0
        %v719 = vadd.f32 %v495, %v718
        %720 = vmatprep.mubr.bf16.mxu0 %v445
        %721 = vmatmul.mubr.bf16.gmra.mrb[0].mxu0 %v444
        %v722 = vpop.f32.mrb[0].mxu0
        %v723 = vadd.f32 %v491, %v722
        %v724 = vpop.f32.mrb[0].mxu0
        %v725 = vadd.f32 %v495, %v724
        %v726 = vpop.f32.mrb[0].mxu0
        %v727 = vadd.f32 %v491, %v726
        %v728 = vpop.f32.mrb[0].mxu0
        %v729 = vadd.f32 %v495, %v728
        %730 = vmatprep.mubr.bf16.mxu0 %v447
        %731 = vmatmul.mubr.bf16.gmra.mrb[0].mxu0 %v446
        %v732 = vpop.f32.mrb[0].mxu0
        %v733 = vadd.f32 %v491, %v732
        %v734 = vpop.f32.mrb[0].mxu0
        %v735 = vadd.f32 %v495, %v734
        %v736 = vpop.f32.mrb[0].mxu0
        %v737 = vadd.f32 %v491, %v736
        %v738 = vpop.f32.mrb[0].mxu0
        %v739 = vadd.f32 %v495, %v738
        %740 = vmatprep.mubr.bf16.mxu0 %v449
        %741 = vmatmul.mubr.bf16.gmra.mrb[0].mxu0 %v448
        %v742 = vpop.f32.mrb[0].mxu0
        %v743 = vadd.f32 %v491, %v742
        %v744 = vpop.f32.mrb[0].mxu0
        %v745 = vadd.f32 %v495, %v744
        %v746 = vpop.f32.mrb[0].mxu0
        %v747 = vadd.f32 %v491, %v746
        %v748 = vpop.f32.mrb[0].mxu0
        %v749 = vadd.f32 %v495, %v748
        %750 = vmatprep.mubr.bf16.mxu0 %v451
        %751 = vmatmul.mubr.bf16.gmra.mrb[0].mxu0 %v450
        %v752 = vpop.f32.mrb[0].mxu0
        %v753 = vadd.f32 %v491, %v752
        %v754 = vpop.f32.mrb[0].mxu0
        %v755 = vadd.f32 %v495, %v754
        %v756 = vpop.f32.mrb[0].mxu0
        %v757 = vadd.f32 %v491, %v756
        %v758 = vpop.f32.mrb[0].mxu0
        %v759 = vadd.f32 %v495, %v758
        %760 = vmatprep.mubr.bf16.mxu0 %v453
        %761 = vmatmul.mubr.bf16.gmra.mrb[0].mxu0 %v452
        %v762 = vpop.f32.mrb[0].mxu0
        %v763 = vadd.f32 %v491, %v762
        %v764 = vpop.f32.mrb[0].mxu0
        %v765 = vadd.f32 %v495, %v764
        %v766 = vpop.f32.mrb[0].mxu0
        %v767 = vadd.f32 %v491, %v766
        %v768 = vpop.f32.mrb[0].mxu0
        %v769 = vadd.f32 %v495, %v768
        %770 = vdwg.mxu0
        %v771 = vpack.c.bf16 %v697, %v693
        %v772 = vpack.c.bf16 %v699, %v695
        %v773 = vpack.c.bf16 %v707, %v703
        %v774 = vpack.c.bf16 %v709, %v705
        %v775 = vpack.c.bf16 %v717, %v713
        %v776 = vpack.c.bf16 %v719, %v715
        %v777 = vpack.c.bf16 %v727, %v723
        %v778 = vpack.c.bf16 %v729, %v725
        %v779 = vpack.c.bf16 %v737, %v733
        %v780 = vpack.c.bf16 %v739, %v735
        %v781 = vpack.c.bf16 %v747, %v743
        %v782 = vpack.c.bf16 %v749, %v745
        %v783 = vpack.c.bf16 %v757, %v753
        %v784 = vpack.c.bf16 %v759, %v755
        %v785 = vpack.c.bf16 %v767, %v763
        %v786 = vpack.c.bf16 %v769, %v765
        %v803 = vunpack.c.l.b16 %v771
        %v804 = vunpack.c.l.b16 %v772
        %v805 = vunpack.c.h.b16 %v771
        %v806 = vunpack.c.h.b16 %v772
        %v807 = vunpack.c.l.b16 %v773
        %v808 = vunpack.c.l.b16 %v774
        %v809 = vunpack.c.h.b16 %v773
        %v810 = vunpack.c.h.b16 %v774
        %v811 = vunpack.c.l.b16 %v775
        %v812 = vunpack.c.l.b16 %v776
        %v813 = vunpack.c.h.b16 %v775
        %v814 = vunpack.c.h.b16 %v776
        %v815 = vunpack.c.l.b16 %v777
        %v816 = vunpack.c.l.b16 %v778
        %v817 = vunpack.c.h.b16 %v777
        %v818 = vunpack.c.h.b16 %v778
        %v819 = vunpack.c.l.b16 %v779
        %v820 = vunpack.c.l.b16 %v780
        %v821 = vunpack.c.h.b16 %v779
        %v822 = vunpack.c.h.b16 %v780
        %v823 = vunpack.c.l.b16 %v781
        %v824 = vunpack.c.l.b16 %v782
        %v825 = vunpack.c.h.b16 %v781
        %v826 = vunpack.c.h.b16 %v782
        %v827 = vunpack.c.l.b16 %v783
        %v828 = vunpack.c.l.b16 %v784
        %v829 = vunpack.c.h.b16 %v783
        %v830 = vunpack.c.h.b16 %v784
        %v831 = vunpack.c.l.b16 %v785
        %v832 = vunpack.c.l.b16 %v786
        %v833 = vunpack.c.h.b16 %v785
        %v834 = vunpack.c.h.b16 %v786
        %v835 = vpack.c.b16 %v804, %v803
        %v836 = vpack.c.b16 %v806, %v805
        %v837 = vpack.c.b16 %v808, %v807
        %v838 = vpack.c.b16 %v810, %v809
        %v839 = vpack.c.b16 %v812, %v811
        %v840 = vpack.c.b16 %v814, %v813
        %v841 = vpack.c.b16 %v816, %v815
        %v842 = vpack.c.b16 %v818, %v817
        %v843 = vpack.c.b16 %v820, %v819
        %v844 = vpack.c.b16 %v822, %v821
        %v845 = vpack.c.b16 %v824, %v823
        %v846 = vpack.c.b16 %v826, %v825
        %v847 = vpack.c.b16 %v828, %v827
        %v848 = vpack.c.b16 %v830, %v829
        %v849 = vpack.c.b16 %v832, %v831
        %v850 = vpack.c.b16 %v834, %v833
        %867 = vst [vmem:[%s250] sm:$0xff] %v835
        %868 = vst [vmem:[%s250 + $0x8] sm:$0xff] %v836
        %869 = vst [vmem:[%s250 + $0x10] sm:$0xff] %v837
        %870 = vst [vmem:[%s250 + $0x18] sm:$0xff] %v838
        %871 = vst [vmem:[%s250 + $0x20] sm:$0xff] %v839
        %872 = vst [vmem:[%s250 + $0x28] sm:$0xff] %v840
        %873 = vst [vmem:[%s250 + $0x30] sm:$0xff] %v841
        %874 = vst [vmem:[%s250 + $0x38] sm:$0xff] %v842
        %875 = vst [vmem:[%s250 + $0x40] sm:$0xff] %v843
        %876 = vst [vmem:[%s250 + $0x48] sm:$0xff] %v844
        %877 = vst [vmem:[%s250 + $0x50] sm:$0xff] %v845
        %878 = vst [vmem:[%s250 + $0x58] sm:$0xff] %v846
        %879 = vst [vmem:[%s250 + $0x60] sm:$0xff] %v847
        %880 = vst [vmem:[%s250 + $0x68] sm:$0xff] %v848
        %881 = vst [vmem:[%s250 + $0x70] sm:$0xff] %v849
        %882 = vst [vmem:[%s250 + $0x78] sm:$0xff] %v850
        %p883 = scmp.lt.s32.totalorder %s18, 1
        %s884 = scalar_select %p883, %s18, 1
        %s885 = smul.addr %s884, 32
        %s886 = smul.addr %s885, 4
        %s887 = scalar_lea.vmem %s5, %s886
        // Predicated region
        $region49: #{diffeeg_forward.3} parent=39 // pred_check
          %p888 = pneg %p146
        $region50: #{diffeeg_forward.3} parent=39 // pred_check_branch
          %890 = sbr.rel (%p888) target = $region52
        $region51: #{diffeeg_forward.3} parent=39 // pred_region
          _
        $region52: #{diffeeg_forward.3} parent=39 // pred_fallthru
          _
      $region40: #{diffeeg_forward.3} parent=5 // pred_fallthru
        _
      %p891 = scmp.le.s32.totalorder 2, %s13
      // Predicated region
      $region53: #{diffeeg_forward.3} parent=5 // pred_check
        %p892 = pneg %p891
      $region54: #{diffeeg_forward.3} parent=5 // pred_check_branch
        %894 = sbr.rel (%p892) target = $region56
      $region55: #{diffeeg_forward.3} parent=5 // pred_region
        %s895 = ssub.s32 %s13, 2
        // Predicated region
        $region57: #{diffeeg_forward.3} parent=55 // pred_check
          %p896 = pneg %p152
        $region58: #{diffeeg_forward.3} parent=55 // pred_check_branch
          %898 = sbr.rel (%p896) target = $region60
        $region59: #{diffeeg_forward.3} parent=55 // pred_region
          %p899 = scmp.lt.s32.totalorder %s19, 1
          %s900 = scalar_select %p899, %s19, 1
          %s901 = smul.addr %s900, 32
          %s902 = smul.addr %s901, 4
          %s903 = scalar_lea.vmem %s5, %s902
        $region60: #{diffeeg_forward.3} parent=55 // pred_fallthru
          _
      $region56: #{diffeeg_forward.3} parent=5 // pred_fallthru
        _
    $region6: #{diffeeg_forward.3} parent=1 // loop_footer
      %s17 = sadd.s32 1, %s13
    $region7: #{diffeeg_forward.3} parent=1 // loop_footer_branch
      %12 = sbr.rel target = $region3
    $region8: #{diffeeg_forward.3} parent=1 // loop_exit
      _
    %904 = vsyncpa [#allocation3], 1
    %s905 = scalar_lea.sflag [#allocation3], 1
    %906 = vsyncpa %s905, 1
    %907 = vsyncpa [#allocation5], 1

// kernel: diffeeg_forward.5
$region0: #{diffeeg_forward.5}
  #allocation0 [shape = 'u32[]', space=smem, size = 0x4, offset = 0x4, fixed_abs, tag = 'smem constant byte address 0x4 - core index']
  #allocation1 [shape = 'u32[144,128]{1,0:T(1,128)}', space=vmem, size = 0x12000, scoped, tag = 'internal scratch']
  %s0 = inlined_call_operand.vmem [shape: f32[2,128,128], index: 0, kind: input, shape index: {}]
  %s1 = inlined_call_operand.vmem [shape: bf16[128,128], index: 1, kind: input, shape index: {}]
  %s2 = inlined_call_operand.vmem [shape: f32[128,1], index: 2, kind: input, shape index: {}]
  %s3 = inlined_call_operand.vmem [shape: bf16[4,128], index: 3, kind: input, shape index: {}]
  %s4 = inlined_call_operand.vmem [shape: f32[4,1], index: 4, kind: input, shape index: {}]
  %s5 = inlined_call_operand.vmem [shape: f32[2,4,128], index: 5, kind: output, shape index: {}]
  %s6 = sld [smem:[#allocation0]]
  $region53: #{diffeeg_forward.5} parent=0
    _
  %s8 = ssub.s32 1, %s6
  %s9 = scalar_select 0, %s8, %s6
  loop: start=0, step=1, limit=4
  $region2: #{diffeeg_forward.5} parent=0 // loop_pre_header
    _
  $region3: #{diffeeg_forward.5} parent=0 // loop_header
    %s11 = sphi 0, %s15
    %p12 = scmp.ge.s32.totalorder %s11, 4
    %s21 = sphi 0, %s23
    %s24 = sphi 0, %s21
    %s25 = sphi 0, %s24
    %s41 = sphi 0, %s25
    %s45 = sphi 0, %s45
    %s47 = sphi 0, %s45
    %s48 = sphi 0, %s47
    %s62 = sphi 0, %s48
    %s66 = sphi 0, %s66
    %s68 = sphi 0, %s66
    %s69 = sphi 0, %s68
    %s83 = sphi 0, %s69
    %s87 = sphi 0, %s87
    %s89 = sphi 0, %s87
    %s90 = sphi 0, %s89
    %s104 = sphi 0, %s90
    %s108 = sphi 0, %s108
    %s110 = sphi 0, %s108
    %s111 = sphi 0, %s110
    %s125 = sphi 0, %s111
    %s131 = sphi 0, %s133
    %s134 = sphi 0, %s131
    %s135 = sphi 0, %s134
    %s151 = sphi 0, %s135
  $region4: #{diffeeg_forward.5} parent=0 // loop_header_branch
    %14 = sbr.rel (%p12) target = $region8
  $region5: #{diffeeg_forward.5} parent=0 // loop_body
    %s16 = ssub.s32 %s11, 1
    %s17 = ssub.s32 %s11, 2
    %s18 = sadd.s32 %s11, 1
    %s19 = ssub.s32 %s11, %s18
    %p20 = scmp.eq.s32.totalorder %s19, 0
    %s22 = sadd.s32 %s21, 1
    %s23 = scalar_select %p20, %s21, %s22
    %p26 = pneg %p20
    %p27 = scmp.eq.s32.totalorder %s11, 1
    %p28 = por %p26, %p27
    %p29 = scmp.ne.s32.totalorder %s21, %s24
    %p30 = scmp.eq.s32.totalorder %s11, 0
    %p31 = por %p29, %p30
    %p32 = scmp.ne.s32.totalorder %s21, %s24
    %p33 = scmp.eq.s32.totalorder %s16, 1
    %p34 = por %p32, %p33
    %p35 = scmp.ne.s32.totalorder %s24, %s25
    %p36 = scmp.eq.s32.totalorder %s16, 0
    %p37 = por %p35, %p36
    %p38 = scmp.ne.s32.totalorder %s24, %s25
    %p39 = scmp.eq.s32.totalorder %s17, 1
    %p40 = por %p38, %p39
    %p42 = scmp.ne.s32.totalorder %s25, %s41
    %p43 = scmp.eq.s32.totalorder %s17, 0
    %p44 = por %p42, %p43
    %s46 = sadd.s32 %s45, 1
    %p49 = scmp.eq.s32.totalorder %s11, 1
    %p50 = scmp.ne.s32.totalorder %s45, %s47
    %p51 = scmp.eq.s32.totalorder %s11, 0
    %p52 = por %p50, %p51
    %p53 = scmp.ne.s32.totalorder %s45, %s47
    %p54 = scmp.eq.s32.totalorder %s16, 1
    %p55 = por %p53, %p54
    %p56 = scmp.ne.s32.totalorder %s47, %s48
    %p57 = scmp.eq.s32.totalorder %s16, 0
    %p58 = por %p56, %p57
    %p59 = scmp.ne.s32.totalorder %s47, %s48
    %p60 = scmp.eq.s32.totalorder %s17, 1
    %p61 = por %p59, %p60
    %p63 = scmp.ne.s32.totalorder %s48, %s62
    %p64 = scmp.eq.s32.totalorder %s17, 0
    %p65 = por %p63, %p64
    %s67 = sadd.s32 %s66, 1
    %p70 = scmp.eq.s32.totalorder %s11, 1
    %p71 = scmp.ne.s32.totalorder %s66, %s68
    %p72 = scmp.eq.s32.totalorder %s11, 0
    %p73 = por %p71, %p72
    %p74 = scmp.ne.s32.totalorder %s66, %s68
    %p75 = scmp.eq.s32.totalorder %s16, 1
    %p76 = por %p74, %p75
    %p77 = scmp.ne.s32.totalorder %s68, %s69
    %p78 = scmp.eq.s32.totalorder %s16, 0
    %p79 = por %p77, %p78
    %p80 = scmp.ne.s32.totalorder %s68, %s69
    %p81 = scmp.eq.s32.totalorder %s17, 1
    %p82 = por %p80, %p81
    %p84 = scmp.ne.s32.totalorder %s69, %s83
    %p85 = scmp.eq.s32.totalorder %s17, 0
    %p86 = por %p84, %p85
    %s88 = sadd.s32 %s87, 1
    %p91 = scmp.eq.s32.totalorder %s11, 1
    %p92 = scmp.ne.s32.totalorder %s87, %s89
    %p93 = scmp.eq.s32.totalorder %s11, 0
    %p94 = por %p92, %p93
    %p95 = scmp.ne.s32.totalorder %s87, %s89
    %p96 = scmp.eq.s32.totalorder %s16, 1
    %p97 = por %p95, %p96
    %p98 = scmp.ne.s32.totalorder %s89, %s90
    %p99 = scmp.eq.s32.totalorder %s16, 0
    %p100 = por %p98, %p99
    %p101 = scmp.ne.s32.totalorder %s89, %s90
    %p102 = scmp.eq.s32.totalorder %s17, 1
    %p103 = por %p101, %p102
    %p105 = scmp.ne.s32.totalorder %s90, %s104
    %p106 = scmp.eq.s32.totalorder %s17, 0
    %p107 = por %p105, %p106
    %s109 = sadd.s32 %s108, 1
    %p112 = scmp.eq.s32.totalorder %s11, 1
    %p113 = scmp.ne.s32.totalorder %s108, %s110
    %p114 = scmp.eq.s32.totalorder %s11, 0
    %p115 = por %p113, %p114
    %p116 = scmp.ne.s32.totalorder %s108, %s110
    %p117 = scmp.eq.s32.totalorder %s16, 1
    %p118 = por %p116, %p117
    %p119 = scmp.ne.s32.totalorder %s110, %s111
    %p120 = scmp.eq.s32.totalorder %s16, 0
    %p121 = por %p119, %p120
    %p122 = scmp.ne.s32.totalorder %s110, %s111
    %p123 = scmp.eq.s32.totalorder %s17, 1
    %p124 = por %p122, %p123
    %p126 = scmp.ne.s32.totalorder %s111, %s125
    %p127 = scmp.eq.s32.totalorder %s17, 0
    %p128 = por %p126, %p127
    %s129 = ssub.s32 %s11, %s18
    %p130 = scmp.eq.s32.totalorder %s129, 0
    %s132 = sadd.s32 %s131, 1
    %s133 = scalar_select %p130, %s131, %s132
    %p136 = pneg %p130
    %p137 = scmp.eq.s32.totalorder %s11, 1
    %p138 = por %p136, %p137
    %p139 = scmp.ne.s32.totalorder %s131, %s134
    %p140 = scmp.eq.s32.totalorder %s11, 0
    %p141 = por %p139, %p140
    %p142 = scmp.ne.s32.totalorder %s131, %s134
    %p143 = scmp.eq.s32.totalorder %s16, 1
    %p144 = por %p142, %p143
    %p145 = scmp.ne.s32.totalorder %s134, %s135
    %p146 = scmp.eq.s32.totalorder %s16, 0
    %p147 = por %p145, %p146
    %p148 = scmp.ne.s32.totalorder %s134, %s135
    %p149 = scmp.eq.s32.totalorder %s17, 1
    %p150 = por %p148, %p149
    %p152 = scmp.ne.s32.totalorder %s135, %s151
    %p153 = scmp.eq.s32.totalorder %s17, 0
    %p154 = por %p152, %p153
    %p155 = scmp.le.s32.totalorder 1, %s11
    %p156 = scmp.lt.s32.totalorder %s11, 3
    %p157 = pnand %p155, %p156
    %p158 = pneg %p157
    // Predicated region
    $region9: #{diffeeg_forward.5} parent=5 // pred_check
      _
    $region10: #{diffeeg_forward.5} parent=5 // pred_check_branch
      %160 = sbr.rel (%p157) target = $region12
    $region11: #{diffeeg_forward.5} parent=5 // pred_region
      %s161 = ssub.s32 %s11, 1
      // Predicated region
      $region13: #{diffeeg_forward.5} parent=11 // pred_check
        %p162 = pneg %p58
      $region14: #{diffeeg_forward.5} parent=11 // pred_check_branch
        %164 = sbr.rel (%p162) target = $region16
      $region15: #{diffeeg_forward.5} parent=11 // pred_region
        _
      $region16: #{diffeeg_forward.5} parent=11 // pred_fallthru
        _
      // Predicated region
      $region17: #{diffeeg_forward.5} parent=11 // pred_check
        %p165 = pneg %p79
      $region18: #{diffeeg_forward.5} parent=11 // pred_check_branch
        %167 = sbr.rel (%p165) target = $region20
      $region19: #{diffeeg_forward.5} parent=11 // pred_region
        _
      $region20: #{diffeeg_forward.5} parent=11 // pred_fallthru
        _
      // Predicated region
      $region21: #{diffeeg_forward.5} parent=11 // pred_check
        %p168 = pneg %p100
      $region22: #{diffeeg_forward.5} parent=11 // pred_check_branch
        %170 = sbr.rel (%p168) target = $region24
      $region23: #{diffeeg_forward.5} parent=11 // pred_region
        _
      $region24: #{diffeeg_forward.5} parent=11 // pred_fallthru
        _
      // Predicated region
      $region25: #{diffeeg_forward.5} parent=11 // pred_check
        %p171 = pneg %p121
      $region26: #{diffeeg_forward.5} parent=11 // pred_check_branch
        %173 = sbr.rel (%p171) target = $region28
      $region27: #{diffeeg_forward.5} parent=11 // pred_region
        _
      $region28: #{diffeeg_forward.5} parent=11 // pred_fallthru
        _
    $region12: #{diffeeg_forward.5} parent=5 // pred_fallthru
      _
    %p174 = scmp.lt.s32.totalorder %s11, 2
    // Predicated region
    $region29: #{diffeeg_forward.5} parent=5 // pred_check
      %p175 = pneg %p174
    $region30: #{diffeeg_forward.5} parent=5 // pred_check_branch
      %177 = sbr.rel (%p175) target = $region32
    $region31: #{diffeeg_forward.5} parent=5 // pred_region
      // Predicated region
      $region33: #{diffeeg_forward.5} parent=31 // pred_check
        %p178 = pneg %p31
      $region34: #{diffeeg_forward.5} parent=31 // pred_check_branch
        %180 = sbr.rel (%p178) target = $region36
      $region35: #{diffeeg_forward.5} parent=31 // pred_region
        %p181 = scmp.lt.s32.totalorder %s11, 1
        %s182 = scalar_select %p181, %s11, 1
        %s183 = smul.addr %s182, 16
        %s184 = smul.addr %s183, 8
        %s185 = scalar_lea.vmem %s0, %s184
      $region36: #{diffeeg_forward.5} parent=31 // pred_fallthru
        _
    $region32: #{diffeeg_forward.5} parent=5 // pred_fallthru
      _
    %p186 = scmp.le.s32.totalorder 1, %s11
    %p187 = scmp.lt.s32.totalorder %s11, 3
    %p188 = pnand %p186, %p187
    %p189 = pneg %p188
    // Predicated region
    $region37: #{diffeeg_forward.5} parent=5 // pred_check
      _
    $region38: #{diffeeg_forward.5} parent=5 // pred_check_branch
      %191 = sbr.rel (%p188) target = $region40
    $region39: #{diffeeg_forward.5} parent=5 // pred_region
      %s192 = ssub.s32 %s11, 1
      %p193 = scmp.lt.s32.totalorder %s16, 1
      %s194 = scalar_select %p193, %s16, 1
      %s195 = smul.addr %s194, 16
      %s196 = smul.addr %s195, 8
      %s197 = scalar_lea.vmem %s0, %s196
      %p198 = pneg %p37
      %p199 = pneg %p34
      %p200 = pneg %p58
      %p201 = pneg %p55
      %p202 = pneg %p79
      %p203 = pneg %p76
      %p204 = pneg %p100
      %p205 = pneg %p97
      %p206 = pneg %p121
      %p207 = pneg %p118
      %p208 = pneg %p147
      %p209 = pneg %p144
      %p210 = scmp.lt.s32.totalorder %s16, 1
      %s211 = scalar_select %p210, %s16, 1
      %s212 = smul.addr %s211, 4
      %s213 = scalar_lea.vmem %s5, %s212
      %p214 = scmp.lt.s32.totalorder %s16, 1
      %s215 = scalar_select %p214, %s16, 1
      %s216 = smul.addr %s215, 16
      %s217 = smul.addr %s216, 8
      %s218 = scalar_lea.vmem %s0, %s217
      %p219 = scmp.lt.s32.totalorder %s16, 1
      %s220 = scalar_select %p219, %s16, 1
      %s221 = smul.addr %s220, 4
      %s222 = scalar_lea.vmem %s5, %s221
      %v224 = vld [vmem:[%s218] sm:$0xff]
      %v225 = vld [vmem:[%s218 + $0x8] sm:$0xff]
      %v226 = vld [vmem:[%s218 + $0x10] sm:$0xff]
      %v227 = vld [vmem:[%s218 + $0x18] sm:$0xff]
      %v228 = vld [vmem:[%s218 + $0x20] sm:$0xff]
      %v229 = vld [vmem:[%s218 + $0x28] sm:$0xff]
      %v230 = vld [vmem:[%s218 + $0x30] sm:$0xff]
      %v231 = vld [vmem:[%s218 + $0x38] sm:$0xff]
      %v232 = vld [vmem:[%s218 + $0x40] sm:$0xff]
      %v233 = vld [vmem:[%s218 + $0x48] sm:$0xff]
      %v234 = vld [vmem:[%s218 + $0x50] sm:$0xff]
      %v235 = vld [vmem:[%s218 + $0x58] sm:$0xff]
      %v236 = vld [vmem:[%s218 + $0x60] sm:$0xff]
      %v237 = vld [vmem:[%s218 + $0x68] sm:$0xff]
      %v238 = vld [vmem:[%s218 + $0x70] sm:$0xff]
      %v239 = vld [vmem:[%s218 + $0x78] sm:$0xff]
      %240 = vxpose.xlu0.b32.start [1/16] %v224, 128
      %241 = vxpose.xlu0.b32.cont [2/16] %v225, 128
      %242 = vxpose.xlu0.b32.cont [3/16] %v226, 128
      %243 = vxpose.xlu0.b32.cont [4/16] %v227, 128
      %244 = vxpose.xlu0.b32.cont [5/16] %v228, 128
      %245 = vxpose.xlu0.b32.cont [6/16] %v229, 128
      %246 = vxpose.xlu0.b32.cont [7/16] %v230, 128
      %247 = vxpose.xlu0.b32.cont [8/16] %v231, 128
      %248 = vxpose.xlu0.b32.cont [9/16] %v232, 128
      %249 = vxpose.xlu0.b32.cont [10/16] %v233, 128
      %250 = vxpose.xlu0.b32.cont [11/16] %v234, 128
      %251 = vxpose.xlu0.b32.cont [12/16] %v235, 128
      %252 = vxpose.xlu0.b32.cont [13/16] %v236, 128
      %253 = vxpose.xlu0.b32.cont [14/16] %v237, 128
      %254 = vxpose.xlu0.b32.cont [15/16] %v238, 128
      %255 = vxpose.xlu0.b32.end [16/16] %v239, 128
      %v256 = vpop.trf.xlu0
      %v257 = vpop.trf.xlu0
      %v258 = vpop.trf.xlu0
      %v259 = vpop.trf.xlu0
      %v260 = vpop.trf.xlu0
      %v261 = vpop.trf.xlu0
      %v262 = vpop.trf.xlu0
      %v263 = vpop.trf.xlu0
      %v264 = vpop.trf.xlu0
      %v265 = vpop.trf.xlu0
      %v266 = vpop.trf.xlu0
      %v267 = vpop.trf.xlu0
      %v268 = vpop.trf.xlu0
      %v269 = vpop.trf.xlu0
      %v270 = vpop.trf.xlu0
      %v271 = vpop.trf.xlu0
      %v272 = vpack.c.bf16 %v257, %v256
      %v273 = vpack.c.bf16 %v259, %v258
      %v274 = vpack.c.bf16 %v261, %v260
      %v275 = vpack.c.bf16 %v263, %v262
      %v276 = vpack.c.bf16 %v265, %v264
      %v277 = vpack.c.bf16 %v267, %v266
      %v278 = vpack.c.bf16 %v269, %v268
      %v279 = vpack.c.bf16 %v271, %v270
      %v280 = vld [vmem:[%s1] sm:$0xf]
      %v281 = vld [vmem:[%s1 + $0x4] sm:$0xf]
      %v282 = vld [vmem:[%s1 + $0x8] sm:$0xf]
      %v283 = vld [vmem:[%s1 + $0xc] sm:$0xf]
      %v284 = vld [vmem:[%s1 + $0x10] sm:$0xf]
      %v285 = vld [vmem:[%s1 + $0x14] sm:$0xf]
      %v286 = vld [vmem:[%s1 + $0x18] sm:$0xf]
      %v287 = vld [vmem:[%s1 + $0x1c] sm:$0xf]
      %v288 = vld [vmem:[%s1 + $0x20] sm:$0xf]
      %v289 = vld [vmem:[%s1 + $0x24] sm:$0xf]
      %v290 = vld [vmem:[%s1 + $0x28] sm:$0xf]
      %v291 = vld [vmem:[%s1 + $0x2c] sm:$0xf]
      %v292 = vld [vmem:[%s1 + $0x30] sm:$0xf]
      %v293 = vld [vmem:[%s1 + $0x34] sm:$0xf]
      %v294 = vld [vmem:[%s1 + $0x38] sm:$0xf]
      %v295 = vld [vmem:[%s1 + $0x3c] sm:$0xf]
      %v296 = vld [vmem:[%s2] sm:$0xff]
      %v297 = vld [vmem:[%s2 + $0x8] sm:$0xff]
      %v298 = vld [vmem:[%s2 + $0x10] sm:$0xff]
      %v299 = vld [vmem:[%s2 + $0x18] sm:$0xff]
      %v300 = vld [vmem:[%s2 + $0x20] sm:$0xff]
      %v301 = vld [vmem:[%s2 + $0x28] sm:$0xff]
      %v302 = vld [vmem:[%s2 + $0x30] sm:$0xff]
      %v303 = vld [vmem:[%s2 + $0x38] sm:$0xff]
      %v304 = vld [vmem:[%s2 + $0x40] sm:$0xff]
      %v305 = vld [vmem:[%s2 + $0x48] sm:$0xff]
      %v306 = vld [vmem:[%s2 + $0x50] sm:$0xff]
      %v307 = vld [vmem:[%s2 + $0x58] sm:$0xff]
      %v308 = vld [vmem:[%s2 + $0x60] sm:$0xff]
      %v309 = vld [vmem:[%s2 + $0x68] sm:$0xff]
      %v310 = vld [vmem:[%s2 + $0x70] sm:$0xff]
      %v311 = vld [vmem:[%s2 + $0x78] sm:$0xff]
      %313 = vset.pattern.permute.xlu0 0
      %314 = vperm.xlu0 %313, %v296
      %v315 = vpop.permute.xlu0 %314
      %318 = vset.pattern.permute.xlu0 0
      %319 = vperm.xlu0 %318, %v297
      %v320 = vpop.permute.xlu0 %319
      %323 = vset.pattern.permute.xlu0 0
      %324 = vperm.xlu0 %323, %v298
      %v325 = vpop.permute.xlu0 %324
      %328 = vset.pattern.permute.xlu0 0
      %329 = vperm.xlu0 %328, %v299
      %v330 = vpop.permute.xlu0 %329
      %333 = vset.pattern.permute.xlu0 0
      %334 = vperm.xlu0 %333, %v300
      %v335 = vpop.permute.xlu0 %334
      %338 = vset.pattern.permute.xlu0 0
      %339 = vperm.xlu0 %338, %v301
      %v340 = vpop.permute.xlu0 %339
      %343 = vset.pattern.permute.xlu0 0
      %344 = vperm.xlu0 %343, %v302
      %v345 = vpop.permute.xlu0 %344
      %348 = vset.pattern.permute.xlu0 0
      %349 = vperm.xlu0 %348, %v303
      %v350 = vpop.permute.xlu0 %349
      %353 = vset.pattern.permute.xlu0 0
      %354 = vperm.xlu0 %353, %v304
      %v355 = vpop.permute.xlu0 %354
      %358 = vset.pattern.permute.xlu0 0
      %359 = vperm.xlu0 %358, %v305
      %v360 = vpop.permute.xlu0 %359
      %363 = vset.pattern.permute.xlu0 0
      %364 = vperm.xlu0 %363, %v306
      %v365 = vpop.permute.xlu0 %364
      %368 = vset.pattern.permute.xlu0 0
      %369 = vperm.xlu0 %368, %v307
      %v370 = vpop.permute.xlu0 %369
      %373 = vset.pattern.permute.xlu0 0
      %374 = vperm.xlu0 %373, %v308
      %v375 = vpop.permute.xlu0 %374
      %378 = vset.pattern.permute.xlu0 0
      %379 = vperm.xlu0 %378, %v309
      %v380 = vpop.permute.xlu0 %379
      %383 = vset.pattern.permute.xlu0 0
      %384 = vperm.xlu0 %383, %v310
      %v385 = vpop.permute.xlu0 %384
      %388 = vset.pattern.permute.xlu0 0
      %389 = vperm.xlu0 %388, %v311
      %v390 = vpop.permute.xlu0 %389
      %v408 = vunpack.c.l.b16 %v280
      %v409 = vunpack.c.l.b16 %v281
      %v410 = vunpack.c.l.b16 %v282
      %v411 = vunpack.c.l.b16 %v283
      %v412 = vunpack.c.l.b16 %v284
      %v413 = vunpack.c.l.b16 %v285
      %v414 = vunpack.c.l.b16 %v286
      %v415 = vunpack.c.l.b16 %v287
      %v416 = vunpack.c.l.b16 %v288
      %v417 = vunpack.c.l.b16 %v289
      %v418 = vunpack.c.l.b16 %v290
      %v419 = vunpack.c.l.b16 %v291
      %v420 = vunpack.c.l.b16 %v292
      %v421 = vunpack.c.l.b16 %v293
      %v422 = vunpack.c.l.b16 %v294
      %v423 = vunpack.c.l.b16 %v295
      %v424 = vpack.c.b16 %v409, %v408
      %v425 = vpack.c.b16 %v411, %v410
      %v426 = vpack.c.b16 %v413, %v412
      %v427 = vpack.c.b16 %v415, %v414
      %v428 = vpack.c.b16 %v417, %v416
      %v429 = vpack.c.b16 %v419, %v418
      %v430 = vpack.c.b16 %v421, %v420
      %v431 = vpack.c.b16 %v423, %v422
      %440 = vmatprep.subr.bf16.mxu0 0
      %441 = vmatpush1.bf16.msra.mxu0 %v272
      %442 = vmatprep.subr.bf16.mxu0 0
      %443 = vmatpush1.bf16.msra.mxu0 %v273
      %444 = vmatprep.subr.bf16.mxu0 0
      %445 = vmatpush1.bf16.msra.mxu0 %v274
      %446 = vmatprep.subr.bf16.mxu0 0
      %447 = vmatpush1.bf16.msra.mxu0 %v275
      %448 = vmatprep.subr.bf16.mxu0 0
      %449 = vmatpush1.bf16.msra.mxu0 %v276
      %450 = vmatprep.subr.bf16.mxu0 0
      %451 = vmatpush1.bf16.msra.mxu0 %v277
      %452 = vmatprep.subr.bf16.mxu0 0
      %453 = vmatpush1.bf16.msra.mxu0 %v278
      %454 = vmatprep.subr.bf16.mxu0 0
      %455 = vmatpush1.bf16.msra.mxu0 %v279
      %456 = vmatprep.subr.bf16.mxu0 0
      %457 = vmatpush1.bf16.msra.mxu0 0
      %458 = vmatprep.subr.bf16.mxu0 0
      %459 = vmatpush1.bf16.msra.mxu0 0
      %460 = vmatprep.subr.bf16.mxu0 0
      %461 = vmatpush1.bf16.msra.mxu0 0
      %462 = vmatprep.subr.bf16.mxu0 0
      %463 = vmatpush1.bf16.msra.mxu0 0
      %464 = vmatprep.subr.bf16.mxu0 0
      %465 = vmatpush1.bf16.msra.mxu0 0
      %466 = vmatprep.subr.bf16.mxu0 0
      %467 = vmatpush1.bf16.msra.mxu0 0
      %468 = vmatprep.subr.bf16.mxu0 0
      %469 = vmatpush1.bf16.msra.mxu0 0
      %470 = vmatprep.subr.bf16.mxu0 0
      %471 = vmatpush1.bf16.msra.mxu0 0
      %472 = vmatprep.mubr.bf16.mxu0 0
      %473 = vmatmul.mubr.bf16.gmra.mrb[0].mxu0 %v424
      %v474 = vpop.f32.mrb[0].mxu0
      %v475 = vadd.f32 %v315, %v474
      %v476 = vpop.f32.mrb[0].mxu0
      %v477 = vpop.f32.mrb[0].mxu0
      %v478 = vadd.f32 %v320, %v477
      %v479 = vpop.f32.mrb[0].mxu0
      %480 = vmatprep.mubr.bf16.mxu0 0
      %481 = vmatmul.mubr.bf16.gmra.mrb[0].mxu0 %v425
      %v482 = vpop.f32.mrb[0].mxu0
      %v483 = vadd.f32 %v325, %v482
      %v484 = vpop.f32.mrb[0].mxu0
      %v485 = vpop.f32.mrb[0].mxu0
      %v486 = vadd.f32 %v330, %v485
      %v487 = vpop.f32.mrb[0].mxu0
      %488 = vmatprep.mubr.bf16.mxu0 0
      %489 = vmatmul.mubr.bf16.gmra.mrb[0].mxu0 %v426
      %v490 = vpop.f32.mrb[0].mxu0
      %v491 = vadd.f32 %v335, %v490
      %v492 = vpop.f32.mrb[0].mxu0
      %v493 = vpop.f32.mrb[0].mxu0
      %v494 = vadd.f32 %v340, %v493
      %v495 = vpop.f32.mrb[0].mxu0
      %496 = vmatprep.mubr.bf16.mxu0 0
      %497 = vmatmul.mubr.bf16.gmra.mrb[0].mxu0 %v427
      %v498 = vpop.f32.mrb[0].mxu0
      %v499 = vadd.f32 %v345, %v498
      %v500 = vpop.f32.mrb[0].mxu0
      %v501 = vpop.f32.mrb[0].mxu0
      %v502 = vadd.f32 %v350, %v501
      %v503 = vpop.f32.mrb[0].mxu0
      %504 = vmatprep.mubr.bf16.mxu0 0
      %505 = vmatmul.mubr.bf16.gmra.mrb[0].mxu0 %v428
      %v506 = vpop.f32.mrb[0].mxu0
      %v507 = vadd.f32 %v355, %v506
      %v508 = vpop.f32.mrb[0].mxu0
      %v509 = vpop.f32.mrb[0].mxu0
      %v510 = vadd.f32 %v360, %v509
      %v511 = vpop.f32.mrb[0].mxu0
      %512 = vmatprep.mubr.bf16.mxu0 0
      %513 = vmatmul.mubr.bf16.gmra.mrb[0].mxu0 %v429
      %v514 = vpop.f32.mrb[0].mxu0
      %v515 = vadd.f32 %v365, %v514
      %v516 = vpop.f32.mrb[0].mxu0
      %v517 = vpop.f32.mrb[0].mxu0
      %v518 = vadd.f32 %v370, %v517
      %v519 = vpop.f32.mrb[0].mxu0
      %520 = vmatprep.mubr.bf16.mxu0 0
      %521 = vmatmul.mubr.bf16.gmra.mrb[0].mxu0 %v430
      %v522 = vpop.f32.mrb[0].mxu0
      %v523 = vadd.f32 %v375, %v522
      %v524 = vpop.f32.mrb[0].mxu0
      %v525 = vpop.f32.mrb[0].mxu0
      %v526 = vadd.f32 %v380, %v525
      %v527 = vpop.f32.mrb[0].mxu0
      %528 = vmatprep.mubr.bf16.mxu0 0
      %529 = vmatmul.mubr.bf16.gmra.mrb[0].mxu0 %v431
      %v530 = vpop.f32.mrb[0].mxu0
      %v531 = vadd.f32 %v385, %v530
      %v532 = vpop.f32.mrb[0].mxu0
      %v533 = vpop.f32.mrb[0].mxu0
      %v534 = vadd.f32 %v390, %v533
      %v535 = vpop.f32.mrb[0].mxu0
      %536 = vdwg.mxu0
      %v537 = vmax.f32 %v475, 0.0
      %v538 = vmax.f32 %v478, 0.0
      %v539 = vmax.f32 %v483, 0.0
      %v540 = vmax.f32 %v486, 0.0
      %v541 = vmax.f32 %v491, 0.0
      %v542 = vmax.f32 %v494, 0.0
      %v543 = vmax.f32 %v499, 0.0
      %v544 = vmax.f32 %v502, 0.0
      %v545 = vmax.f32 %v507, 0.0
      %v546 = vmax.f32 %v510, 0.0
      %v547 = vmax.f32 %v515, 0.0
      %v548 = vmax.f32 %v518, 0.0
      %v549 = vmax.f32 %v523, 0.0
      %v550 = vmax.f32 %v526, 0.0
      %v551 = vmax.f32 %v531, 0.0
      %v552 = vmax.f32 %v534, 0.0
      %v553 = vld [vmem:[%s3] sm:$0x3]
      %v554 = vpack.c.bf16 %v538, %v537
      %v555 = vpack.c.bf16 %v540, %v539
      %v556 = vpack.c.bf16 %v542, %v541
      %v557 = vpack.c.bf16 %v544, %v543
      %v558 = vpack.c.bf16 %v546, %v545
      %v559 = vpack.c.bf16 %v548, %v547
      %v560 = vpack.c.bf16 %v550, %v549
      %v561 = vpack.c.bf16 %v552, %v551
      %v562 = vld [vmem:[%s4] sm:$0xf]
      %564 = vset.pattern.permute.xlu0 0
      %565 = vperm.xlu0 %564, %v562
      %v566 = vpop.permute.xlu0 %565
      %568 = vmatprep.subr.bf16.mxu0 0
      %569 = vmatpush1.bf16.msra.mxu0 %v554
      %570 = vmatprep.subr.bf16.mxu0 0
      %571 = vmatpush1.bf16.msra.mxu0 %v555
      %572 = vmatprep.subr.bf16.mxu0 0
      %573 = vmatpush1.bf16.msra.mxu0 %v556
      %574 = vmatprep.subr.bf16.mxu0 0
      %575 = vmatpush1.bf16.msra.mxu0 %v557
      %576 = vmatprep.subr.bf16.mxu0 0
      %577 = vmatpush1.bf16.msra.mxu0 %v558
      %578 = vmatprep.subr.bf16.mxu0 0
      %579 = vmatpush1.bf16.msra.mxu0 %v559
      %580 = vmatprep.subr.bf16.mxu0 0
      %581 = vmatpush1.bf16.msra.mxu0 %v560
      %582 = vmatprep.subr.bf16.mxu0 0
      %583 = vmatpush1.bf16.msra.mxu0 %v561
      %584 = vmatprep.subr.bf16.mxu0 0
      %585 = vmatpush1.bf16.msra.mxu0 0
      %586 = vmatprep.subr.bf16.mxu0 0
      %587 = vmatpush1.bf16.msra.mxu0 0
      %588 = vmatprep.subr.bf16.mxu0 0
      %589 = vmatpush1.bf16.msra.mxu0 0
      %590 = vmatprep.subr.bf16.mxu0 0
      %591 = vmatpush1.bf16.msra.mxu0 0
      %592 = vmatprep.subr.bf16.mxu0 0
      %593 = vmatpush1.bf16.msra.mxu0 0
      %594 = vmatprep.subr.bf16.mxu0 0
      %595 = vmatpush1.bf16.msra.mxu0 0
      %596 = vmatprep.subr.bf16.mxu0 0
      %597 = vmatpush1.bf16.msra.mxu0 0
      %598 = vmatprep.subr.bf16.mxu0 0
      %599 = vmatpush1.bf16.msra.mxu0 0
      %600 = vmatprep.mubr.bf16.mxu0 0
      %601 = vmatmul.mubr.bf16.gmra.mrb[0].mxu0 %v553
      %v602 = vpop.f32.mrb[0].mxu0
      %v603 = vadd.f32 %v566, %v602
      %v604 = vpop.f32.mrb[0].mxu0
      %v605 = vpop.f32.mrb[0].mxu0
      %v606 = vpop.f32.mrb[0].mxu0
      %607 = vdwg.mxu0
      %608 = vst [vmem:[%s222] sm:$0xf] %v603
      %p609 = scmp.lt.s32.totalorder %s16, 1
      %s610 = scalar_select %p609, %s16, 1
      %s611 = smul.addr %s610, 4
      %s612 = scalar_lea.vmem %s5, %s611
      // Predicated region
      $region41: #{diffeeg_forward.5} parent=39 // pred_check
        %p613 = pneg %p144
      $region42: #{diffeeg_forward.5} parent=39 // pred_check_branch
        %615 = sbr.rel (%p613) target = $region44
      $region43: #{diffeeg_forward.5} parent=39 // pred_region
        _
      $region44: #{diffeeg_forward.5} parent=39 // pred_fallthru
        _
    $region40: #{diffeeg_forward.5} parent=5 // pred_fallthru
      _
    %p616 = scmp.le.s32.totalorder 2, %s11
    // Predicated region
    $region45: #{diffeeg_forward.5} parent=5 // pred_check
      %p617 = pneg %p616
    $region46: #{diffeeg_forward.5} parent=5 // pred_check_branch
      %619 = sbr.rel (%p617) target = $region48
    $region47: #{diffeeg_forward.5} parent=5 // pred_region
      %s620 = ssub.s32 %s11, 2
      // Predicated region
      $region49: #{diffeeg_forward.5} parent=47 // pred_check
        %p621 = pneg %p150
      $region50: #{diffeeg_forward.5} parent=47 // pred_check_branch
        %623 = sbr.rel (%p621) target = $region52
      $region51: #{diffeeg_forward.5} parent=47 // pred_region
        %p624 = scmp.lt.s32.totalorder %s17, 1
        %s625 = scalar_select %p624, %s17, 1
        %s626 = smul.addr %s625, 4
        %s627 = scalar_lea.vmem %s5, %s626
      $region52: #{diffeeg_forward.5} parent=47 // pred_fallthru
        _
    $region48: #{diffeeg_forward.5} parent=5 // pred_fallthru
      _
  $region6: #{diffeeg_forward.5} parent=0 // loop_footer
    %s15 = sadd.s32 1, %s11
  $region7: #{diffeeg_forward.5} parent=0 // loop_footer_branch
    %10 = sbr.rel target = $region3
  $region8: #{diffeeg_forward.5} parent=0 // loop_exit
    _

// kernel: diffeeg_forward.4
$region0: #{diffeeg_forward.4}
  #allocation0 [shape = 'u32[]', space=smem, size = 0x4, offset = 0x4, fixed_abs, tag = 'smem constant byte address 0x4 - core index']
  #allocation1 [shape = 'u32[144,128]{1,0:T(1,128)}', space=vmem, size = 0x12000, scoped, tag = 'internal scratch']
  #allocation2 [shape = 'f32[16,24,128]{2,1,0:T(8,128)}', space=vmem, size = 0x30000, scoped, tag = 'scratch operand']
  #allocation3 [shape = 'bf16[16,16,384]{2,1,0:T(16,128)(2,1)}', space=vmem, size = 0x30000, scoped, tag = 'scratch operand']
  #allocation4 [shape = 's32[1]{0}', space=sflag, size = 0x4, scoped, tag = 'scoped memory for diffeeg_forward.4']
  #allocation5 [shape = 'u8[512]{0}', space=smem, size = 0x200, scoped, tag = 'prefetched SMEM operand 0']
  %s0 = inlined_call_operand.vmem [shape: s32[9], index: 0, kind: input, shape index: {}]
  %s1 = inlined_call_operand.vmem [shape: f32[2,128,128], index: 1, kind: input, shape index: {}]
  %s2 = inlined_call_operand.vmem [shape: bf16[2,128,256], index: 2, kind: input, shape index: {}]
  %s3 = inlined_call_operand.vmem [shape: f32[2,1,256], index: 3, kind: input, shape index: {}]
  %s4 = inlined_call_operand.vmem [shape: bf16[3,3,384,256], index: 4, kind: input, shape index: {}]
  %s5 = inlined_call_operand.vmem [shape: f32[3,1,256], index: 5, kind: input, shape index: {}]
  %s6 = inlined_call_operand.vmem [shape: bf16[3,256,256], index: 6, kind: input, shape index: {}]
  %s7 = inlined_call_operand.vmem [shape: f32[3,1,256], index: 7, kind: input, shape index: {}]
  %s8 = inlined_call_operand.vmem [shape: bf16[3,256,128], index: 8, kind: input, shape index: {}]
  %s9 = inlined_call_operand.vmem [shape: f32[3,1,128], index: 9, kind: input, shape index: {}]
  %s10 = inlined_call_operand.vmem [shape: f32[2,128,128], index: 10, kind: output, shape index: {}]
  %s11 = sld [smem:[#allocation0]]
  $region73: #{diffeeg_forward.4} parent=0
    _
  %s13 = ssub.s32 1, %s11
  %s14 = scalar_select 0, %s13, %s11
  %s15 = sshll.u32 %s0, 4
  %s16 = int_to_ptr.vmem [resolvable:$true] %s15
  %18 = dma.vmem_to_smem %s16, 16, [#allocation5], [#allocation4]
  %19 = dma.done [#allocation4], 16
  %20 = sfence
  loop: start=0, step=1, limit=8
  $region2: #{diffeeg_forward.4} parent=0 // loop_pre_header
    _
  $region3: #{diffeeg_forward.4} parent=0 // loop_header
    %s22 = sphi 0, %s26
    %p23 = scmp.ge.s32.totalorder %s22, 8
    %s29 = sphi 0, %s41
    %s30 = sphi 0, %s37
    %s31 = sphi 0, %s29
    %s32 = sphi 0, %s30
    %s33 = sphi 0, %s31
    %s34 = sphi 0, %s32
    %s44 = sphi 0, %s46
    %s47 = sphi 0, %s44
    %s48 = sphi 0, %s47
    %s64 = sphi 0, %s48
    %s70 = sphi 0, %s72
    %s73 = sphi 0, %s70
    %s74 = sphi 0, %s73
    %s90 = sphi 0, %s74
    %s96 = sphi 0, %s98
    %s99 = sphi 0, %s96
    %s100 = sphi 0, %s99
    %s116 = sphi 0, %s100
    %s122 = sphi 0, %s124
    %s125 = sphi 0, %s122
    %s126 = sphi 0, %s125
    %s142 = sphi 0, %s126
    %s148 = sphi 0, %s150
    %s151 = sphi 0, %s148
    %s152 = sphi 0, %s151
    %s168 = sphi 0, %s152
    %s174 = sphi 0, %s176
    %s177 = sphi 0, %s174
    %s178 = sphi 0, %s177
    %s194 = sphi 0, %s178
    %s200 = sphi 0, %s202
    %s203 = sphi 0, %s200
    %s204 = sphi 0, %s203
    %s220 = sphi 0, %s204
    %s226 = sphi 0, %s228
    %s229 = sphi 0, %s226
    %s230 = sphi 0, %s229
    %s246 = sphi 0, %s230
    %s252 = sphi 0, %s254
    %s255 = sphi 0, %s252
    %s256 = sphi 0, %s255
    %s272 = sphi 0, %s256
    %s278 = sphi 0, %s280
    %s281 = sphi 0, %s278
    %s282 = sphi 0, %s281
    %s298 = sphi 0, %s282
  $region4: #{diffeeg_forward.4} parent=0 // loop_header_branch
    %25 = sbr.rel (%p23) target = $region8
  $region5: #{diffeeg_forward.4} parent=0 // loop_body
    %s27 = ssub.s32 %s22, 1
    %s28 = ssub.s32 %s22, 2
    %s35 = sadd.s32 1, %s30
    %p36 = scmp.ge.s32.totalorder %s35, 3
    %s37 = scalar_select %p36, 0, %s35
    %s38 = sadd.s32 1, %s29
    %s39 = scalar_select %p36, %s38, %s29
    %p40 = scmp.ge.s32.totalorder %s39, 2
    %s41 = scalar_select %p40, 0, %s39
    %s42 = ssub.s32 %s29, %s41
    %p43 = scmp.eq.s32.totalorder %s42, 0
    %s45 = sadd.s32 %s44, 1
    %s46 = scalar_select %p43, %s44, %s45
    %p49 = pneg %p43
    %p50 = scmp.eq.s32.totalorder %s22, 5
    %p51 = por %p49, %p50
    %p52 = scmp.ne.s32.totalorder %s44, %s47
    %p53 = scmp.eq.s32.totalorder %s22, 0
    %p54 = por %p52, %p53
    %p55 = scmp.ne.s32.totalorder %s44, %s47
    %p56 = scmp.eq.s32.totalorder %s27, 5
    %p57 = por %p55, %p56
    %p58 = scmp.ne.s32.totalorder %s47, %s48
    %p59 = scmp.eq.s32.totalorder %s27, 0
    %p60 = por %p58, %p59
    %p61 = scmp.ne.s32.totalorder %s47, %s48
    %p62 = scmp.eq.s32.totalorder %s28, 5
    %p63 = por %p61, %p62
    %p65 = scmp.ne.s32.totalorder %s48, %s64
    %p66 = scmp.eq.s32.totalorder %s28, 0
    %p67 = por %p65, %p66
    %s68 = ssub.s32 %s29, %s41
    %p69 = scmp.eq.s32.totalorder %s68, 0
    %s71 = sadd.s32 %s70, 1
    %s72 = scalar_select %p69, %s70, %s71
    %p75 = pneg %p69
    %p76 = scmp.eq.s32.totalorder %s22, 5
    %p77 = por %p75, %p76
    %p78 = scmp.ne.s32.totalorder %s70, %s73
    %p79 = scmp.eq.s32.totalorder %s22, 0
    %p80 = por %p78, %p79
    %p81 = scmp.ne.s32.totalorder %s70, %s73
    %p82 = scmp.eq.s32.totalorder %s27, 5
    %p83 = por %p81, %p82
    %p84 = scmp.ne.s32.totalorder %s73, %s74
    %p85 = scmp.eq.s32.totalorder %s27, 0
    %p86 = por %p84, %p85
    %p87 = scmp.ne.s32.totalorder %s73, %s74
    %p88 = scmp.eq.s32.totalorder %s28, 5
    %p89 = por %p87, %p88
    %p91 = scmp.ne.s32.totalorder %s74, %s90
    %p92 = scmp.eq.s32.totalorder %s28, 0
    %p93 = por %p91, %p92
    %s94 = ssub.s32 %s29, %s41
    %p95 = scmp.eq.s32.totalorder %s94, 0
    %s97 = sadd.s32 %s96, 1
    %s98 = scalar_select %p95, %s96, %s97
    %p101 = pneg %p95
    %p102 = scmp.eq.s32.totalorder %s22, 5
    %p103 = por %p101, %p102
    %p104 = scmp.ne.s32.totalorder %s96, %s99
    %p105 = scmp.eq.s32.totalorder %s22, 0
    %p106 = por %p104, %p105
    %p107 = scmp.ne.s32.totalorder %s96, %s99
    %p108 = scmp.eq.s32.totalorder %s27, 5
    %p109 = por %p107, %p108
    %p110 = scmp.ne.s32.totalorder %s99, %s100
    %p111 = scmp.eq.s32.totalorder %s27, 0
    %p112 = por %p110, %p111
    %p113 = scmp.ne.s32.totalorder %s99, %s100
    %p114 = scmp.eq.s32.totalorder %s28, 5
    %p115 = por %p113, %p114
    %p117 = scmp.ne.s32.totalorder %s100, %s116
    %p118 = scmp.eq.s32.totalorder %s28, 0
    %p119 = por %p117, %p118
    %s120 = ssub.s32 %s30, %s37
    %p121 = scmp.eq.s32.totalorder %s120, 0
    %s123 = sadd.s32 %s122, 1
    %s124 = scalar_select %p121, %s122, %s123
    %p127 = pneg %p121
    %p128 = scmp.eq.s32.totalorder %s22, 5
    %p129 = por %p127, %p128
    %p130 = scmp.ne.s32.totalorder %s122, %s125
    %p131 = scmp.eq.s32.totalorder %s22, 0
    %p132 = por %p130, %p131
    %p133 = scmp.ne.s32.totalorder %s122, %s125
    %p134 = scmp.eq.s32.totalorder %s27, 5
    %p135 = por %p133, %p134
    %p136 = scmp.ne.s32.totalorder %s125, %s126
    %p137 = scmp.eq.s32.totalorder %s27, 0
    %p138 = por %p136, %p137
    %p139 = scmp.ne.s32.totalorder %s125, %s126
    %p140 = scmp.eq.s32.totalorder %s28, 5
    %p141 = por %p139, %p140
    %p143 = scmp.ne.s32.totalorder %s126, %s142
    %p144 = scmp.eq.s32.totalorder %s28, 0
    %p145 = por %p143, %p144
    %s146 = ssub.s32 %s30, %s37
    %p147 = scmp.eq.s32.totalorder %s146, 0
    %s149 = sadd.s32 %s148, 1
    %s150 = scalar_select %p147, %s148, %s149
    %p153 = pneg %p147
    %p154 = scmp.eq.s32.totalorder %s22, 5
    %p155 = por %p153, %p154
    %p156 = scmp.ne.s32.totalorder %s148, %s151
    %p157 = scmp.eq.s32.totalorder %s22, 0
    %p158 = por %p156, %p157
    %p159 = scmp.ne.s32.totalorder %s148, %s151
    %p160 = scmp.eq.s32.totalorder %s27, 5
    %p161 = por %p159, %p160
    %p162 = scmp.ne.s32.totalorder %s151, %s152
    %p163 = scmp.eq.s32.totalorder %s27, 0
    %p164 = por %p162, %p163
    %p165 = scmp.ne.s32.totalorder %s151, %s152
    %p166 = scmp.eq.s32.totalorder %s28, 5
    %p167 = por %p165, %p166
    %p169 = scmp.ne.s32.totalorder %s152, %s168
    %p170 = scmp.eq.s32.totalorder %s28, 0
    %p171 = por %p169, %p170
    %s172 = ssub.s32 %s30, %s37
    %p173 = scmp.eq.s32.totalorder %s172, 0
    %s175 = sadd.s32 %s174, 1
    %s176 = scalar_select %p173, %s174, %s175
    %p179 = pneg %p173
    %p180 = scmp.eq.s32.totalorder %s22, 5
    %p181 = por %p179, %p180
    %p182 = scmp.ne.s32.totalorder %s174, %s177
    %p183 = scmp.eq.s32.totalorder %s22, 0
    %p184 = por %p182, %p183
    %p185 = scmp.ne.s32.totalorder %s174, %s177
    %p186 = scmp.eq.s32.totalorder %s27, 5
    %p187 = por %p185, %p186
    %p188 = scmp.ne.s32.totalorder %s177, %s178
    %p189 = scmp.eq.s32.totalorder %s27, 0
    %p190 = por %p188, %p189
    %p191 = scmp.ne.s32.totalorder %s177, %s178
    %p192 = scmp.eq.s32.totalorder %s28, 5
    %p193 = por %p191, %p192
    %p195 = scmp.ne.s32.totalorder %s178, %s194
    %p196 = scmp.eq.s32.totalorder %s28, 0
    %p197 = por %p195, %p196
    %s198 = ssub.s32 %s30, %s37
    %p199 = scmp.eq.s32.totalorder %s198, 0
    %s201 = sadd.s32 %s200, 1
    %s202 = scalar_select %p199, %s200, %s201
    %p205 = pneg %p199
    %p206 = scmp.eq.s32.totalorder %s22, 5
    %p207 = por %p205, %p206
    %p208 = scmp.ne.s32.totalorder %s200, %s203
    %p209 = scmp.eq.s32.totalorder %s22, 0
    %p210 = por %p208, %p209
    %p211 = scmp.ne.s32.totalorder %s200, %s203
    %p212 = scmp.eq.s32.totalorder %s27, 5
    %p213 = por %p211, %p212
    %p214 = scmp.ne.s32.totalorder %s203, %s204
    %p215 = scmp.eq.s32.totalorder %s27, 0
    %p216 = por %p214, %p215
    %p217 = scmp.ne.s32.totalorder %s203, %s204
    %p218 = scmp.eq.s32.totalorder %s28, 5
    %p219 = por %p217, %p218
    %p221 = scmp.ne.s32.totalorder %s204, %s220
    %p222 = scmp.eq.s32.totalorder %s28, 0
    %p223 = por %p221, %p222
    %s224 = ssub.s32 %s30, %s37
    %p225 = scmp.eq.s32.totalorder %s224, 0
    %s227 = sadd.s32 %s226, 1
    %s228 = scalar_select %p225, %s226, %s227
    %p231 = pneg %p225
    %p232 = scmp.eq.s32.totalorder %s22, 5
    %p233 = por %p231, %p232
    %p234 = scmp.ne.s32.totalorder %s226, %s229
    %p235 = scmp.eq.s32.totalorder %s22, 0
    %p236 = por %p234, %p235
    %p237 = scmp.ne.s32.totalorder %s226, %s229
    %p238 = scmp.eq.s32.totalorder %s27, 5
    %p239 = por %p237, %p238
    %p240 = scmp.ne.s32.totalorder %s229, %s230
    %p241 = scmp.eq.s32.totalorder %s27, 0
    %p242 = por %p240, %p241
    %p243 = scmp.ne.s32.totalorder %s229, %s230
    %p244 = scmp.eq.s32.totalorder %s28, 5
    %p245 = por %p243, %p244
    %p247 = scmp.ne.s32.totalorder %s230, %s246
    %p248 = scmp.eq.s32.totalorder %s28, 0
    %p249 = por %p247, %p248
    %s250 = ssub.s32 %s30, %s37
    %p251 = scmp.eq.s32.totalorder %s250, 0
    %s253 = sadd.s32 %s252, 1
    %s254 = scalar_select %p251, %s252, %s253
    %p257 = pneg %p251
    %p258 = scmp.eq.s32.totalorder %s22, 5
    %p259 = por %p257, %p258
    %p260 = scmp.ne.s32.totalorder %s252, %s255
    %p261 = scmp.eq.s32.totalorder %s22, 0
    %p262 = por %p260, %p261
    %p263 = scmp.ne.s32.totalorder %s252, %s255
    %p264 = scmp.eq.s32.totalorder %s27, 5
    %p265 = por %p263, %p264
    %p266 = scmp.ne.s32.totalorder %s255, %s256
    %p267 = scmp.eq.s32.totalorder %s27, 0
    %p268 = por %p266, %p267
    %p269 = scmp.ne.s32.totalorder %s255, %s256
    %p270 = scmp.eq.s32.totalorder %s28, 5
    %p271 = por %p269, %p270
    %p273 = scmp.ne.s32.totalorder %s256, %s272
    %p274 = scmp.eq.s32.totalorder %s28, 0
    %p275 = por %p273, %p274
    %s276 = ssub.s32 %s29, %s41
    %p277 = scmp.eq.s32.totalorder %s276, 0
    %s279 = sadd.s32 %s278, 1
    %s280 = scalar_select %p277, %s278, %s279
    %p283 = pneg %p277
    %p284 = scmp.eq.s32.totalorder %s22, 5
    %p285 = por %p283, %p284
    %p286 = scmp.ne.s32.totalorder %s278, %s281
    %p287 = scmp.eq.s32.totalorder %s22, 0
    %p288 = por %p286, %p287
    %p289 = scmp.ne.s32.totalorder %s278, %s281
    %p290 = scmp.eq.s32.totalorder %s27, 5
    %p291 = por %p289, %p290
    %p292 = scmp.ne.s32.totalorder %s281, %s282
    %p293 = scmp.eq.s32.totalorder %s27, 0
    %p294 = por %p292, %p293
    %p295 = scmp.ne.s32.totalorder %s281, %s282
    %p296 = scmp.eq.s32.totalorder %s28, 5
    %p297 = por %p295, %p296
    %p299 = scmp.ne.s32.totalorder %s282, %s298
    %p300 = scmp.eq.s32.totalorder %s28, 0
    %p301 = por %p299, %p300
    %p302 = scmp.le.s32.totalorder 1, %s22
    %p303 = scmp.lt.s32.totalorder %s22, 7
    %p304 = pnand %p302, %p303
    %p305 = pneg %p304
    // Predicated region
    $region9: #{diffeeg_forward.4} parent=5 // pred_check
      _
    $region10: #{diffeeg_forward.4} parent=5 // pred_check_branch
      %307 = sbr.rel (%p304) target = $region12
    $region11: #{diffeeg_forward.4} parent=5 // pred_region
      %s308 = ssub.s32 %s22, 1
    $region12: #{diffeeg_forward.4} parent=5 // pred_fallthru
      _
    %p309 = scmp.lt.s32.totalorder %s22, 6
    // Predicated region
    $region13: #{diffeeg_forward.4} parent=5 // pred_check
      %p310 = pneg %p309
    $region14: #{diffeeg_forward.4} parent=5 // pred_check_branch
      %312 = sbr.rel (%p310) target = $region16
    $region15: #{diffeeg_forward.4} parent=5 // pred_region
      // Predicated region
      $region17: #{diffeeg_forward.4} parent=15 // pred_check
        %p313 = pneg %p54
      $region18: #{diffeeg_forward.4} parent=15 // pred_check_branch
        %315 = sbr.rel (%p313) target = $region20
      $region19: #{diffeeg_forward.4} parent=15 // pred_region
        %p316 = scmp.lt.s32.totalorder %s29, 1
        %s317 = scalar_select %p316, %s29, 1
        %s318 = smul.addr %s317, 16
        %s319 = smul.addr %s318, 8
        %s320 = scalar_lea.vmem %s1, %s319
      $region20: #{diffeeg_forward.4} parent=15 // pred_fallthru
        _
      // Predicated region
      $region21: #{diffeeg_forward.4} parent=15 // pred_check
        %p321 = pneg %p80
      $region22: #{diffeeg_forward.4} parent=15 // pred_check_branch
        %323 = sbr.rel (%p321) target = $region24
      $region23: #{diffeeg_forward.4} parent=15 // pred_region
        %p324 = scmp.lt.s32.totalorder %s29, 1
        %s325 = scalar_select %p324, %s29, 1
        %s326 = smul.addr %s325, 32
        %s327 = smul.addr %s326, 4
        %s328 = scalar_lea.vmem %s2, %s327
      $region24: #{diffeeg_forward.4} parent=15 // pred_fallthru
        _
      // Predicated region
      $region25: #{diffeeg_forward.4} parent=15 // pred_check
        %p329 = pneg %p106
      $region26: #{diffeeg_forward.4} parent=15 // pred_check_branch
        %331 = sbr.rel (%p329) target = $region28
      $region27: #{diffeeg_forward.4} parent=15 // pred_region
        %p332 = scmp.lt.s32.totalorder %s29, 1
        %s333 = scalar_select %p332, %s29, 1
        %s334 = smul.addr %s333, 2
        %s335 = scalar_lea.vmem %s3, %s334
      $region28: #{diffeeg_forward.4} parent=15 // pred_fallthru
        _
      // Predicated region
      $region29: #{diffeeg_forward.4} parent=15 // pred_check
        %p336 = pneg %p132
      $region30: #{diffeeg_forward.4} parent=15 // pred_check_branch
        %338 = sbr.rel (%p336) target = $region32
      $region31: #{diffeeg_forward.4} parent=15 // pred_region
        %p339 = scmp.lt.s32.totalorder %s30, 2
        %s340 = scalar_select %p339, %s30, 2
        %s341 = smul.addr %s340, 288
        %s342 = smul.addr %s341, 4
        %s343 = scalar_lea.vmem %s4, %s342
      $region32: #{diffeeg_forward.4} parent=15 // pred_fallthru
        _
      // Predicated region
      $region33: #{diffeeg_forward.4} parent=15 // pred_check
        %p344 = pneg %p158
      $region34: #{diffeeg_forward.4} parent=15 // pred_check_branch
        %346 = sbr.rel (%p344) target = $region36
      $region35: #{diffeeg_forward.4} parent=15 // pred_region
        %p347 = scmp.lt.s32.totalorder %s30, 2
        %s348 = scalar_select %p347, %s30, 2
        %s349 = smul.addr %s348, 2
        %s350 = scalar_lea.vmem %s5, %s349
      $region36: #{diffeeg_forward.4} parent=15 // pred_fallthru
        _
      // Predicated region
      $region37: #{diffeeg_forward.4} parent=15 // pred_check
        %p351 = pneg %p184
      $region38: #{diffeeg_forward.4} parent=15 // pred_check_branch
        %353 = sbr.rel (%p351) target = $region40
      $region39: #{diffeeg_forward.4} parent=15 // pred_region
        %p354 = scmp.lt.s32.totalorder %s30, 2
        %s355 = scalar_select %p354, %s30, 2
        %s356 = smul.addr %s355, 64
        %s357 = smul.addr %s356, 4
        %s358 = scalar_lea.vmem %s6, %s357
      $region40: #{diffeeg_forward.4} parent=15 // pred_fallthru
        _
      // Predicated region
      $region41: #{diffeeg_forward.4} parent=15 // pred_check
        %p359 = pneg %p210
      $region42: #{diffeeg_forward.4} parent=15 // pred_check_branch
        %361 = sbr.rel (%p359) target = $region44
      $region43: #{diffeeg_forward.4} parent=15 // pred_region
        %p362 = scmp.lt.s32.totalorder %s30, 2
        %s363 = scalar_select %p362, %s30, 2
        %s364 = smul.addr %s363, 2
        %s365 = scalar_lea.vmem %s7, %s364
      $region44: #{diffeeg_forward.4} parent=15 // pred_fallthru
        _
      // Predicated region
      $region45: #{diffeeg_forward.4} parent=15 // pred_check
        %p366 = pneg %p236
      $region46: #{diffeeg_forward.4} parent=15 // pred_check_branch
        %368 = sbr.rel (%p366) target = $region48
      $region47: #{diffeeg_forward.4} parent=15 // pred_region
        %p369 = scmp.lt.s32.totalorder %s30, 2
        %s370 = scalar_select %p369, %s30, 2
        %s371 = smul.addr %s370, 32
        %s372 = smul.addr %s371, 4
        %s373 = scalar_lea.vmem %s8, %s372
      $region48: #{diffeeg_forward.4} parent=15 // pred_fallthru
        _
      // Predicated region
      $region49: #{diffeeg_forward.4} parent=15 // pred_check
        %p374 = pneg %p262
      $region50: #{diffeeg_forward.4} parent=15 // pred_check_branch
        %376 = sbr.rel (%p374) target = $region52
      $region51: #{diffeeg_forward.4} parent=15 // pred_region
        %p377 = scmp.lt.s32.totalorder %s30, 2
        %s378 = scalar_select %p377, %s30, 2
        %s379 = scalar_lea.vmem %s9, %s378
      $region52: #{diffeeg_forward.4} parent=15 // pred_fallthru
        _
    $region16: #{diffeeg_forward.4} parent=5 // pred_fallthru
      _
    %p380 = scmp.le.s32.totalorder 1, %s22
    %p381 = scmp.lt.s32.totalorder %s22, 7
    %p382 = pnand %p380, %p381
    %p383 = pneg %p382
    // Predicated region
    $region53: #{diffeeg_forward.4} parent=5 // pred_check
      _
    $region54: #{diffeeg_forward.4} parent=5 // pred_check_branch
      %385 = sbr.rel (%p382) target = $region56
    $region55: #{diffeeg_forward.4} parent=5 // pred_region
      %s386 = ssub.s32 %s22, 1
      %p387 = scmp.lt.s32.totalorder %s31, 1
      %s388 = scalar_select %p387, %s31, 1
      %s389 = smul.addr %s388, 16
      %s390 = smul.addr %s389, 8
      %s391 = scalar_lea.vmem %s1, %s390
      %p392 = pneg %p60
      %p393 = pneg %p57
      %p394 = scmp.lt.s32.totalorder %s31, 1
      %s395 = scalar_select %p394, %s31, 1
      %s396 = smul.addr %s395, 32
      %s397 = smul.addr %s396, 4
      %s398 = scalar_lea.vmem %s2, %s397
      %p399 = pneg %p86
      %p400 = pneg %p83
      %p401 = scmp.lt.s32.totalorder %s31, 1
      %s402 = scalar_select %p401, %s31, 1
      %s403 = smul.addr %s402, 2
      %s404 = scalar_lea.vmem %s3, %s403
      %p405 = pneg %p112
      %p406 = pneg %p109
      %p407 = scmp.lt.s32.totalorder %s32, 2
      %s408 = scalar_select %p407, %s32, 2
      %s409 = smul.addr %s408, 288
      %s410 = smul.addr %s409, 4
      %s411 = scalar_lea.vmem %s4, %s410
      %p412 = pneg %p138
      %p413 = pneg %p135
      %p414 = scmp.lt.s32.totalorder %s32, 2
      %s415 = scalar_select %p414, %s32, 2
      %s416 = smul.addr %s415, 2
      %s417 = scalar_lea.vmem %s5, %s416
      %p418 = pneg %p164
      %p419 = pneg %p161
      %p420 = scmp.lt.s32.totalorder %s32, 2
      %s421 = scalar_select %p420, %s32, 2
      %s422 = smul.addr %s421, 64
      %s423 = smul.addr %s422, 4
      %s424 = scalar_lea.vmem %s6, %s423
      %p425 = pneg %p190
      %p426 = pneg %p187
      %p427 = scmp.lt.s32.totalorder %s32, 2
      %s428 = scalar_select %p427, %s32, 2
      %s429 = smul.addr %s428, 2
      %s430 = scalar_lea.vmem %s7, %s429
      %p431 = pneg %p216
      %p432 = pneg %p213
      %p433 = scmp.lt.s32.totalorder %s32, 2
      %s434 = scalar_select %p433, %s32, 2
      %s435 = smul.addr %s434, 32
      %s436 = smul.addr %s435, 4
      %s437 = scalar_lea.vmem %s8, %s436
      %p438 = pneg %p242
      %p439 = pneg %p239
      %p440 = scmp.lt.s32.totalorder %s32, 2
      %s441 = scalar_select %p440, %s32, 2
      %s442 = scalar_lea.vmem %s9, %s441
      %p443 = pneg %p268
      %p444 = pneg %p265
      %p445 = pneg %p294
      %p446 = pneg %p291
      %p447 = scmp.lt.s32.totalorder %s31, 1
      %s448 = scalar_select %p447, %s31, 1
      %s449 = smul.addr %s448, 16
      %s450 = smul.addr %s449, 8
      %s451 = scalar_lea.vmem %s10, %s450
      %p452 = scmp.lt.s32.totalorder %s31, 1
      %s453 = scalar_select %p452, %s31, 1
      %s454 = smul.addr %s453, 16
      %s455 = smul.addr %s454, 8
      %s456 = scalar_lea.vmem %s1, %s455
      %p457 = scmp.lt.s32.totalorder %s31, 1
      %s458 = scalar_select %p457, %s31, 1
      %s459 = smul.addr %s458, 32
      %s460 = smul.addr %s459, 4
      %s461 = scalar_lea.vmem %s2, %s460
      %p462 = scmp.lt.s32.totalorder %s31, 1
      %s463 = scalar_select %p462, %s31, 1
      %s464 = smul.addr %s463, 2
      %s465 = scalar_lea.vmem %s3, %s464
      %p466 = scmp.lt.s32.totalorder %s32, 2
      %s467 = scalar_select %p466, %s32, 2
      %s468 = smul.addr %s467, 288
      %s469 = smul.addr %s468, 4
      %s470 = scalar_lea.vmem %s4, %s469
      %p471 = scmp.lt.s32.totalorder %s32, 2
      %s472 = scalar_select %p471, %s32, 2
      %s473 = smul.addr %s472, 2
      %s474 = scalar_lea.vmem %s5, %s473
      %p475 = scmp.lt.s32.totalorder %s32, 2
      %s476 = scalar_select %p475, %s32, 2
      %s477 = smul.addr %s476, 64
      %s478 = smul.addr %s477, 4
      %s479 = scalar_lea.vmem %s6, %s478
      %p480 = scmp.lt.s32.totalorder %s32, 2
      %s481 = scalar_select %p480, %s32, 2
      %s482 = smul.addr %s481, 2
      %s483 = scalar_lea.vmem %s7, %s482
      %p484 = scmp.lt.s32.totalorder %s32, 2
      %s485 = scalar_select %p484, %s32, 2
      %s486 = smul.addr %s485, 32
      %s487 = smul.addr %s486, 4
      %s488 = scalar_lea.vmem %s8, %s487
      %p489 = scmp.lt.s32.totalorder %s32, 2
      %s490 = scalar_select %p489, %s32, 2
      %s491 = scalar_lea.vmem %s9, %s490
      %p492 = scmp.lt.s32.totalorder %s31, 1
      %s493 = scalar_select %p492, %s31, 1
      %s494 = smul.addr %s493, 16
      %s495 = smul.addr %s494, 8
      %s496 = scalar_lea.vmem %s10, %s495
      %p498 = scmp.eq.s32.totalorder %s32, 0
      // Predicated region
      $region57: #{diffeeg_forward.4} parent=55 // pred_check
        %p499 = pneg %p498
      $region58: #{diffeeg_forward.4} parent=55 // pred_check_branch
        %501 = sbr.rel (%p499) target = $region60
      $region59: #{diffeeg_forward.4} parent=55 // pred_region
        %502 = vst [vmem:[#allocation2] sm:$0xff] 0.0
        %503 = vst [vmem:[#allocation2 + $0x8] sm:$0xff] 0.0
        %504 = vst [vmem:[#allocation2 + $0x10] sm:$0xff] 0.0
        %505 = vst [vmem:[#allocation2 + $0x18] sm:$0xff] 0.0
        %506 = vst [vmem:[#allocation2 + $0x20] sm:$0xff] 0.0
        %507 = vst [vmem:[#allocation2 + $0x28] sm:$0xff] 0.0
        %508 = vst [vmem:[#allocation2 + $0x30] sm:$0xff] 0.0
        %509 = vst [vmem:[#allocation2 + $0x38] sm:$0xff] 0.0
        %510 = vst [vmem:[#allocation2 + $0x40] sm:$0xff] 0.0
        %511 = vst [vmem:[#allocation2 + $0x48] sm:$0xff] 0.0
        %512 = vst [vmem:[#allocation2 + $0x50] sm:$0xff] 0.0
        %513 = vst [vmem:[#allocation2 + $0x58] sm:$0xff] 0.0
        %514 = vst [vmem:[#allocation2 + $0x60] sm:$0xff] 0.0
        %515 = vst [vmem:[#allocation2 + $0x68] sm:$0xff] 0.0
        %516 = vst [vmem:[#allocation2 + $0x70] sm:$0xff] 0.0
        %517 = vst [vmem:[#allocation2 + $0x78] sm:$0xff] 0.0
        %518 = vst [vmem:[#allocation2 + $0x80] sm:$0xff] 0.0
        %519 = vst [vmem:[#allocation2 + $0x88] sm:$0xff] 0.0
        %520 = vst [vmem:[#allocation2 + $0x90] sm:$0xff] 0.0
        %521 = vst [vmem:[#allocation2 + $0x98] sm:$0xff] 0.0
        %522 = vst [vmem:[#allocation2 + $0xa0] sm:$0xff] 0.0
        %523 = vst [vmem:[#allocation2 + $0xa8] sm:$0xff] 0.0
        %524 = vst [vmem:[#allocation2 + $0xb0] sm:$0xff] 0.0
        %525 = vst [vmem:[#allocation2 + $0xb8] sm:$0xff] 0.0
        %526 = vst [vmem:[#allocation2 + $0xc0] sm:$0xff] 0.0
        %527 = vst [vmem:[#allocation2 + $0xc8] sm:$0xff] 0.0
        %528 = vst [vmem:[#allocation2 + $0xd0] sm:$0xff] 0.0
        %529 = vst [vmem:[#allocation2 + $0xd8] sm:$0xff] 0.0
        %530 = vst [vmem:[#allocation2 + $0xe0] sm:$0xff] 0.0
        %531 = vst [vmem:[#allocation2 + $0xe8] sm:$0xff] 0.0
        %532 = vst [vmem:[#allocation2 + $0xf0] sm:$0xff] 0.0
        %533 = vst [vmem:[#allocation2 + $0xf8] sm:$0xff] 0.0
        %534 = vst [vmem:[#allocation2 + $0x100] sm:$0xff] 0.0
        %535 = vst [vmem:[#allocation2 + $0x108] sm:$0xff] 0.0
        %536 = vst [vmem:[#allocation2 + $0x110] sm:$0xff] 0.0
        %537 = vst [vmem:[#allocation2 + $0x118] sm:$0xff] 0.0
        %538 = vst [vmem:[#allocation2 + $0x120] sm:$0xff] 0.0
        %539 = vst [vmem:[#allocation2 + $0x128] sm:$0xff] 0.0
        %540 = vst [vmem:[#allocation2 + $0x130] sm:$0xff] 0.0
        %541 = vst [vmem:[#allocation2 + $0x138] sm:$0xff] 0.0
        %542 = vst [vmem:[#allocation2 + $0x140] sm:$0xff] 0.0
        %543 = vst [vmem:[#allocation2 + $0x148] sm:$0xff] 0.0
        %544 = vst [vmem:[#allocation2 + $0x150] sm:$0xff] 0.0
        %545 = vst [vmem:[#allocation2 + $0x158] sm:$0xff] 0.0
        %546 = vst [vmem:[#allocation2 + $0x160] sm:$0xff] 0.0
        %547 = vst [vmem:[#allocation2 + $0x168] sm:$0xff] 0.0
        %548 = vst [vmem:[#allocation2 + $0x170] sm:$0xff] 0.0
        %549 = vst [vmem:[#allocation2 + $0x178] sm:$0xff] 0.0
        %v550 = vld [vmem:[%s456] sm:$0xff]
        %v551 = vld [vmem:[%s456 + $0x8] sm:$0xff]
        %v552 = vld [vmem:[%s456 + $0x10] sm:$0xff]
        %v553 = vld [vmem:[%s456 + $0x18] sm:$0xff]
        %v554 = vld [vmem:[%s456 + $0x20] sm:$0xff]
        %v555 = vld [vmem:[%s456 + $0x28] sm:$0xff]
        %v556 = vld [vmem:[%s456 + $0x30] sm:$0xff]
        %v557 = vld [vmem:[%s456 + $0x38] sm:$0xff]
        %v558 = vld [vmem:[%s456 + $0x40] sm:$0xff]
        %v559 = vld [vmem:[%s456 + $0x48] sm:$0xff]
        %v560 = vld [vmem:[%s456 + $0x50] sm:$0xff]
        %v561 = vld [vmem:[%s456 + $0x58] sm:$0xff]
        %v562 = vld [vmem:[%s456 + $0x60] sm:$0xff]
        %v563 = vld [vmem:[%s456 + $0x68] sm:$0xff]
        %v564 = vld [vmem:[%s456 + $0x70] sm:$0xff]
        %v565 = vld [vmem:[%s456 + $0x78] sm:$0xff]
        %s566 = scalar_lea.vmem [#allocation2], 96
        %567 = vst [vmem:[%s566 + $0x4] sm:$0xff] %v550
        %568 = vst [vmem:[%s566 + $0xc] sm:$0xff] %v551
        %569 = vst [vmem:[%s566 + $0x1c] sm:$0xff] %v552
        %570 = vst [vmem:[%s566 + $0x24] sm:$0xff] %v553
        %571 = vst [vmem:[%s566 + $0x34] sm:$0xff] %v554
        %572 = vst [vmem:[%s566 + $0x3c] sm:$0xff] %v555
        %573 = vst [vmem:[%s566 + $0x4c] sm:$0xff] %v556
        %574 = vst [vmem:[%s566 + $0x54] sm:$0xff] %v557
        %575 = vst [vmem:[%s566 + $0x64] sm:$0xff] %v558
        %576 = vst [vmem:[%s566 + $0x6c] sm:$0xff] %v559
        %577 = vst [vmem:[%s566 + $0x7c] sm:$0xff] %v560
        %578 = vst [vmem:[%s566 + $0x84] sm:$0xff] %v561
        %579 = vst [vmem:[%s566 + $0x94] sm:$0xff] %v562
        %580 = vst [vmem:[%s566 + $0x9c] sm:$0xff] %v563
        %581 = vst [vmem:[%s566 + $0xac] sm:$0xff] %v564
        %582 = vst [vmem:[%s566 + $0xb4] sm:$0xff] %v565
        %583 = vst [vmem:[%s496] sm:$0xff] 0.0
        %584 = vst [vmem:[%s496 + $0x8] sm:$0xff] 0.0
        %585 = vst [vmem:[%s496 + $0x10] sm:$0xff] 0.0
        %586 = vst [vmem:[%s496 + $0x18] sm:$0xff] 0.0
        %587 = vst [vmem:[%s496 + $0x20] sm:$0xff] 0.0
        %588 = vst [vmem:[%s496 + $0x28] sm:$0xff] 0.0
        %589 = vst [vmem:[%s496 + $0x30] sm:$0xff] 0.0
        %590 = vst [vmem:[%s496 + $0x38] sm:$0xff] 0.0
        %591 = vst [vmem:[%s496 + $0x40] sm:$0xff] 0.0
        %592 = vst [vmem:[%s496 + $0x48] sm:$0xff] 0.0
        %593 = vst [vmem:[%s496 + $0x50] sm:$0xff] 0.0
        %594 = vst [vmem:[%s496 + $0x58] sm:$0xff] 0.0
        %595 = vst [vmem:[%s496 + $0x60] sm:$0xff] 0.0
        %596 = vst [vmem:[%s496 + $0x68] sm:$0xff] 0.0
        %597 = vst [vmem:[%s496 + $0x70] sm:$0xff] 0.0
        %598 = vst [vmem:[%s496 + $0x78] sm:$0xff] 0.0
      $region60: #{diffeeg_forward.4} parent=55 // pred_fallthru
        _
      %s599 = smul.u32 %s32, 3
      %s600 = sld [smem:[#allocation5 + %s599]]
      %s601 = scalar_lea.vmem [#allocation2], %s600
      %v602 = vld [vmem:[%s601] sm:$0xff]
      %v603 = vld [vmem:[%s601 + $0x8] sm:$0xff]
      %v604 = vld [vmem:[%s601 + $0x18] sm:$0xff]
      %v605 = vld [vmem:[%s601 + $0x20] sm:$0xff]
      %v606 = vld [vmem:[%s601 + $0x30] sm:$0xff]
      %v607 = vld [vmem:[%s601 + $0x38] sm:$0xff]
      %v608 = vld [vmem:[%s601 + $0x48] sm:$0xff]
      %v609 = vld [vmem:[%s601 + $0x50] sm:$0xff]
      %v610 = vld [vmem:[%s601 + $0x60] sm:$0xff]
      %v611 = vld [vmem:[%s601 + $0x68] sm:$0xff]
      %v612 = vld [vmem:[%s601 + $0x78] sm:$0xff]
      %v613 = vld [vmem:[%s601 + $0x80] sm:$0xff]
      %v614 = vld [vmem:[%s601 + $0x90] sm:$0xff]
      %v615 = vld [vmem:[%s601 + $0x98] sm:$0xff]
      %v616 = vld [vmem:[%s601 + $0xa8] sm:$0xff]
      %v617 = vld [vmem:[%s601 + $0xb0] sm:$0xff]
      %v618 = vld [vmem:[%s601 + $0xc0] sm:$0xff]
      %v619 = vld [vmem:[%s601 + $0xc8] sm:$0xff]
      %v620 = vld [vmem:[%s601 + $0xd8] sm:$0xff]
      %v621 = vld [vmem:[%s601 + $0xe0] sm:$0xff]
      %v622 = vld [vmem:[%s601 + $0xf0] sm:$0xff]
      %v623 = vld [vmem:[%s601 + $0xf8] sm:$0xff]
      %v624 = vld [vmem:[%s601 + $0x108] sm:$0xff]
      %v625 = vld [vmem:[%s601 + $0x110] sm:$0xff]
      %v626 = vld [vmem:[%s601 + $0x120] sm:$0xff]
      %v627 = vld [vmem:[%s601 + $0x128] sm:$0xff]
      %v628 = vld [vmem:[%s601 + $0x138] sm:$0xff]
      %v629 = vld [vmem:[%s601 + $0x140] sm:$0xff]
      %v630 = vld [vmem:[%s601 + $0x150] sm:$0xff]
      %v631 = vld [vmem:[%s601 + $0x158] sm:$0xff]
      %v632 = vld [vmem:[%s601 + $0x168] sm:$0xff]
      %v633 = vld [vmem:[%s601 + $0x170] sm:$0xff]
      %v634 = vpack.c.bf16 %v603, %v602
      %v635 = vpack.c.bf16 %v605, %v604
      %v636 = vpack.c.bf16 %v607, %v606
      %v637 = vpack.c.bf16 %v609, %v608
      %v638 = vpack.c.bf16 %v611, %v610
      %v639 = vpack.c.bf16 %v613, %v612
      %v640 = vpack.c.bf16 %v615, %v614
      %v641 = vpack.c.bf16 %v617, %v616
      %v642 = vpack.c.bf16 %v619, %v618
      %v643 = vpack.c.bf16 %v621, %v620
      %v644 = vpack.c.bf16 %v623, %v622
      %v645 = vpack.c.bf16 %v625, %v624
      %v646 = vpack.c.bf16 %v627, %v626
      %v647 = vpack.c.bf16 %v629, %v628
      %v648 = vpack.c.bf16 %v631, %v630
      %v649 = vpack.c.bf16 %v633, %v632
      %650 = vst [vmem:[#allocation3] sm:$0xff] %v634
      %651 = vst [vmem:[#allocation3 + $0x18] sm:$0xff] %v635
      %652 = vst [vmem:[#allocation3 + $0x30] sm:$0xff] %v636
      %653 = vst [vmem:[#allocation3 + $0x48] sm:$0xff] %v637
      %654 = vst [vmem:[#allocation3 + $0x60] sm:$0xff] %v638
      %655 = vst [vmem:[#allocation3 + $0x78] sm:$0xff] %v639
      %656 = vst [vmem:[#allocation3 + $0x90] sm:$0xff] %v640
      %657 = vst [vmem:[#allocation3 + $0xa8] sm:$0xff] %v641
      %658 = vst [vmem:[#allocation3 + $0xc0] sm:$0xff] %v642
      %659 = vst [vmem:[#allocation3 + $0xd8] sm:$0xff] %v643
      %660 = vst [vmem:[#allocation3 + $0xf0] sm:$0xff] %v644
      %661 = vst [vmem:[#allocation3 + $0x108] sm:$0xff] %v645
      %662 = vst [vmem:[#allocation3 + $0x120] sm:$0xff] %v646
      %663 = vst [vmem:[#allocation3 + $0x138] sm:$0xff] %v647
      %664 = vst [vmem:[#allocation3 + $0x150] sm:$0xff] %v648
      %665 = vst [vmem:[#allocation3 + $0x168] sm:$0xff] %v649
      %s666 = sadd.s32 %s599, 1
      %s667 = sld [smem:[#allocation5 + %s666]]
      %s668 = scalar_lea.vmem [#allocation2], %s667
      %v669 = vld [vmem:[%s668] sm:$0xff]
      %v670 = vld [vmem:[%s668 + $0x8] sm:$0xff]
      %v671 = vld [vmem:[%s668 + $0x18] sm:$0xff]
      %v672 = vld [vmem:[%s668 + $0x20] sm:$0xff]
      %v673 = vld [vmem:[%s668 + $0x30] sm:$0xff]
      %v674 = vld [vmem:[%s668 + $0x38] sm:$0xff]
      %v675 = vld [vmem:[%s668 + $0x48] sm:$0xff]
      %v676 = vld [vmem:[%s668 + $0x50] sm:$0xff]
      %v677 = vld [vmem:[%s668 + $0x60] sm:$0xff]
      %v678 = vld [vmem:[%s668 + $0x68] sm:$0xff]
      %v679 = vld [vmem:[%s668 + $0x78] sm:$0xff]
      %v680 = vld [vmem:[%s668 + $0x80] sm:$0xff]
      %v681 = vld [vmem:[%s668 + $0x90] sm:$0xff]
      %v682 = vld [vmem:[%s668 + $0x98] sm:$0xff]
      %v683 = vld [vmem:[%s668 + $0xa8] sm:$0xff]
      %v684 = vld [vmem:[%s668 + $0xb0] sm:$0xff]
      %v685 = vld [vmem:[%s668 + $0xc0] sm:$0xff]
      %v686 = vld [vmem:[%s668 + $0xc8] sm:$0xff]
      %v687 = vld [vmem:[%s668 + $0xd8] sm:$0xff]
      %v688 = vld [vmem:[%s668 + $0xe0] sm:$0xff]
      %v689 = vld [vmem:[%s668 + $0xf0] sm:$0xff]
      %v690 = vld [vmem:[%s668 + $0xf8] sm:$0xff]
      %v691 = vld [vmem:[%s668 + $0x108] sm:$0xff]
      %v692 = vld [vmem:[%s668 + $0x110] sm:$0xff]
      %v693 = vld [vmem:[%s668 + $0x120] sm:$0xff]
      %v694 = vld [vmem:[%s668 + $0x128] sm:$0xff]
      %v695 = vld [vmem:[%s668 + $0x138] sm:$0xff]
      %v696 = vld [vmem:[%s668 + $0x140] sm:$0xff]
      %v697 = vld [vmem:[%s668 + $0x150] sm:$0xff]
      %v698 = vld [vmem:[%s668 + $0x158] sm:$0xff]
      %v699 = vld [vmem:[%s668 + $0x168] sm:$0xff]
      %v700 = vld [vmem:[%s668 + $0x170] sm:$0xff]
      %v701 = vpack.c.bf16 %v670, %v669
      %v702 = vpack.c.bf16 %v672, %v671
      %v703 = vpack.c.bf16 %v674, %v673
      %v704 = vpack.c.bf16 %v676, %v675
      %v705 = vpack.c.bf16 %v678, %v677
      %v706 = vpack.c.bf16 %v680, %v679
      %v707 = vpack.c.bf16 %v682, %v681
      %v708 = vpack.c.bf16 %v684, %v683
      %v709 = vpack.c.bf16 %v686, %v685
      %v710 = vpack.c.bf16 %v688, %v687
      %v711 = vpack.c.bf16 %v690, %v689
      %v712 = vpack.c.bf16 %v692, %v691
      %v713 = vpack.c.bf16 %v694, %v693
      %v714 = vpack.c.bf16 %v696, %v695
      %v715 = vpack.c.bf16 %v698, %v697
      %v716 = vpack.c.bf16 %v700, %v699
      %717 = vst [vmem:[#allocation3 + $0x8] sm:$0xff] %v701
      %718 = vst [vmem:[#allocation3 + $0x20] sm:$0xff] %v702
      %719 = vst [vmem:[#allocation3 + $0x38] sm:$0xff] %v703
      %720 = vst [vmem:[#allocation3 + $0x50] sm:$0xff] %v704
      %721 = vst [vmem:[#allocation3 + $0x68] sm:$0xff] %v705
      %722 = vst [vmem:[#allocation3 + $0x80] sm:$0xff] %v706
      %723 = vst [vmem:[#allocation3 + $0x98] sm:$0xff] %v707
      %724 = vst [vmem:[#allocation3 + $0xb0] sm:$0xff] %v708
      %725 = vst [vmem:[#allocation3 + $0xc8] sm:$0xff] %v709
      %726 = vst [vmem:[#allocation3 + $0xe0] sm:$0xff] %v710
      %727 = vst [vmem:[#allocation3 + $0xf8] sm:$0xff] %v711
      %728 = vst [vmem:[#allocation3 + $0x110] sm:$0xff] %v712
      %729 = vst [vmem:[#allocation3 + $0x128] sm:$0xff] %v713
      %730 = vst [vmem:[#allocation3 + $0x140] sm:$0xff] %v714
      %731 = vst [vmem:[#allocation3 + $0x158] sm:$0xff] %v715
      %732 = vst [vmem:[#allocation3 + $0x170] sm:$0xff] %v716
      %s733 = sadd.s32 %s599, 2
      %s734 = sld [smem:[#allocation5 + %s733]]
      %s735 = scalar_lea.vmem [#allocation2], %s734
      %v736 = vld [vmem:[%s735] sm:$0xff]
      %v737 = vld [vmem:[%s735 + $0x8] sm:$0xff]
      %v738 = vld [vmem:[%s735 + $0x18] sm:$0xff]
      %v739 = vld [vmem:[%s735 + $0x20] sm:$0xff]
      %v740 = vld [vmem:[%s735 + $0x30] sm:$0xff]
      %v741 = vld [vmem:[%s735 + $0x38] sm:$0xff]
      %v742 = vld [vmem:[%s735 + $0x48] sm:$0xff]
      %v743 = vld [vmem:[%s735 + $0x50] sm:$0xff]
      %v744 = vld [vmem:[%s735 + $0x60] sm:$0xff]
      %v745 = vld [vmem:[%s735 + $0x68] sm:$0xff]
      %v746 = vld [vmem:[%s735 + $0x78] sm:$0xff]
      %v747 = vld [vmem:[%s735 + $0x80] sm:$0xff]
      %v748 = vld [vmem:[%s735 + $0x90] sm:$0xff]
      %v749 = vld [vmem:[%s735 + $0x98] sm:$0xff]
      %v750 = vld [vmem:[%s735 + $0xa8] sm:$0xff]
      %v751 = vld [vmem:[%s735 + $0xb0] sm:$0xff]
      %v752 = vld [vmem:[%s735 + $0xc0] sm:$0xff]
      %v753 = vld [vmem:[%s735 + $0xc8] sm:$0xff]
      %v754 = vld [vmem:[%s735 + $0xd8] sm:$0xff]
      %v755 = vld [vmem:[%s735 + $0xe0] sm:$0xff]
      %v756 = vld [vmem:[%s735 + $0xf0] sm:$0xff]
      %v757 = vld [vmem:[%s735 + $0xf8] sm:$0xff]
      %v758 = vld [vmem:[%s735 + $0x108] sm:$0xff]
      %v759 = vld [vmem:[%s735 + $0x110] sm:$0xff]
      %v760 = vld [vmem:[%s735 + $0x120] sm:$0xff]
      %v761 = vld [vmem:[%s735 + $0x128] sm:$0xff]
      %v762 = vld [vmem:[%s735 + $0x138] sm:$0xff]
      %v763 = vld [vmem:[%s735 + $0x140] sm:$0xff]
      %v764 = vld [vmem:[%s735 + $0x150] sm:$0xff]
      %v765 = vld [vmem:[%s735 + $0x158] sm:$0xff]
      %v766 = vld [vmem:[%s735 + $0x168] sm:$0xff]
      %v767 = vld [vmem:[%s735 + $0x170] sm:$0xff]
      %v768 = vpack.c.bf16 %v737, %v736
      %v769 = vpack.c.bf16 %v739, %v738
      %v770 = vpack.c.bf16 %v741, %v740
      %v771 = vpack.c.bf16 %v743, %v742
      %v772 = vpack.c.bf16 %v745, %v744
      %v773 = vpack.c.bf16 %v747, %v746
      %v774 = vpack.c.bf16 %v749, %v748
      %v775 = vpack.c.bf16 %v751, %v750
      %v776 = vpack.c.bf16 %v753, %v752
      %v777 = vpack.c.bf16 %v755, %v754
      %v778 = vpack.c.bf16 %v757, %v756
      %v779 = vpack.c.bf16 %v759, %v758
      %v780 = vpack.c.bf16 %v761, %v760
      %v781 = vpack.c.bf16 %v763, %v762
      %v782 = vpack.c.bf16 %v765, %v764
      %v783 = vpack.c.bf16 %v767, %v766
      %784 = vst [vmem:[#allocation3 + $0x10] sm:$0xff] %v768
      %785 = vst [vmem:[#allocation3 + $0x28] sm:$0xff] %v769
      %786 = vst [vmem:[#allocation3 + $0x40] sm:$0xff] %v770
      %787 = vst [vmem:[#allocation3 + $0x58] sm:$0xff] %v771
      %788 = vst [vmem:[#allocation3 + $0x70] sm:$0xff] %v772
      %789 = vst [vmem:[#allocation3 + $0x88] sm:$0xff] %v773
      %790 = vst [vmem:[#allocation3 + $0xa0] sm:$0xff] %v774
      %791 = vst [vmem:[#allocation3 + $0xb8] sm:$0xff] %v775
      %792 = vst [vmem:[#allocation3 + $0xd0] sm:$0xff] %v776
      %793 = vst [vmem:[#allocation3 + $0xe8] sm:$0xff] %v777
      %794 = vst [vmem:[#allocation3 + $0x100] sm:$0xff] %v778
      %795 = vst [vmem:[#allocation3 + $0x118] sm:$0xff] %v779
      %796 = vst [vmem:[#allocation3 + $0x130] sm:$0xff] %v780
      %797 = vst [vmem:[#allocation3 + $0x148] sm:$0xff] %v781
      %798 = vst [vmem:[#allocation3 + $0x160] sm:$0xff] %v782
      %799 = vst [vmem:[#allocation3 + $0x178] sm:$0xff] %v783
      %s800 = sld [smem:[#allocation5 + %s599]]
      %s801 = smul.u32 %s800, 3
      %s802 = smul.addr %s801, 8
      %s803 = scalar_lea.vmem [#allocation3], %s802
      %v804 = vld [vmem:[%s803] sm:$0xff]
      %v805 = vld [vmem:[%s803 + $0x8] sm:$0xff]
      %v806 = vld [vmem:[%s803 + $0x10] sm:$0xff]
      %v807 = vld [vmem:[%s803 + $0x18] sm:$0xff]
      %v808 = vld [vmem:[%s803 + $0x20] sm:$0xff]
      %v809 = vld [vmem:[%s803 + $0x28] sm:$0xff]
      %v810 = vld [vmem:[%s803 + $0x30] sm:$0xff]
      %v811 = vld [vmem:[%s803 + $0x38] sm:$0xff]
      %v812 = vld [vmem:[%s803 + $0x40] sm:$0xff]
      %v813 = vld [vmem:[%s803 + $0x48] sm:$0xff]
      %v814 = vld [vmem:[%s803 + $0x50] sm:$0xff]
      %v815 = vld [vmem:[%s803 + $0x58] sm:$0xff]
      %v816 = vld [vmem:[%s803 + $0x60] sm:$0xff]
      %v817 = vld [vmem:[%s803 + $0x68] sm:$0xff]
      %v818 = vld [vmem:[%s803 + $0x70] sm:$0xff]
      %v819 = vld [vmem:[%s803 + $0x78] sm:$0xff]
      %v820 = vld [vmem:[%s803 + $0x80] sm:$0xff]
      %v821 = vld [vmem:[%s803 + $0x88] sm:$0xff]
      %v822 = vld [vmem:[%s803 + $0x90] sm:$0xff]
      %v823 = vld [vmem:[%s803 + $0x98] sm:$0xff]
      %v824 = vld [vmem:[%s803 + $0xa0] sm:$0xff]
      %v825 = vld [vmem:[%s803 + $0xa8] sm:$0xff]
      %v826 = vld [vmem:[%s803 + $0xb0] sm:$0xff]
      %v827 = vld [vmem:[%s803 + $0xb8] sm:$0xff]
      %v828 = vld [vmem:[%s470] sm:$0xff]
      %v829 = vld [vmem:[%s470 + $0x8] sm:$0xff]
      %v830 = vld [vmem:[%s470 + $0x10] sm:$0xff]
      %v831 = vld [vmem:[%s470 + $0x18] sm:$0xff]
      %v832 = vld [vmem:[%s470 + $0x20] sm:$0xff]
      %v833 = vld [vmem:[%s470 + $0x28] sm:$0xff]
      %v834 = vld [vmem:[%s470 + $0x30] sm:$0xff]
      %v835 = vld [vmem:[%s470 + $0x38] sm:$0xff]
      %v836 = vld [vmem:[%s470 + $0x40] sm:$0xff]
      %v837 = vld [vmem:[%s470 + $0x48] sm:$0xff]
      %v838 = vld [vmem:[%s470 + $0x50] sm:$0xff]
      %v839 = vld [vmem:[%s470 + $0x58] sm:$0xff]
      %v840 = vld [vmem:[%s470 + $0x60] sm:$0xff]
      %v841 = vld [vmem:[%s470 + $0x68] sm:$0xff]
      %v842 = vld [vmem:[%s470 + $0x70] sm:$0xff]
      %v843 = vld [vmem:[%s470 + $0x78] sm:$0xff]
      %v844 = vld [vmem:[%s470 + $0x80] sm:$0xff]
      %v845 = vld [vmem:[%s470 + $0x88] sm:$0xff]
      %v846 = vld [vmem:[%s470 + $0x90] sm:$0xff]
      %v847 = vld [vmem:[%s470 + $0x98] sm:$0xff]
      %v848 = vld [vmem:[%s470 + $0xa0] sm:$0xff]
      %v849 = vld [vmem:[%s470 + $0xa8] sm:$0xff]
      %v850 = vld [vmem:[%s470 + $0xb0] sm:$0xff]
      %v851 = vld [vmem:[%s470 + $0xb8] sm:$0xff]
      %v852 = vld [vmem:[%s470 + $0xc0] sm:$0xff]
      %v853 = vld [vmem:[%s470 + $0xc8] sm:$0xff]
      %v854 = vld [vmem:[%s470 + $0xd0] sm:$0xff]
      %v855 = vld [vmem:[%s470 + $0xd8] sm:$0xff]
      %v856 = vld [vmem:[%s470 + $0xe0] sm:$0xff]
      %v857 = vld [vmem:[%s470 + $0xe8] sm:$0xff]
      %v858 = vld [vmem:[%s470 + $0xf0] sm:$0xff]
      %v859 = vld [vmem:[%s470 + $0xf8] sm:$0xff]
      %v860 = vld [vmem:[%s470 + $0x100] sm:$0xff]
      %v861 = vld [vmem:[%s470 + $0x108] sm:$0xff]
      %v862 = vld [vmem:[%s470 + $0x110] sm:$0xff]
      %v863 = vld [vmem:[%s470 + $0x118] sm:$0xff]
      %v864 = vld [vmem:[%s470 + $0x120] sm:$0xff]
      %v865 = vld [vmem:[%s470 + $0x128] sm:$0xff]
      %v866 = vld [vmem:[%s470 + $0x130] sm:$0xff]
      %v867 = vld [vmem:[%s470 + $0x138] sm:$0xff]
      %v868 = vld [vmem:[%s470 + $0x140] sm:$0xff]
      %v869 = vld [vmem:[%s470 + $0x148] sm:$0xff]
      %v870 = vld [vmem:[%s470 + $0x150] sm:$0xff]
      %v871 = vld [vmem:[%s470 + $0x158] sm:$0xff]
      %v872 = vld [vmem:[%s470 + $0x160] sm:$0xff]
      %v873 = vld [vmem:[%s470 + $0x168] sm:$0xff]
      %v874 = vld [vmem:[%s470 + $0x170] sm:$0xff]
      %v875 = vld [vmem:[%s470 + $0x178] sm:$0xff]
      %s876 = sld [smem:[#allocation5 + %s666]]
      %s877 = smul.u32 %s876, 3
      %s878 = smul.addr %s877, 8
      %s879 = scalar_lea.vmem [#allocation3], %s878
      %v880 = vld [vmem:[%s879] sm:$0xff]
      %v881 = vld [vmem:[%s879 + $0x8] sm:$0xff]
      %v882 = vld [vmem:[%s879 + $0x10] sm:$0xff]
      %v883 = vld [vmem:[%s879 + $0x18] sm:$0xff]
      %v884 = vld [vmem:[%s879 + $0x20] sm:$0xff]
      %v885 = vld [vmem:[%s879 + $0x28] sm:$0xff]
      %v886 = vld [vmem:[%s879 + $0x30] sm:$0xff]
      %v887 = vld [vmem:[%s879 + $0x38] sm:$0xff]
      %v888 = vld [vmem:[%s879 + $0x40] sm:$0xff]
      %v889 = vld [vmem:[%s879 + $0x48] sm:$0xff]
      %v890 = vld [vmem:[%s879 + $0x50] sm:$0xff]
      %v891 = vld [vmem:[%s879 + $0x58] sm:$0xff]
      %v892 = vld [vmem:[%s879 + $0x60] sm:$0xff]
      %v893 = vld [vmem:[%s879 + $0x68] sm:$0xff]
      %v894 = vld [vmem:[%s879 + $0x70] sm:$0xff]
      %v895 = vld [vmem:[%s879 + $0x78] sm:$0xff]
      %v896 = vld [vmem:[%s879 + $0x80] sm:$0xff]
      %v897 = vld [vmem:[%s879 + $0x88] sm:$0xff]
      %v898 = vld [vmem:[%s879 + $0x90] sm:$0xff]
      %v899 = vld [vmem:[%s879 + $0x98] sm:$0xff]
      %v900 = vld [vmem:[%s879 + $0xa0] sm:$0xff]
      %v901 = vld [vmem:[%s879 + $0xa8] sm:$0xff]
      %v902 = vld [vmem:[%s879 + $0xb0] sm:$0xff]
      %v903 = vld [vmem:[%s879 + $0xb8] sm:$0xff]
      %s904 = scalar_lea.vmem %s470, 384
      %v905 = vld [vmem:[%s904] sm:$0xff]
      %v906 = vld [vmem:[%s904 + $0x8] sm:$0xff]
      %v907 = vld [vmem:[%s904 + $0x10] sm:$0xff]
      %v908 = vld [vmem:[%s904 + $0x18] sm:$0xff]
      %v909 = vld [vmem:[%s904 + $0x20] sm:$0xff]
      %v910 = vld [vmem:[%s904 + $0x28] sm:$0xff]
      %v911 = vld [vmem:[%s904 + $0x30] sm:$0xff]
      %v912 = vld [vmem:[%s904 + $0x38] sm:$0xff]
      %v913 = vld [vmem:[%s904 + $0x40] sm:$0xff]
      %v914 = vld [vmem:[%s904 + $0x48] sm:$0xff]
      %v915 = vld [vmem:[%s904 + $0x50] sm:$0xff]
      %v916 = vld [vmem:[%s904 + $0x58] sm:$0xff]
      %v917 = vld [vmem:[%s904 + $0x60] sm:$0xff]
      %v918 = vld [vmem:[%s904 + $0x68] sm:$0xff]
      %v919 = vld [vmem:[%s904 + $0x70] sm:$0xff]
      %v920 = vld [vmem:[%s904 + $0x78] sm:$0xff]
      %v921 = vld [vmem:[%s904 + $0x80] sm:$0xff]
      %v922 = vld [vmem:[%s904 + $0x88] sm:$0xff]
      %v923 = vld [vmem:[%s904 + $0x90] sm:$0xff]
      %v924 = vld [vmem:[%s904 + $0x98] sm:$0xff]
      %v925 = vld [vmem:[%s904 + $0xa0] sm:$0xff]
      %v926 = vld [vmem:[%s904 + $0xa8] sm:$0xff]
      %v927 = vld [vmem:[%s904 + $0xb0] sm:$0xff]
      %v928 = vld [vmem:[%s904 + $0xb8] sm:$0xff]
      %v929 = vld [vmem:[%s904 + $0xc0] sm:$0xff]
      %v930 = vld [vmem:[%s904 + $0xc8] sm:$0xff]
      %v931 = vld [vmem:[%s904 + $0xd0] sm:$0xff]
      %v932 = vld [vmem:[%s904 + $0xd8] sm:$0xff]
      %v933 = vld [vmem:[%s904 + $0xe0] sm:$0xff]
      %v934 = vld [vmem:[%s904 + $0xe8] sm:$0xff]
      %v935 = vld [vmem:[%s904 + $0xf0] sm:$0xff]
      %v936 = vld [vmem:[%s904 + $0xf8] sm:$0xff]
      %v937 = vld [vmem:[%s904 + $0x100] sm:$0xff]
      %v938 = vld [vmem:[%s904 + $0x108] sm:$0xff]
      %v939 = vld [vmem:[%s904 + $0x110] sm:$0xff]
      %v940 = vld [vmem:[%s904 + $0x118] sm:$0xff]
      %v941 = vld [vmem:[%s904 + $0x120] sm:$0xff]
      %v942 = vld [vmem:[%s904 + $0x128] sm:$0xff]
      %v943 = vld [vmem:[%s904 + $0x130] sm:$0xff]
      %v944 = vld [vmem:[%s904 + $0x138] sm:$0xff]
      %v945 = vld [vmem:[%s904 + $0x140] sm:$0xff]
      %v946 = vld [vmem:[%s904 + $0x148] sm:$0xff]
      %v947 = vld [vmem:[%s904 + $0x150] sm:$0xff]
      %v948 = vld [vmem:[%s904 + $0x158] sm:$0xff]
      %v949 = vld [vmem:[%s904 + $0x160] sm:$0xff]
      %v950 = vld [vmem:[%s904 + $0x168] sm:$0xff]
      %v951 = vld [vmem:[%s904 + $0x170] sm:$0xff]
      %v952 = vld [vmem:[%s904 + $0x178] sm:$0xff]
      %v1001 = vunpack.c.l.b16 %v905
      %v1002 = vunpack.c.h.b16 %v905
      %v1003 = vunpack.c.l.b16 %v906
      %v1004 = vunpack.c.h.b16 %v906
      %v1005 = vunpack.c.l.b16 %v907
      %v1006 = vunpack.c.h.b16 %v907
      %v1007 = vunpack.c.l.b16 %v908
      %v1008 = vunpack.c.h.b16 %v908
      %v1009 = vunpack.c.l.b16 %v909
      %v1010 = vunpack.c.h.b16 %v909
      %v1011 = vunpack.c.l.b16 %v910
      %v1012 = vunpack.c.h.b16 %v910
      %v1013 = vunpack.c.l.b16 %v911
      %v1014 = vunpack.c.h.b16 %v911
      %v1015 = vunpack.c.l.b16 %v912
      %v1016 = vunpack.c.h.b16 %v912
      %v1017 = vunpack.c.l.b16 %v913
      %v1018 = vunpack.c.h.b16 %v913
      %v1019 = vunpack.c.l.b16 %v914
      %v1020 = vunpack.c.h.b16 %v914
      %v1021 = vunpack.c.l.b16 %v915
      %v1022 = vunpack.c.h.b16 %v915
      %v1023 = vunpack.c.l.b16 %v916
      %v1024 = vunpack.c.h.b16 %v916
      %v1025 = vunpack.c.l.b16 %v917
      %v1026 = vunpack.c.h.b16 %v917
      %v1027 = vunpack.c.l.b16 %v918
      %v1028 = vunpack.c.h.b16 %v918
      %v1029 = vunpack.c.l.b16 %v919
      %v1030 = vunpack.c.h.b16 %v919
      %v1031 = vunpack.c.l.b16 %v920
      %v1032 = vunpack.c.h.b16 %v920
      %v1033 = vunpack.c.l.b16 %v921
      %v1034 = vunpack.c.h.b16 %v921
      %v1035 = vunpack.c.l.b16 %v922
      %v1036 = vunpack.c.h.b16 %v922
      %v1037 = vunpack.c.l.b16 %v923
      %v1038 = vunpack.c.h.b16 %v923
      %v1039 = vunpack.c.l.b16 %v924
      %v1040 = vunpack.c.h.b16 %v924
      %v1041 = vunpack.c.l.b16 %v925
      %v1042 = vunpack.c.h.b16 %v925
      %v1043 = vunpack.c.l.b16 %v926
      %v1044 = vunpack.c.h.b16 %v926
      %v1045 = vunpack.c.l.b16 %v927
      %v1046 = vunpack.c.h.b16 %v927
      %v1047 = vunpack.c.l.b16 %v928
      %v1048 = vunpack.c.h.b16 %v928
      %v1049 = vunpack.c.l.b16 %v929
      %v1050 = vunpack.c.h.b16 %v929
      %v1051 = vunpack.c.l.b16 %v930
      %v1052 = vunpack.c.h.b16 %v930
      %v1053 = vunpack.c.l.b16 %v931
      %v1054 = vunpack.c.h.b16 %v931
      %v1055 = vunpack.c.l.b16 %v932
      %v1056 = vunpack.c.h.b16 %v932
      %v1057 = vunpack.c.l.b16 %v933
      %v1058 = vunpack.c.h.b16 %v933
      %v1059 = vunpack.c.l.b16 %v934
      %v1060 = vunpack.c.h.b16 %v934
      %v1061 = vunpack.c.l.b16 %v935
      %v1062 = vunpack.c.h.b16 %v935
      %v1063 = vunpack.c.l.b16 %v936
      %v1064 = vunpack.c.h.b16 %v936
      %v1065 = vunpack.c.l.b16 %v937
      %v1066 = vunpack.c.h.b16 %v937
      %v1067 = vunpack.c.l.b16 %v938
      %v1068 = vunpack.c.h.b16 %v938
      %v1069 = vunpack.c.l.b16 %v939
      %v1070 = vunpack.c.h.b16 %v939
      %v1071 = vunpack.c.l.b16 %v940
      %v1072 = vunpack.c.h.b16 %v940
      %v1073 = vunpack.c.l.b16 %v941
      %v1074 = vunpack.c.h.b16 %v941
      %v1075 = vunpack.c.l.b16 %v942
      %v1076 = vunpack.c.h.b16 %v942
      %v1077 = vunpack.c.l.b16 %v943
      %v1078 = vunpack.c.h.b16 %v943
      %v1079 = vunpack.c.l.b16 %v944
      %v1080 = vunpack.c.h.b16 %v944
      %v1081 = vunpack.c.l.b16 %v945
      %v1082 = vunpack.c.h.b16 %v945
      %v1083 = vunpack.c.l.b16 %v946
      %v1084 = vunpack.c.h.b16 %v946
      %v1085 = vunpack.c.l.b16 %v947
      %v1086 = vunpack.c.h.b16 %v947
      %v1087 = vunpack.c.l.b16 %v948
      %v1088 = vunpack.c.h.b16 %v948
      %v1089 = vunpack.c.l.b16 %v949
      %v1090 = vunpack.c.h.b16 %v949
      %v1091 = vunpack.c.l.b16 %v950
      %v1092 = vunpack.c.h.b16 %v950
      %v1093 = vunpack.c.l.b16 %v951
      %v1094 = vunpack.c.h.b16 %v951
      %v1095 = vunpack.c.l.b16 %v952
      %v1096 = vunpack.c.h.b16 %v952
      %v1097 = vpack.c.b16 %v1003, %v1001
      %v1098 = vpack.c.b16 %v1004, %v1002
      %v1099 = vpack.c.b16 %v1007, %v1005
      %v1100 = vpack.c.b16 %v1008, %v1006
      %v1101 = vpack.c.b16 %v1011, %v1009
      %v1102 = vpack.c.b16 %v1012, %v1010
      %v1103 = vpack.c.b16 %v1015, %v1013
      %v1104 = vpack.c.b16 %v1016, %v1014
      %v1105 = vpack.c.b16 %v1019, %v1017
      %v1106 = vpack.c.b16 %v1020, %v1018
      %v1107 = vpack.c.b16 %v1023, %v1021
      %v1108 = vpack.c.b16 %v1024, %v1022
      %v1109 = vpack.c.b16 %v1027, %v1025
      %v1110 = vpack.c.b16 %v1028, %v1026
      %v1111 = vpack.c.b16 %v1031, %v1029
      %v1112 = vpack.c.b16 %v1032, %v1030
      %v1113 = vpack.c.b16 %v1035, %v1033
      %v1114 = vpack.c.b16 %v1036, %v1034
      %v1115 = vpack.c.b16 %v1039, %v1037
      %v1116 = vpack.c.b16 %v1040, %v1038
      %v1117 = vpack.c.b16 %v1043, %v1041
      %v1118 = vpack.c.b16 %v1044, %v1042
      %v1119 = vpack.c.b16 %v1047, %v1045
      %v1120 = vpack.c.b16 %v1048, %v1046
      %v1121 = vpack.c.b16 %v1051, %v1049
      %v1122 = vpack.c.b16 %v1052, %v1050
      %v1123 = vpack.c.b16 %v1055, %v1053
      %v1124 = vpack.c.b16 %v1056, %v1054
      %v1125 = vpack.c.b16 %v1059, %v1057
      %v1126 = vpack.c.b16 %v1060, %v1058
      %v1127 = vpack.c.b16 %v1063, %v1061
      %v1128 = vpack.c.b16 %v1064, %v1062
      %v1129 = vpack.c.b16 %v1067, %v1065
      %v1130 = vpack.c.b16 %v1068, %v1066
      %v1131 = vpack.c.b16 %v1071, %v1069
      %v1132 = vpack.c.b16 %v1072, %v1070
      %v1133 = vpack.c.b16 %v1075, %v1073
      %v1134 = vpack.c.b16 %v1076, %v1074
      %v1135 = vpack.c.b16 %v1079, %v1077
      %v1136 = vpack.c.b16 %v1080, %v1078
      %v1137 = vpack.c.b16 %v1083, %v1081
      %v1138 = vpack.c.b16 %v1084, %v1082
      %v1139 = vpack.c.b16 %v1087, %v1085
      %v1140 = vpack.c.b16 %v1088, %v1086
      %v1141 = vpack.c.b16 %v1091, %v1089
      %v1142 = vpack.c.b16 %v1092, %v1090
      %v1143 = vpack.c.b16 %v1095, %v1093
      %v1144 = vpack.c.b16 %v1096, %v1094
      %1193 = vmatprep.subr.bf16.mxu0 %v1098
      %1194 = vmatpush1.bf16.msra.mxu0 %v1097
      %1195 = vmatprep.subr.bf16.mxu0 %v1100
      %1196 = vmatpush1.bf16.msra.mxu0 %v1099
      %1197 = vmatprep.subr.bf16.mxu0 %v1102
      %1198 = vmatpush1.bf16.msra.mxu0 %v1101
      %1199 = vmatprep.subr.bf16.mxu0 %v1104
      %1200 = vmatpush1.bf16.msra.mxu0 %v1103
      %1201 = vmatprep.subr.bf16.mxu0 %v1106
      %1202 = vmatpush1.bf16.msra.mxu0 %v1105
      %1203 = vmatprep.subr.bf16.mxu0 %v1108
      %1204 = vmatpush1.bf16.msra.mxu0 %v1107
      %1205 = vmatprep.subr.bf16.mxu0 %v1110
      %1206 = vmatpush1.bf16.msra.mxu0 %v1109
      %1207 = vmatprep.subr.bf16.mxu0 %v1112
      %1208 = vmatpush1.bf16.msra.mxu0 %v1111
      %1209 = vmatprep.subr.bf16.mxu0 %v1114
      %1210 = vmatpush1.bf16.msra.mxu0 %v1113
      %1211 = vmatprep.subr.bf16.mxu0 %v1116
      %1212 = vmatpush1.bf16.msra.mxu0 %v1115
      %1213 = vmatprep.subr.bf16.mxu0 %v1118
      %1214 = vmatpush1.bf16.msra.mxu0 %v1117
      %1215 = vmatprep.subr.bf16.mxu0 %v1120
      %1216 = vmatpush1.bf16.msra.mxu0 %v1119
      %1217 = vmatprep.subr.bf16.mxu0 %v1122
      %1218 = vmatpush1.bf16.msra.mxu0 %v1121
      %1219 = vmatprep.subr.bf16.mxu0 %v1124
      %1220 = vmatpush1.bf16.msra.mxu0 %v1123
      %1221 = vmatprep.subr.bf16.mxu0 %v1126
      %1222 = vmatpush1.bf16.msra.mxu0 %v1125
      %1223 = vmatprep.subr.bf16.mxu0 %v1128
      %1224 = vmatpush1.bf16.msra.mxu0 %v1127
      %1225 = vmatprep.mubr.bf16.mxu0 %v881
      %1226 = vmatmul.mubr.bf16.gmra.mrb[0].mxu0 %v880
      %v1227 = vpop.f32.mrb[0].mxu0
      %v1228 = vadd.f32 0.0, %v1227
      %v1229 = vpop.f32.mrb[0].mxu0
      %v1230 = vadd.f32 0.0, %v1229
      %v1231 = vpop.f32.mrb[0].mxu0
      %v1232 = vadd.f32 0.0, %v1231
      %v1233 = vpop.f32.mrb[0].mxu0
      %v1234 = vadd.f32 0.0, %v1233
      %1235 = vmatprep.mubr.bf16.mxu0 %v884
      %1236 = vmatmul.mubr.bf16.gmra.mrb[0].mxu0 %v883
      %v1237 = vpop.f32.mrb[0].mxu0
      %v1238 = vadd.f32 0.0, %v1237
      %v1239 = vpop.f32.mrb[0].mxu0
      %v1240 = vadd.f32 0.0, %v1239
      %v1241 = vpop.f32.mrb[0].mxu0
      %v1242 = vadd.f32 0.0, %v1241
      %v1243 = vpop.f32.mrb[0].mxu0
      %v1244 = vadd.f32 0.0, %v1243
      %1245 = vmatprep.mubr.bf16.mxu0 %v887
      %1246 = vmatmul.mubr.bf16.gmra.mrb[0].mxu0 %v886
      %v1247 = vpop.f32.mrb[0].mxu0
      %v1248 = vadd.f32 0.0, %v1247
      %v1249 = vpop.f32.mrb[0].mxu0
      %v1250 = vadd.f32 0.0, %v1249
      %v1251 = vpop.f32.mrb[0].mxu0
      %v1252 = vadd.f32 0.0, %v1251
      %v1253 = vpop.f32.mrb[0].mxu0
      %v1254 = vadd.f32 0.0, %v1253
      %1255 = vmatprep.mubr.bf16.mxu0 %v890
      %1256 = vmatmul.mubr.bf16.gmra.mrb[0].mxu0 %v889
      %v1257 = vpop.f32.mrb[0].mxu0
      %v1258 = vadd.f32 0.0, %v1257
      %v1259 = vpop.f32.mrb[0].mxu0
      %v1260 = vadd.f32 0.0, %v1259
      %v1261 = vpop.f32.mrb[0].mxu0
      %v1262 = vadd.f32 0.0, %v1261
      %v1263 = vpop.f32.mrb[0].mxu0
      %v1264 = vadd.f32 0.0, %v1263
      %1265 = vmatprep.mubr.bf16.mxu0 %v893
      %1266 = vmatmul.mubr.bf16.gmra.mrb[0].mxu0 %v892
      %v1267 = vpop.f32.mrb[0].mxu0
      %v1268 = vadd.f32 0.0, %v1267
      %v1269 = vpop.f32.mrb[0].mxu0
      %v1270 = vadd.f32 0.0, %v1269
      %v1271 = vpop.f32.mrb[0].mxu0
      %v1272 = vadd.f32 0.0, %v1271
      %v1273 = vpop.f32.mrb[0].mxu0
      %v1274 = vadd.f32 0.0, %v1273
      %1275 = vmatprep.mubr.bf16.mxu0 %v896
      %1276 = vmatmul.mubr.bf16.gmra.mrb[0].mxu0 %v895
      %v1277 = vpop.f32.mrb[0].mxu0
      %v1278 = vadd.f32 0.0, %v1277
      %v1279 = vpop.f32.mrb[0].mxu0
      %v1280 = vadd.f32 0.0, %v1279
      %v1281 = vpop.f32.mrb[0].mxu0
      %v1282 = vadd.f32 0.0, %v1281
      %v1283 = vpop.f32.mrb[0].mxu0
      %v1284 = vadd.f32 0.0, %v1283
      %1285 = vmatprep.mubr.bf16.mxu0 %v899
      %1286 = vmatmul.mubr.bf16.gmra.mrb[0].mxu0 %v898
      %v1287 = vpop.f32.mrb[0].mxu0
      %v1288 = vadd.f32 0.0, %v1287
      %v1289 = vpop.f32.mrb[0].mxu0
      %v1290 = vadd.f32 0.0, %v1289
      %v1291 = vpop.f32.mrb[0].mxu0
      %v1292 = vadd.f32 0.0, %v1291
      %v1293 = vpop.f32.mrb[0].mxu0
      %v1294 = vadd.f32 0.0, %v1293
      %1295 = vmatprep.mubr.bf16.mxu0 %v902
      %1296 = vmatmul.mubr.bf16.gmra.mrb[0].mxu0 %v901
      %v1297 = vpop.f32.mrb[0].mxu0
      %v1298 = vadd.f32 0.0, %v1297
      %v1299 = vpop.f32.mrb[0].mxu0
      %v1300 = vadd.f32 0.0, %v1299
      %v1301 = vpop.f32.mrb[0].mxu0
      %v1302 = vadd.f32 0.0, %v1301
      %v1303 = vpop.f32.mrb[0].mxu0
      %v1304 = vadd.f32 0.0, %v1303
      %1305 = vdwg.mxu0
      %1306 = vmatprep.subr.bf16.mxu0 %v1130
      %1307 = vmatpush1.bf16.msra.mxu0 %v1129
      %1308 = vmatprep.subr.bf16.mxu0 %v1132
      %1309 = vmatpush1.bf16.msra.mxu0 %v1131
      %1310 = vmatprep.subr.bf16.mxu0 %v1134
      %1311 = vmatpush1.bf16.msra.mxu0 %v1133
      %1312 = vmatprep.subr.bf16.mxu0 %v1136
      %1313 = vmatpush1.bf16.msra.mxu0 %v1135
      %1314 = vmatprep.subr.bf16.mxu0 %v1138
      %1315 = vmatpush1.bf16.msra.mxu0 %v1137
      %1316 = vmatprep.subr.bf16.mxu0 %v1140
      %1317 = vmatpush1.bf16.msra.mxu0 %v1139
      %1318 = vmatprep.subr.bf16.mxu0 %v1142
      %1319 = vmatpush1.bf16.msra.mxu0 %v1141
      %1320 = vmatprep.subr.bf16.mxu0 %v1144
      %1321 = vmatpush1.bf16.msra.mxu0 %v1143
      %1322 = vmatprep.subr.bf16.mxu0 0
      %1323 = vmatpush1.bf16.msra.mxu0 0
      %1324 = vmatprep.subr.bf16.mxu0 0
      %1325 = vmatpush1.bf16.msra.mxu0 0
      %1326 = vmatprep.subr.bf16.mxu0 0
      %1327 = vmatpush1.bf16.msra.mxu0 0
      %1328 = vmatprep.subr.bf16.mxu0 0
      %1329 = vmatpush1.bf16.msra.mxu0 0
      %1330 = vmatprep.subr.bf16.mxu0 0
      %1331 = vmatpush1.bf16.msra.mxu0 0
      %1332 = vmatprep.subr.bf16.mxu0 0
      %1333 = vmatpush1.bf16.msra.mxu0 0
      %1334 = vmatprep.subr.bf16.mxu0 0
      %1335 = vmatpush1.bf16.msra.mxu0 0
      %1336 = vmatprep.subr.bf16.mxu0 0
      %1337 = vmatpush1.bf16.msra.mxu0 0
      %1338 = vmatprep.mubr.bf16.mxu0 0
      %1339 = vmatmul.mubr.bf16.gmra.mrb[0].mxu0 %v882
      %v1340 = vpop.f32.mrb[0].mxu0
      %v1341 = vadd.f32 %v1228, %v1340
      %v1342 = vpop.f32.mrb[0].mxu0
      %v1343 = vadd.f32 %v1230, %v1342
      %v1344 = vpop.f32.mrb[0].mxu0
      %v1345 = vadd.f32 %v1232, %v1344
      %v1346 = vpop.f32.mrb[0].mxu0
      %v1347 = vadd.f32 %v1234, %v1346
      %1348 = vmatprep.mubr.bf16.mxu0 0
      %1349 = vmatmul.mubr.bf16.gmra.mrb[0].mxu0 %v885
      %v1350 = vpop.f32.mrb[0].mxu0
      %v1351 = vadd.f32 %v1238, %v1350
      %v1352 = vpop.f32.mrb[0].mxu0
      %v1353 = vadd.f32 %v1240, %v1352
      %v1354 = vpop.f32.mrb[0].mxu0
      %v1355 = vadd.f32 %v1242, %v1354
      %v1356 = vpop.f32.mrb[0].mxu0
      %v1357 = vadd.f32 %v1244, %v1356
      %1358 = vmatprep.mubr.bf16.mxu0 0
      %1359 = vmatmul.mubr.bf16.gmra.mrb[0].mxu0 %v888
      %v1360 = vpop.f32.mrb[0].mxu0
      %v1361 = vadd.f32 %v1248, %v1360
      %v1362 = vpop.f32.mrb[0].mxu0
      %v1363 = vadd.f32 %v1250, %v1362
      %v1364 = vpop.f32.mrb[0].mxu0
      %v1365 = vadd.f32 %v1252, %v1364
      %v1366 = vpop.f32.mrb[0].mxu0
      %v1367 = vadd.f32 %v1254, %v1366
      %1368 = vmatprep.mubr.bf16.mxu0 0
      %1369 = vmatmul.mubr.bf16.gmra.mrb[0].mxu0 %v891
      %v1370 = vpop.f32.mrb[0].mxu0
      %v1371 = vadd.f32 %v1258, %v1370
      %v1372 = vpop.f32.mrb[0].mxu0
      %v1373 = vadd.f32 %v1260, %v1372
      %v1374 = vpop.f32.mrb[0].mxu0
      %v1375 = vadd.f32 %v1262, %v1374
      %v1376 = vpop.f32.mrb[0].mxu0
      %v1377 = vadd.f32 %v1264, %v1376
      %1378 = vmatprep.mubr.bf16.mxu0 0
      %1379 = vmatmul.mubr.bf16.gmra.mrb[0].mxu0 %v894
      %v1380 = vpop.f32.mrb[0].mxu0
      %v1381 = vadd.f32 %v1268, %v1380
      %v1382 = vpop.f32.mrb[0].mxu0
      %v1383 = vadd.f32 %v1270, %v1382
      %v1384 = vpop.f32.mrb[0].mxu0
      %v1385 = vadd.f32 %v1272, %v1384
      %v1386 = vpop.f32.mrb[0].mxu0
      %v1387 = vadd.f32 %v1274, %v1386
      %1388 = vmatprep.mubr.bf16.mxu0 0
      %1389 = vmatmul.mubr.bf16.gmra.mrb[0].mxu0 %v897
      %v1390 = vpop.f32.mrb[0].mxu0
      %v1391 = vadd.f32 %v1278, %v1390
      %v1392 = vpop.f32.mrb[0].mxu0
      %v1393 = vadd.f32 %v1280, %v1392
      %v1394 = vpop.f32.mrb[0].mxu0
      %v1395 = vadd.f32 %v1282, %v1394
      %v1396 = vpop.f32.mrb[0].mxu0
      %v1397 = vadd.f32 %v1284, %v1396
      %1398 = vmatprep.mubr.bf16.mxu0 0
      %1399 = vmatmul.mubr.bf16.gmra.mrb[0].mxu0 %v900
      %v1400 = vpop.f32.mrb[0].mxu0
      %v1401 = vadd.f32 %v1288, %v1400
      %v1402 = vpop.f32.mrb[0].mxu0
      %v1403 = vadd.f32 %v1290, %v1402
      %v1404 = vpop.f32.mrb[0].mxu0
      %v1405 = vadd.f32 %v1292, %v1404
      %v1406 = vpop.f32.mrb[0].mxu0
      %v1407 = vadd.f32 %v1294, %v1406
      %1408 = vmatprep.mubr.bf16.mxu0 0
      %1409 = vmatmul.mubr.bf16.gmra.mrb[0].mxu0 %v903
      %v1410 = vpop.f32.mrb[0].mxu0
      %v1411 = vadd.f32 %v1298, %v1410
      %v1412 = vpop.f32.mrb[0].mxu0
      %v1413 = vadd.f32 %v1300, %v1412
      %v1414 = vpop.f32.mrb[0].mxu0
      %v1415 = vadd.f32 %v1302, %v1414
      %v1416 = vpop.f32.mrb[0].mxu0
      %v1417 = vadd.f32 %v1304, %v1416
      %1418 = vdwg.mxu0
      %v1467 = vunpack.c.l.b16 %v828
      %v1468 = vunpack.c.h.b16 %v828
      %v1469 = vunpack.c.l.b16 %v829
      %v1470 = vunpack.c.h.b16 %v829
      %v1471 = vunpack.c.l.b16 %v830
      %v1472 = vunpack.c.h.b16 %v830
      %v1473 = vunpack.c.l.b16 %v831
      %v1474 = vunpack.c.h.b16 %v831
      %v1475 = vunpack.c.l.b16 %v832
      %v1476 = vunpack.c.h.b16 %v832
      %v1477 = vunpack.c.l.b16 %v833
      %v1478 = vunpack.c.h.b16 %v833
      %v1479 = vunpack.c.l.b16 %v834
      %v1480 = vunpack.c.h.b16 %v834
      %v1481 = vunpack.c.l.b16 %v835
      %v1482 = vunpack.c.h.b16 %v835
      %v1483 = vunpack.c.l.b16 %v836
      %v1484 = vunpack.c.h.b16 %v836
      %v1485 = vunpack.c.l.b16 %v837
      %v1486 = vunpack.c.h.b16 %v837
      %v1487 = vunpack.c.l.b16 %v838
      %v1488 = vunpack.c.h.b16 %v838
      %v1489 = vunpack.c.l.b16 %v839
      %v1490 = vunpack.c.h.b16 %v839
      %v1491 = vunpack.c.l.b16 %v840
      %v1492 = vunpack.c.h.b16 %v840
      %v1493 = vunpack.c.l.b16 %v841
      %v1494 = vunpack.c.h.b16 %v841
      %v1495 = vunpack.c.l.b16 %v842
      %v1496 = vunpack.c.h.b16 %v842
      %v1497 = vunpack.c.l.b16 %v843
      %v1498 = vunpack.c.h.b16 %v843
      %v1499 = vunpack.c.l.b16 %v844
      %v1500 = vunpack.c.h.b16 %v844
      %v1501 = vunpack.c.l.b16 %v845
      %v1502 = vunpack.c.h.b16 %v845
      %v1503 = vunpack.c.l.b16 %v846
      %v1504 = vunpack.c.h.b16 %v846
      %v1505 = vunpack.c.l.b16 %v847
      %v1506 = vunpack.c.h.b16 %v847
      %v1507 = vunpack.c.l.b16 %v848
      %v1508 = vunpack.c.h.b16 %v848
      %v1509 = vunpack.c.l.b16 %v849
      %v1510 = vunpack.c.h.b16 %v849
      %v1511 = vunpack.c.l.b16 %v850
      %v1512 = vunpack.c.h.b16 %v850
      %v1513 = vunpack.c.l.b16 %v851
      %v1514 = vunpack.c.h.b16 %v851
      %v1515 = vunpack.c.l.b16 %v852
      %v1516 = vunpack.c.h.b16 %v852
      %v1517 = vunpack.c.l.b16 %v853
      %v1518 = vunpack.c.h.b16 %v853
      %v1519 = vunpack.c.l.b16 %v854
      %v1520 = vunpack.c.h.b16 %v854
      %v1521 = vunpack.c.l.b16 %v855
      %v1522 = vunpack.c.h.b16 %v855
      %v1523 = vunpack.c.l.b16 %v856
      %v1524 = vunpack.c.h.b16 %v856
      %v1525 = vunpack.c.l.b16 %v857
      %v1526 = vunpack.c.h.b16 %v857
      %v1527 = vunpack.c.l.b16 %v858
      %v1528 = vunpack.c.h.b16 %v858
      %v1529 = vunpack.c.l.b16 %v859
      %v1530 = vunpack.c.h.b16 %v859
      %v1531 = vunpack.c.l.b16 %v860
      %v1532 = vunpack.c.h.b16 %v860
      %v1533 = vunpack.c.l.b16 %v861
      %v1534 = vunpack.c.h.b16 %v861
      %v1535 = vunpack.c.l.b16 %v862
      %v1536 = vunpack.c.h.b16 %v862
      %v1537 = vunpack.c.l.b16 %v863
      %v1538 = vunpack.c.h.b16 %v863
      %v1539 = vunpack.c.l.b16 %v864
      %v1540 = vunpack.c.h.b16 %v864
      %v1541 = vunpack.c.l.b16 %v865
      %v1542 = vunpack.c.h.b16 %v865
      %v1543 = vunpack.c.l.b16 %v866
      %v1544 = vunpack.c.h.b16 %v866
      %v1545 = vunpack.c.l.b16 %v867
      %v1546 = vunpack.c.h.b16 %v867
      %v1547 = vunpack.c.l.b16 %v868
      %v1548 = vunpack.c.h.b16 %v868
      %v1549 = vunpack.c.l.b16 %v869
      %v1550 = vunpack.c.h.b16 %v869
      %v1551 = vunpack.c.l.b16 %v870
      %v1552 = vunpack.c.h.b16 %v870
      %v1553 = vunpack.c.l.b16 %v871
      %v1554 = vunpack.c.h.b16 %v871
      %v1555 = vunpack.c.l.b16 %v872
      %v1556 = vunpack.c.h.b16 %v872
      %v1557 = vunpack.c.l.b16 %v873
      %v1558 = vunpack.c.h.b16 %v873
      %v1559 = vunpack.c.l.b16 %v874
      %v1560 = vunpack.c.h.b16 %v874
      %v1561 = vunpack.c.l.b16 %v875
      %v1562 = vunpack.c.h.b16 %v875
      %v1563 = vpack.c.b16 %v1469, %v1467
      %v1564 = vpack.c.b16 %v1470, %v1468
      %v1565 = vpack.c.b16 %v1473, %v1471
      %v1566 = vpack.c.b16 %v1474, %v1472
      %v1567 = vpack.c.b16 %v1477, %v1475
      %v1568 = vpack.c.b16 %v1478, %v1476
      %v1569 = vpack.c.b16 %v1481, %v1479
      %v1570 = vpack.c.b16 %v1482, %v1480
      %v1571 = vpack.c.b16 %v1485, %v1483
      %v1572 = vpack.c.b16 %v1486, %v1484
      %v1573 = vpack.c.b16 %v1489, %v1487
      %v1574 = vpack.c.b16 %v1490, %v1488
      %v1575 = vpack.c.b16 %v1493, %v1491
      %v1576 = vpack.c.b16 %v1494, %v1492
      %v1577 = vpack.c.b16 %v1497, %v1495
      %v1578 = vpack.c.b16 %v1498, %v1496
      %v1579 = vpack.c.b16 %v1501, %v1499
      %v1580 = vpack.c.b16 %v1502, %v1500
      %v1581 = vpack.c.b16 %v1505, %v1503
      %v1582 = vpack.c.b16 %v1506, %v1504
      %v1583 = vpack.c.b16 %v1509, %v1507
      %v1584 = vpack.c.b16 %v1510, %v1508
      %v1585 = vpack.c.b16 %v1513, %v1511
      %v1586 = vpack.c.b16 %v1514, %v1512
      %v1587 = vpack.c.b16 %v1517, %v1515
      %v1588 = vpack.c.b16 %v1518, %v1516
      %v1589 = vpack.c.b16 %v1521, %v1519
      %v1590 = vpack.c.b16 %v1522, %v1520
      %v1591 = vpack.c.b16 %v1525, %v1523
      %v1592 = vpack.c.b16 %v1526, %v1524
      %v1593 = vpack.c.b16 %v1529, %v1527
      %v1594 = vpack.c.b16 %v1530, %v1528
      %v1595 = vpack.c.b16 %v1533, %v1531
      %v1596 = vpack.c.b16 %v1534, %v1532
      %v1597 = vpack.c.b16 %v1537, %v1535
      %v1598 = vpack.c.b16 %v1538, %v1536
      %v1599 = vpack.c.b16 %v1541, %v1539
      %v1600 = vpack.c.b16 %v1542, %v1540
      %v1601 = vpack.c.b16 %v1545, %v1543
      %v1602 = vpack.c.b16 %v1546, %v1544
      %v1603 = vpack.c.b16 %v1549, %v1547
      %v1604 = vpack.c.b16 %v1550, %v1548
      %v1605 = vpack.c.b16 %v1553, %v1551
      %v1606 = vpack.c.b16 %v1554, %v1552
      %v1607 = vpack.c.b16 %v1557, %v1555
      %v1608 = vpack.c.b16 %v1558, %v1556
      %v1609 = vpack.c.b16 %v1561, %v1559
      %v1610 = vpack.c.b16 %v1562, %v1560
      %1659 = vmatprep.subr.bf16.mxu0 %v1564
      %1660 = vmatpush1.bf16.msra.mxu0 %v1563
      %1661 = vmatprep.subr.bf16.mxu0 %v1566
      %1662 = vmatpush1.bf16.msra.mxu0 %v1565
      %1663 = vmatprep.subr.bf16.mxu0 %v1568
      %1664 = vmatpush1.bf16.msra.mxu0 %v1567
      %1665 = vmatprep.subr.bf16.mxu0 %v1570
      %1666 = vmatpush1.bf16.msra.mxu0 %v1569
      %1667 = vmatprep.subr.bf16.mxu0 %v1572
      %1668 = vmatpush1.bf16.msra.mxu0 %v1571
      %1669 = vmatprep.subr.bf16.mxu0 %v1574
      %1670 = vmatpush1.bf16.msra.mxu0 %v1573
      %1671 = vmatprep.subr.bf16.mxu0 %v1576
      %1672 = vmatpush1.bf16.msra.mxu0 %v1575
      %1673 = vmatprep.subr.bf16.mxu0 %v1578
      %1674 = vmatpush1.bf16.msra.mxu0 %v1577
      %1675 = vmatprep.subr.bf16.mxu0 %v1580
      %1676 = vmatpush1.bf16.msra.mxu0 %v1579
      %1677 = vmatprep.subr.bf16.mxu0 %v1582
      %1678 = vmatpush1.bf16.msra.mxu0 %v1581
      %1679 = vmatprep.subr.bf16.mxu0 %v1584
      %1680 = vmatpush1.bf16.msra.mxu0 %v1583
      %1681 = vmatprep.subr.bf16.mxu0 %v1586
      %1682 = vmatpush1.bf16.msra.mxu0 %v1585
      %1683 = vmatprep.subr.bf16.mxu0 %v1588
      %1684 = vmatpush1.bf16.msra.mxu0 %v1587
      %1685 = vmatprep.subr.bf16.mxu0 %v1590
      %1686 = vmatpush1.bf16.msra.mxu0 %v1589
      %1687 = vmatprep.subr.bf16.mxu0 %v1592
      %1688 = vmatpush1.bf16.msra.mxu0 %v1591
      %1689 = vmatprep.subr.bf16.mxu0 %v1594
      %1690 = vmatpush1.bf16.msra.mxu0 %v1593
      %1691 = vmatprep.mubr.bf16.mxu0 %v805
      %1692 = vmatmul.mubr.bf16.gmra.mrb[0].mxu0 %v804
      %v1693 = vpop.f32.mrb[0].mxu0
      %v1694 = vadd.f32 %v1341, %v1693
      %v1695 = vpop.f32.mrb[0].mxu0
      %v1696 = vadd.f32 %v1343, %v1695
      %v1697 = vpop.f32.mrb[0].mxu0
      %v1698 = vadd.f32 %v1345, %v1697
      %v1699 = vpop.f32.mrb[0].mxu0
      %v1700 = vadd.f32 %v1347, %v1699
      %1701 = vmatprep.mubr.bf16.mxu0 %v808
      %1702 = vmatmul.mubr.bf16.gmra.mrb[0].mxu0 %v807
      %v1703 = vpop.f32.mrb[0].mxu0
      %v1704 = vadd.f32 %v1351, %v1703
      %v1705 = vpop.f32.mrb[0].mxu0
      %v1706 = vadd.f32 %v1353, %v1705
      %v1707 = vpop.f32.mrb[0].mxu0
      %v1708 = vadd.f32 %v1355, %v1707
      %v1709 = vpop.f32.mrb[0].mxu0
      %v1710 = vadd.f32 %v1357, %v1709
      %1711 = vmatprep.mubr.bf16.mxu0 %v811
      %1712 = vmatmul.mubr.bf16.gmra.mrb[0].mxu0 %v810
      %v1713 = vpop.f32.mrb[0].mxu0
      %v1714 = vadd.f32 %v1361, %v1713
      %v1715 = vpop.f32.mrb[0].mxu0
      %v1716 = vadd.f32 %v1363, %v1715
      %v1717 = vpop.f32.mrb[0].mxu0
      %v1718 = vadd.f32 %v1365, %v1717
      %v1719 = vpop.f32.mrb[0].mxu0
      %v1720 = vadd.f32 %v1367, %v1719
      %1721 = vmatprep.mubr.bf16.mxu0 %v814
      %1722 = vmatmul.mubr.bf16.gmra.mrb[0].mxu0 %v813
      %v1723 = vpop.f32.mrb[0].mxu0
      %v1724 = vadd.f32 %v1371, %v1723
      %v1725 = vpop.f32.mrb[0].mxu0
      %v1726 = vadd.f32 %v1373, %v1725
      %v1727 = vpop.f32.mrb[0].mxu0
      %v1728 = vadd.f32 %v1375, %v1727
      %v1729 = vpop.f32.mrb[0].mxu0
      %v1730 = vadd.f32 %v1377, %v1729
      %1731 = vmatprep.mubr.bf16.mxu0 %v817
      %1732 = vmatmul.mubr.bf16.gmra.mrb[0].mxu0 %v816
      %v1733 = vpop.f32.mrb[0].mxu0
      %v1734 = vadd.f32 %v1381, %v1733
      %v1735 = vpop.f32.mrb[0].mxu0
      %v1736 = vadd.f32 %v1383, %v1735
      %v1737 = vpop.f32.mrb[0].mxu0
      %v1738 = vadd.f32 %v1385, %v1737
      %v1739 = vpop.f32.mrb[0].mxu0
      %v1740 = vadd.f32 %v1387, %v1739
      %1741 = vmatprep.mubr.bf16.mxu0 %v820
      %1742 = vmatmul.mubr.bf16.gmra.mrb[0].mxu0 %v819
      %v1743 = vpop.f32.mrb[0].mxu0
      %v1744 = vadd.f32 %v1391, %v1743
      %v1745 = vpop.f32.mrb[0].mxu0
      %v1746 = vadd.f32 %v1393, %v1745
      %v1747 = vpop.f32.mrb[0].mxu0
      %v1748 = vadd.f32 %v1395, %v1747
      %v1749 = vpop.f32.mrb[0].mxu0
      %v1750 = vadd.f32 %v1397, %v1749
      %1751 = vmatprep.mubr.bf16.mxu0 %v823
      %1752 = vmatmul.mubr.bf16.gmra.mrb[0].mxu0 %v822
      %v1753 = vpop.f32.mrb[0].mxu0
      %v1754 = vadd.f32 %v1401, %v1753
      %v1755 = vpop.f32.mrb[0].mxu0
      %v1756 = vadd.f32 %v1403, %v1755
      %v1757 = vpop.f32.mrb[0].mxu0
      %v1758 = vadd.f32 %v1405, %v1757
      %v1759 = vpop.f32.mrb[0].mxu0
      %v1760 = vadd.f32 %v1407, %v1759
      %1761 = vmatprep.mubr.bf16.mxu0 %v826
      %1762 = vmatmul.mubr.bf16.gmra.mrb[0].mxu0 %v825
      %v1763 = vpop.f32.mrb[0].mxu0
      %v1764 = vadd.f32 %v1411, %v1763
      %v1765 = vpop.f32.mrb[0].mxu0
      %v1766 = vadd.f32 %v1413, %v1765
      %v1767 = vpop.f32.mrb[0].mxu0
      %v1768 = vadd.f32 %v1415, %v1767
      %v1769 = vpop.f32.mrb[0].mxu0
      %v1770 = vadd.f32 %v1417, %v1769
      %1771 = vdwg.mxu0
      %1772 = vmatprep.subr.bf16.mxu0 %v1596
      %1773 = vmatpush1.bf16.msra.mxu0 %v1595
      %1774 = vmatprep.subr.bf16.mxu0 %v1598
      %1775 = vmatpush1.bf16.msra.mxu0 %v1597
      %1776 = vmatprep.subr.bf16.mxu0 %v1600
      %1777 = vmatpush1.bf16.msra.mxu0 %v1599
      %1778 = vmatprep.subr.bf16.mxu0 %v1602
      %1779 = vmatpush1.bf16.msra.mxu0 %v1601
      %1780 = vmatprep.subr.bf16.mxu0 %v1604
      %1781 = vmatpush1.bf16.msra.mxu0 %v1603
      %1782 = vmatprep.subr.bf16.mxu0 %v1606
      %1783 = vmatpush1.bf16.msra.mxu0 %v1605
      %1784 = vmatprep.subr.bf16.mxu0 %v1608
      %1785 = vmatpush1.bf16.msra.mxu0 %v1607
      %1786 = vmatprep.subr.bf16.mxu0 %v1610
      %1787 = vmatpush1.bf16.msra.mxu0 %v1609
      %1788 = vmatprep.subr.bf16.mxu0 0
      %1789 = vmatpush1.bf16.msra.mxu0 0
      %1790 = vmatprep.subr.bf16.mxu0 0
      %1791 = vmatpush1.bf16.msra.mxu0 0
      %1792 = vmatprep.subr.bf16.mxu0 0
      %1793 = vmatpush1.bf16.msra.mxu0 0
      %1794 = vmatprep.subr.bf16.mxu0 0
      %1795 = vmatpush1.bf16.msra.mxu0 0
      %1796 = vmatprep.subr.bf16.mxu0 0
      %1797 = vmatpush1.bf16.msra.mxu0 0
      %1798 = vmatprep.subr.bf16.mxu0 0
      %1799 = vmatpush1.bf16.msra.mxu0 0
      %1800 = vmatprep.subr.bf16.mxu0 0
      %1801 = vmatpush1.bf16.msra.mxu0 0
      %1802 = vmatprep.subr.bf16.mxu0 0
      %1803 = vmatpush1.bf16.msra.mxu0 0
      %1804 = vmatprep.mubr.bf16.mxu0 0
      %1805 = vmatmul.mubr.bf16.gmra.mrb[0].mxu0 %v806
      %v1806 = vpop.f32.mrb[0].mxu0
      %v1807 = vadd.f32 %v1694, %v1806
      %v1808 = vpop.f32.mrb[0].mxu0
      %v1809 = vadd.f32 %v1696, %v1808
      %v1810 = vpop.f32.mrb[0].mxu0
      %v1811 = vadd.f32 %v1698, %v1810
      %v1812 = vpop.f32.mrb[0].mxu0
      %v1813 = vadd.f32 %v1700, %v1812
      %1814 = vmatprep.mubr.bf16.mxu0 0
      %1815 = vmatmul.mubr.bf16.gmra.mrb[0].mxu0 %v809
      %v1816 = vpop.f32.mrb[0].mxu0
      %v1817 = vadd.f32 %v1704, %v1816
      %v1818 = vpop.f32.mrb[0].mxu0
      %v1819 = vadd.f32 %v1706, %v1818
      %v1820 = vpop.f32.mrb[0].mxu0
      %v1821 = vadd.f32 %v1708, %v1820
      %v1822 = vpop.f32.mrb[0].mxu0
      %v1823 = vadd.f32 %v1710, %v1822
      %1824 = vmatprep.mubr.bf16.mxu0 0
      %1825 = vmatmul.mubr.bf16.gmra.mrb[0].mxu0 %v812
      %v1826 = vpop.f32.mrb[0].mxu0
      %v1827 = vadd.f32 %v1714, %v1826
      %v1828 = vpop.f32.mrb[0].mxu0
      %v1829 = vadd.f32 %v1716, %v1828
      %v1830 = vpop.f32.mrb[0].mxu0
      %v1831 = vadd.f32 %v1718, %v1830
      %v1832 = vpop.f32.mrb[0].mxu0
      %v1833 = vadd.f32 %v1720, %v1832
      %1834 = vmatprep.mubr.bf16.mxu0 0
      %1835 = vmatmul.mubr.bf16.gmra.mrb[0].mxu0 %v815
      %v1836 = vpop.f32.mrb[0].mxu0
      %v1837 = vadd.f32 %v1724, %v1836
      %v1838 = vpop.f32.mrb[0].mxu0
      %v1839 = vadd.f32 %v1726, %v1838
      %v1840 = vpop.f32.mrb[0].mxu0
      %v1841 = vadd.f32 %v1728, %v1840
      %v1842 = vpop.f32.mrb[0].mxu0
      %v1843 = vadd.f32 %v1730, %v1842
      %1844 = vmatprep.mubr.bf16.mxu0 0
      %1845 = vmatmul.mubr.bf16.gmra.mrb[0].mxu0 %v818
      %v1846 = vpop.f32.mrb[0].mxu0
      %v1847 = vadd.f32 %v1734, %v1846
      %v1848 = vpop.f32.mrb[0].mxu0
      %v1849 = vadd.f32 %v1736, %v1848
      %v1850 = vpop.f32.mrb[0].mxu0
      %v1851 = vadd.f32 %v1738, %v1850
      %v1852 = vpop.f32.mrb[0].mxu0
      %v1853 = vadd.f32 %v1740, %v1852
      %1854 = vmatprep.mubr.bf16.mxu0 0
      %1855 = vmatmul.mubr.bf16.gmra.mrb[0].mxu0 %v821
      %v1856 = vpop.f32.mrb[0].mxu0
      %v1857 = vadd.f32 %v1744, %v1856
      %v1858 = vpop.f32.mrb[0].mxu0
      %v1859 = vadd.f32 %v1746, %v1858
      %v1860 = vpop.f32.mrb[0].mxu0
      %v1861 = vadd.f32 %v1748, %v1860
      %v1862 = vpop.f32.mrb[0].mxu0
      %v1863 = vadd.f32 %v1750, %v1862
      %1864 = vmatprep.mubr.bf16.mxu0 0
      %1865 = vmatmul.mubr.bf16.gmra.mrb[0].mxu0 %v824
      %v1866 = vpop.f32.mrb[0].mxu0
      %v1867 = vadd.f32 %v1754, %v1866
      %v1868 = vpop.f32.mrb[0].mxu0
      %v1869 = vadd.f32 %v1756, %v1868
      %v1870 = vpop.f32.mrb[0].mxu0
      %v1871 = vadd.f32 %v1758, %v1870
      %v1872 = vpop.f32.mrb[0].mxu0
      %v1873 = vadd.f32 %v1760, %v1872
      %1874 = vmatprep.mubr.bf16.mxu0 0
      %1875 = vmatmul.mubr.bf16.gmra.mrb[0].mxu0 %v827
      %v1876 = vpop.f32.mrb[0].mxu0
      %v1877 = vadd.f32 %v1764, %v1876
      %v1878 = vpop.f32.mrb[0].mxu0
      %v1879 = vadd.f32 %v1766, %v1878
      %v1880 = vpop.f32.mrb[0].mxu0
      %v1881 = vadd.f32 %v1768, %v1880
      %v1882 = vpop.f32.mrb[0].mxu0
      %v1883 = vadd.f32 %v1770, %v1882
      %1884 = vdwg.mxu0
      %s1885 = sld [smem:[#allocation5 + %s733]]
      %s1886 = smul.u32 %s1885, 3
      %s1887 = smul.addr %s1886, 8
      %s1888 = scalar_lea.vmem [#allocation3], %s1887
      %v1889 = vld [vmem:[%s1888] sm:$0xff]
      %v1890 = vld [vmem:[%s1888 + $0x8] sm:$0xff]
      %v1891 = vld [vmem:[%s1888 + $0x10] sm:$0xff]
      %v1892 = vld [vmem:[%s1888 + $0x18] sm:$0xff]
      %v1893 = vld [vmem:[%s1888 + $0x20] sm:$0xff]
      %v1894 = vld [vmem:[%s1888 + $0x28] sm:$0xff]
      %v1895 = vld [vmem:[%s1888 + $0x30] sm:$0xff]
      %v1896 = vld [vmem:[%s1888 + $0x38] sm:$0xff]
      %v1897 = vld [vmem:[%s1888 + $0x40] sm:$0xff]
      %v1898 = vld [vmem:[%s1888 + $0x48] sm:$0xff]
      %v1899 = vld [vmem:[%s1888 + $0x50] sm:$0xff]
      %v1900 = vld [vmem:[%s1888 + $0x58] sm:$0xff]
      %v1901 = vld [vmem:[%s1888 + $0x60] sm:$0xff]
      %v1902 = vld [vmem:[%s1888 + $0x68] sm:$0xff]
      %v1903 = vld [vmem:[%s1888 + $0x70] sm:$0xff]
      %v1904 = vld [vmem:[%s1888 + $0x78] sm:$0xff]
      %v1905 = vld [vmem:[%s1888 + $0x80] sm:$0xff]
      %v1906 = vld [vmem:[%s1888 + $0x88] sm:$0xff]
      %v1907 = vld [vmem:[%s1888 + $0x90] sm:$0xff]
      %v1908 = vld [vmem:[%s1888 + $0x98] sm:$0xff]
      %v1909 = vld [vmem:[%s1888 + $0xa0] sm:$0xff]
      %v1910 = vld [vmem:[%s1888 + $0xa8] sm:$0xff]
      %v1911 = vld [vmem:[%s1888 + $0xb0] sm:$0xff]
      %v1912 = vld [vmem:[%s1888 + $0xb8] sm:$0xff]
      %s1913 = scalar_lea.vmem %s470, 768
      %v1914 = vld [vmem:[%s1913] sm:$0xff]
      %v1915 = vld [vmem:[%s1913 + $0x8] sm:$0xff]
      %v1916 = vld [vmem:[%s1913 + $0x10] sm:$0xff]
      %v1917 = vld [vmem:[%s1913 + $0x18] sm:$0xff]
      %v1918 = vld [vmem:[%s1913 + $0x20] sm:$0xff]
      %v1919 = vld [vmem:[%s1913 + $0x28] sm:$0xff]
      %v1920 = vld [vmem:[%s1913 + $0x30] sm:$0xff]
      %v1921 = vld [vmem:[%s1913 + $0x38] sm:$0xff]
      %v1922 = vld [vmem:[%s1913 + $0x40] sm:$0xff]
      %v1923 = vld [vmem:[%s1913 + $0x48] sm:$0xff]
      %v1924 = vld [vmem:[%s1913 + $0x50] sm:$0xff]
      %v1925 = vld [vmem:[%s1913 + $0x58] sm:$0xff]
      %v1926 = vld [vmem:[%s1913 + $0x60] sm:$0xff]
      %v1927 = vld [vmem:[%s1913 + $0x68] sm:$0xff]
      %v1928 = vld [vmem:[%s1913 + $0x70] sm:$0xff]
      %v1929 = vld [vmem:[%s1913 + $0x78] sm:$0xff]
      %v1930 = vld [vmem:[%s1913 + $0x80] sm:$0xff]
      %v1931 = vld [vmem:[%s1913 + $0x88] sm:$0xff]
      %v1932 = vld [vmem:[%s1913 + $0x90] sm:$0xff]
      %v1933 = vld [vmem:[%s1913 + $0x98] sm:$0xff]
      %v1934 = vld [vmem:[%s1913 + $0xa0] sm:$0xff]
      %v1935 = vld [vmem:[%s1913 + $0xa8] sm:$0xff]
      %v1936 = vld [vmem:[%s1913 + $0xb0] sm:$0xff]
      %v1937 = vld [vmem:[%s1913 + $0xb8] sm:$0xff]
      %v1938 = vld [vmem:[%s1913 + $0xc0] sm:$0xff]
      %v1939 = vld [vmem:[%s1913 + $0xc8] sm:$0xff]
      %v1940 = vld [vmem:[%s1913 + $0xd0] sm:$0xff]
      %v1941 = vld [vmem:[%s1913 + $0xd8] sm:$0xff]
      %v1942 = vld [vmem:[%s1913 + $0xe0] sm:$0xff]
      %v1943 = vld [vmem:[%s1913 + $0xe8] sm:$0xff]
      %v1944 = vld [vmem:[%s1913 + $0xf0] sm:$0xff]
      %v1945 = vld [vmem:[%s1913 + $0xf8] sm:$0xff]
      %v1946 = vld [vmem:[%s1913 + $0x100] sm:$0xff]
      %v1947 = vld [vmem:[%s1913 + $0x108] sm:$0xff]
      %v1948 = vld [vmem:[%s1913 + $0x110] sm:$0xff]
      %v1949 = vld [vmem:[%s1913 + $0x118] sm:$0xff]
      %v1950 = vld [vmem:[%s1913 + $0x120] sm:$0xff]
      %v1951 = vld [vmem:[%s1913 + $0x128] sm:$0xff]
      %v1952 = vld [vmem:[%s1913 + $0x130] sm:$0xff]
      %v1953 = vld [vmem:[%s1913 + $0x138] sm:$0xff]
      %v1954 = vld [vmem:[%s1913 + $0x140] sm:$0xff]
      %v1955 = vld [vmem:[%s1913 + $0x148] sm:$0xff]
      %v1956 = vld [vmem:[%s1913 + $0x150] sm:$0xff]
      %v1957 = vld [vmem:[%s1913 + $0x158] sm:$0xff]
      %v1958 = vld [vmem:[%s1913 + $0x160] sm:$0xff]
      %v1959 = vld [vmem:[%s1913 + $0x168] sm:$0xff]
      %v1960 = vld [vmem:[%s1913 + $0x170] sm:$0xff]
      %v1961 = vld [vmem:[%s1913 + $0x178] sm:$0xff]
      %v2010 = vunpack.c.l.b16 %v1914
      %v2011 = vunpack.c.h.b16 %v1914
      %v2012 = vunpack.c.l.b16 %v1915
      %v2013 = vunpack.c.h.b16 %v1915
      %v2014 = vunpack.c.l.b16 %v1916
      %v2015 = vunpack.c.h.b16 %v1916
      %v2016 = vunpack.c.l.b16 %v1917
      %v2017 = vunpack.c.h.b16 %v1917
      %v2018 = vunpack.c.l.b16 %v1918
      %v2019 = vunpack.c.h.b16 %v1918
      %v2020 = vunpack.c.l.b16 %v1919
      %v2021 = vunpack.c.h.b16 %v1919
      %v2022 = vunpack.c.l.b16 %v1920
      %v2023 = vunpack.c.h.b16 %v1920
      %v2024 = vunpack.c.l.b16 %v1921
      %v2025 = vunpack.c.h.b16 %v1921
      %v2026 = vunpack.c.l.b16 %v1922
      %v2027 = vunpack.c.h.b16 %v1922
      %v2028 = vunpack.c.l.b16 %v1923
      %v2029 = vunpack.c.h.b16 %v1923
      %v2030 = vunpack.c.l.b16 %v1924
      %v2031 = vunpack.c.h.b16 %v1924
      %v2032 = vunpack.c.l.b16 %v1925
      %v2033 = vunpack.c.h.b16 %v1925
      %v2034 = vunpack.c.l.b16 %v1926
      %v2035 = vunpack.c.h.b16 %v1926
      %v2036 = vunpack.c.l.b16 %v1927
      %v2037 = vunpack.c.h.b16 %v1927
      %v2038 = vunpack.c.l.b16 %v1928
      %v2039 = vunpack.c.h.b16 %v1928
      %v2040 = vunpack.c.l.b16 %v1929
      %v2041 = vunpack.c.h.b16 %v1929
      %v2042 = vunpack.c.l.b16 %v1930
      %v2043 = vunpack.c.h.b16 %v1930
      %v2044 = vunpack.c.l.b16 %v1931
      %v2045 = vunpack.c.h.b16 %v1931
      %v2046 = vunpack.c.l.b16 %v1932
      %v2047 = vunpack.c.h.b16 %v1932
      %v2048 = vunpack.c.l.b16 %v1933
      %v2049 = vunpack.c.h.b16 %v1933
      %v2050 = vunpack.c.l.b16 %v1934
      %v2051 = vunpack.c.h.b16 %v1934
      %v2052 = vunpack.c.l.b16 %v1935
      %v2053 = vunpack.c.h.b16 %v1935
      %v2054 = vunpack.c.l.b16 %v1936
      %v2055 = vunpack.c.h.b16 %v1936
      %v2056 = vunpack.c.l.b16 %v1937
      %v2057 = vunpack.c.h.b16 %v1937
      %v2058 = vunpack.c.l.b16 %v1938
      %v2059 = vunpack.c.h.b16 %v1938
      %v2060 = vunpack.c.l.b16 %v1939
      %v2061 = vunpack.c.h.b16 %v1939
      %v2062 = vunpack.c.l.b16 %v1940
      %v2063 = vunpack.c.h.b16 %v1940
      %v2064 = vunpack.c.l.b16 %v1941
      %v2065 = vunpack.c.h.b16 %v1941
      %v2066 = vunpack.c.l.b16 %v1942
      %v2067 = vunpack.c.h.b16 %v1942
      %v2068 = vunpack.c.l.b16 %v1943
      %v2069 = vunpack.c.h.b16 %v1943
      %v2070 = vunpack.c.l.b16 %v1944
      %v2071 = vunpack.c.h.b16 %v1944
      %v2072 = vunpack.c.l.b16 %v1945
      %v2073 = vunpack.c.h.b16 %v1945
      %v2074 = vunpack.c.l.b16 %v1946
      %v2075 = vunpack.c.h.b16 %v1946
      %v2076 = vunpack.c.l.b16 %v1947
      %v2077 = vunpack.c.h.b16 %v1947
      %v2078 = vunpack.c.l.b16 %v1948
      %v2079 = vunpack.c.h.b16 %v1948
      %v2080 = vunpack.c.l.b16 %v1949
      %v2081 = vunpack.c.h.b16 %v1949
      %v2082 = vunpack.c.l.b16 %v1950
      %v2083 = vunpack.c.h.b16 %v1950
      %v2084 = vunpack.c.l.b16 %v1951
      %v2085 = vunpack.c.h.b16 %v1951
      %v2086 = vunpack.c.l.b16 %v1952
      %v2087 = vunpack.c.h.b16 %v1952
      %v2088 = vunpack.c.l.b16 %v1953
      %v2089 = vunpack.c.h.b16 %v1953
      %v2090 = vunpack.c.l.b16 %v1954
      %v2091 = vunpack.c.h.b16 %v1954
      %v2092 = vunpack.c.l.b16 %v1955
      %v2093 = vunpack.c.h.b16 %v1955
      %v2094 = vunpack.c.l.b16 %v1956
      %v2095 = vunpack.c.h.b16 %v1956
      %v2096 = vunpack.c.l.b16 %v1957
      %v2097 = vunpack.c.h.b16 %v1957
      %v2098 = vunpack.c.l.b16 %v1958
      %v2099 = vunpack.c.h.b16 %v1958
      %v2100 = vunpack.c.l.b16 %v1959
      %v2101 = vunpack.c.h.b16 %v1959
      %v2102 = vunpack.c.l.b16 %v1960
      %v2103 = vunpack.c.h.b16 %v1960
      %v2104 = vunpack.c.l.b16 %v1961
      %v2105 = vunpack.c.h.b16 %v1961
      %v2106 = vpack.c.b16 %v2012, %v2010
      %v2107 = vpack.c.b16 %v2013, %v2011
      %v2108 = vpack.c.b16 %v2016, %v2014
      %v2109 = vpack.c.b16 %v2017, %v2015
      %v2110 = vpack.c.b16 %v2020, %v2018
      %v2111 = vpack.c.b16 %v2021, %v2019
      %v2112 = vpack.c.b16 %v2024, %v2022
      %v2113 = vpack.c.b16 %v2025, %v2023
      %v2114 = vpack.c.b16 %v2028, %v2026
      %v2115 = vpack.c.b16 %v2029, %v2027
      %v2116 = vpack.c.b16 %v2032, %v2030
      %v2117 = vpack.c.b16 %v2033, %v2031
      %v2118 = vpack.c.b16 %v2036, %v2034
      %v2119 = vpack.c.b16 %v2037, %v2035
      %v2120 = vpack.c.b16 %v2040, %v2038
      %v2121 = vpack.c.b16 %v2041, %v2039
      %v2122 = vpack.c.b16 %v2044, %v2042
      %v2123 = vpack.c.b16 %v2045, %v2043
      %v2124 = vpack.c.b16 %v2048, %v2046
      %v2125 = vpack.c.b16 %v2049, %v2047
      %v2126 = vpack.c.b16 %v2052, %v2050
      %v2127 = vpack.c.b16 %v2053, %v2051
      %v2128 = vpack.c.b16 %v2056, %v2054
      %v2129 = vpack.c.b16 %v2057, %v2055
      %v2130 = vpack.c.b16 %v2060, %v2058
      %v2131 = vpack.c.b16 %v2061, %v2059
      %v2132 = vpack.c.b16 %v2064, %v2062
      %v2133 = vpack.c.b16 %v2065, %v2063
      %v2134 = vpack.c.b16 %v2068, %v2066
      %v2135 = vpack.c.b16 %v2069, %v2067
      %v2136 = vpack.c.b16 %v2072, %v2070
      %v2137 = vpack.c.b16 %v2073, %v2071
      %v2138 = vpack.c.b16 %v2076, %v2074
      %v2139 = vpack.c.b16 %v2077, %v2075
      %v2140 = vpack.c.b16 %v2080, %v2078
      %v2141 = vpack.c.b16 %v2081, %v2079
      %v2142 = vpack.c.b16 %v2084, %v2082
      %v2143 = vpack.c.b16 %v2085, %v2083
      %v2144 = vpack.c.b16 %v2088, %v2086
      %v2145 = vpack.c.b16 %v2089, %v2087
      %v2146 = vpack.c.b16 %v2092, %v2090
      %v2147 = vpack.c.b16 %v2093, %v2091
      %v2148 = vpack.c.b16 %v2096, %v2094
      %v2149 = vpack.c.b16 %v2097, %v2095
      %v2150 = vpack.c.b16 %v2100, %v2098
      %v2151 = vpack.c.b16 %v2101, %v2099
      %v2152 = vpack.c.b16 %v2104, %v2102
      %v2153 = vpack.c.b16 %v2105, %v2103
      %2202 = vmatprep.subr.bf16.mxu0 %v2107
      %2203 = vmatpush1.bf16.msra.mxu0 %v2106
      %2204 = vmatprep.subr.bf16.mxu0 %v2109
      %2205 = vmatpush1.bf16.msra.mxu0 %v2108
      %2206 = vmatprep.subr.bf16.mxu0 %v2111
      %2207 = vmatpush1.bf16.msra.mxu0 %v2110
      %2208 = vmatprep.subr.bf16.mxu0 %v2113
      %2209 = vmatpush1.bf16.msra.mxu0 %v2112
      %2210 = vmatprep.subr.bf16.mxu0 %v2115
      %2211 = vmatpush1.bf16.msra.mxu0 %v2114
      %2212 = vmatprep.subr.bf16.mxu0 %v2117
      %2213 = vmatpush1.bf16.msra.mxu0 %v2116
      %2214 = vmatprep.subr.bf16.mxu0 %v2119
      %2215 = vmatpush1.bf16.msra.mxu0 %v2118
      %2216 = vmatprep.subr.bf16.mxu0 %v2121
      %2217 = vmatpush1.bf16.msra.mxu0 %v2120
      %2218 = vmatprep.subr.bf16.mxu0 %v2123
      %2219 = vmatpush1.bf16.msra.mxu0 %v2122
      %2220 = vmatprep.subr.bf16.mxu0 %v2125
      %2221 = vmatpush1.bf16.msra.mxu0 %v2124
      %2222 = vmatprep.subr.bf16.mxu0 %v2127
      %2223 = vmatpush1.bf16.msra.mxu0 %v2126
      %2224 = vmatprep.subr.bf16.mxu0 %v2129
      %2225 = vmatpush1.bf16.msra.mxu0 %v2128
      %2226 = vmatprep.subr.bf16.mxu0 %v2131
      %2227 = vmatpush1.bf16.msra.mxu0 %v2130
      %2228 = vmatprep.subr.bf16.mxu0 %v2133
      %2229 = vmatpush1.bf16.msra.mxu0 %v2132
      %2230 = vmatprep.subr.bf16.mxu0 %v2135
      %2231 = vmatpush1.bf16.msra.mxu0 %v2134
      %2232 = vmatprep.subr.bf16.mxu0 %v2137
      %2233 = vmatpush1.bf16.msra.mxu0 %v2136
      %2234 = vmatprep.mubr.bf16.mxu0 %v1890
      %2235 = vmatmul.mubr.bf16.gmra.mrb[0].mxu0 %v1889
      %v2236 = vpop.f32.mrb[0].mxu0
      %v2237 = vadd.f32 0.0, %v2236
      %v2238 = vpop.f32.mrb[0].mxu0
      %v2239 = vadd.f32 0.0, %v2238
      %v2240 = vpop.f32.mrb[0].mxu0
      %v2241 = vadd.f32 0.0, %v2240
      %v2242 = vpop.f32.mrb[0].mxu0
      %v2243 = vadd.f32 0.0, %v2242
      %2244 = vmatprep.mubr.bf16.mxu0 %v1893
      %2245 = vmatmul.mubr.bf16.gmra.mrb[0].mxu0 %v1892
      %v2246 = vpop.f32.mrb[0].mxu0
      %v2247 = vadd.f32 0.0, %v2246
      %v2248 = vpop.f32.mrb[0].mxu0
      %v2249 = vadd.f32 0.0, %v2248
      %v2250 = vpop.f32.mrb[0].mxu0
      %v2251 = vadd.f32 0.0, %v2250
      %v2252 = vpop.f32.mrb[0].mxu0
      %v2253 = vadd.f32 0.0, %v2252
      %2254 = vmatprep.mubr.bf16.mxu0 %v1896
      %2255 = vmatmul.mubr.bf16.gmra.mrb[0].mxu0 %v1895
      %v2256 = vpop.f32.mrb[0].mxu0
      %v2257 = vadd.f32 0.0, %v2256
      %v2258 = vpop.f32.mrb[0].mxu0
      %v2259 = vadd.f32 0.0, %v2258
      %v2260 = vpop.f32.mrb[0].mxu0
      %v2261 = vadd.f32 0.0, %v2260
      %v2262 = vpop.f32.mrb[0].mxu0
      %v2263 = vadd.f32 0.0, %v2262
      %2264 = vmatprep.mubr.bf16.mxu0 %v1899
      %2265 = vmatmul.mubr.bf16.gmra.mrb[0].mxu0 %v1898
      %v2266 = vpop.f32.mrb[0].mxu0
      %v2267 = vadd.f32 0.0, %v2266
      %v2268 = vpop.f32.mrb[0].mxu0
      %v2269 = vadd.f32 0.0, %v2268
      %v2270 = vpop.f32.mrb[0].mxu0
      %v2271 = vadd.f32 0.0, %v2270
      %v2272 = vpop.f32.mrb[0].mxu0
      %v2273 = vadd.f32 0.0, %v2272
      %2274 = vmatprep.mubr.bf16.mxu0 %v1902
      %2275 = vmatmul.mubr.bf16.gmra.mrb[0].mxu0 %v1901
      %v2276 = vpop.f32.mrb[0].mxu0
      %v2277 = vadd.f32 0.0, %v2276
      %v2278 = vpop.f32.mrb[0].mxu0
      %v2279 = vadd.f32 0.0, %v2278
      %v2280 = vpop.f32.mrb[0].mxu0
      %v2281 = vadd.f32 0.0, %v2280
      %v2282 = vpop.f32.mrb[0].mxu0
      %v2283 = vadd.f32 0.0, %v2282
      %2284 = vmatprep.mubr.bf16.mxu0 %v1905
      %2285 = vmatmul.mubr.bf16.gmra.mrb[0].mxu0 %v1904
      %v2286 = vpop.f32.mrb[0].mxu0
      %v2287 = vadd.f32 0.0, %v2286
      %v2288 = vpop.f32.mrb[0].mxu0
      %v2289 = vadd.f32 0.0, %v2288
      %v2290 = vpop.f32.mrb[0].mxu0
      %v2291 = vadd.f32 0.0, %v2290
      %v2292 = vpop.f32.mrb[0].mxu0
      %v2293 = vadd.f32 0.0, %v2292
      %2294 = vmatprep.mubr.bf16.mxu0 %v1908
      %2295 = vmatmul.mubr.bf16.gmra.mrb[0].mxu0 %v1907
      %v2296 = vpop.f32.mrb[0].mxu0
      %v2297 = vadd.f32 0.0, %v2296
      %v2298 = vpop.f32.mrb[0].mxu0
      %v2299 = vadd.f32 0.0, %v2298
      %v2300 = vpop.f32.mrb[0].mxu0
      %v2301 = vadd.f32 0.0, %v2300
      %v2302 = vpop.f32.mrb[0].mxu0
      %v2303 = vadd.f32 0.0, %v2302
      %2304 = vmatprep.mubr.bf16.mxu0 %v1911
      %2305 = vmatmul.mubr.bf16.gmra.mrb[0].mxu0 %v1910
      %v2306 = vpop.f32.mrb[0].mxu0
      %v2307 = vadd.f32 0.0, %v2306
      %v2308 = vpop.f32.mrb[0].mxu0
      %v2309 = vadd.f32 0.0, %v2308
      %v2310 = vpop.f32.mrb[0].mxu0
      %v2311 = vadd.f32 0.0, %v2310
      %v2312 = vpop.f32.mrb[0].mxu0
      %v2313 = vadd.f32 0.0, %v2312
      %2314 = vdwg.mxu0
      %2315 = vmatprep.subr.bf16.mxu0 %v2139
      %2316 = vmatpush1.bf16.msra.mxu0 %v2138
      %2317 = vmatprep.subr.bf16.mxu0 %v2141
      %2318 = vmatpush1.bf16.msra.mxu0 %v2140
      %2319 = vmatprep.subr.bf16.mxu0 %v2143
      %2320 = vmatpush1.bf16.msra.mxu0 %v2142
      %2321 = vmatprep.subr.bf16.mxu0 %v2145
      %2322 = vmatpush1.bf16.msra.mxu0 %v2144
      %2323 = vmatprep.subr.bf16.mxu0 %v2147
      %2324 = vmatpush1.bf16.msra.mxu0 %v2146
      %2325 = vmatprep.subr.bf16.mxu0 %v2149
      %2326 = vmatpush1.bf16.msra.mxu0 %v2148
      %2327 = vmatprep.subr.bf16.mxu0 %v2151
      %2328 = vmatpush1.bf16.msra.mxu0 %v2150
      %2329 = vmatprep.subr.bf16.mxu0 %v2153
      %2330 = vmatpush1.bf16.msra.mxu0 %v2152
      %2331 = vmatprep.subr.bf16.mxu0 0
      %2332 = vmatpush1.bf16.msra.mxu0 0
      %2333 = vmatprep.subr.bf16.mxu0 0
      %2334 = vmatpush1.bf16.msra.mxu0 0
      %2335 = vmatprep.subr.bf16.mxu0 0
      %2336 = vmatpush1.bf16.msra.mxu0 0
      %2337 = vmatprep.subr.bf16.mxu0 0
      %2338 = vmatpush1.bf16.msra.mxu0 0
      %2339 = vmatprep.subr.bf16.mxu0 0
      %2340 = vmatpush1.bf16.msra.mxu0 0
      %2341 = vmatprep.subr.bf16.mxu0 0
      %2342 = vmatpush1.bf16.msra.mxu0 0
      %2343 = vmatprep.subr.bf16.mxu0 0
      %2344 = vmatpush1.bf16.msra.mxu0 0
      %2345 = vmatprep.subr.bf16.mxu0 0
      %2346 = vmatpush1.bf16.msra.mxu0 0
      %2347 = vmatprep.mubr.bf16.mxu0 0
      %2348 = vmatmul.mubr.bf16.gmra.mrb[0].mxu0 %v1891
      %v2349 = vpop.f32.mrb[0].mxu0
      %v2350 = vadd.f32 %v2237, %v2349
      %v2351 = vpop.f32.mrb[0].mxu0
      %v2352 = vadd.f32 %v2239, %v2351
      %v2353 = vpop.f32.mrb[0].mxu0
      %v2354 = vadd.f32 %v2241, %v2353
      %v2355 = vpop.f32.mrb[0].mxu0
      %v2356 = vadd.f32 %v2243, %v2355
      %2357 = vmatprep.mubr.bf16.mxu0 0
      %2358 = vmatmul.mubr.bf16.gmra.mrb[0].mxu0 %v1894
      %v2359 = vpop.f32.mrb[0].mxu0
      %v2360 = vadd.f32 %v2247, %v2359
      %v2361 = vpop.f32.mrb[0].mxu0
      %v2362 = vadd.f32 %v2249, %v2361
      %v2363 = vpop.f32.mrb[0].mxu0
      %v2364 = vadd.f32 %v2251, %v2363
      %v2365 = vpop.f32.mrb[0].mxu0
      %v2366 = vadd.f32 %v2253, %v2365
      %2367 = vmatprep.mubr.bf16.mxu0 0
      %2368 = vmatmul.mubr.bf16.gmra.mrb[0].mxu0 %v1897
      %v2369 = vpop.f32.mrb[0].mxu0
      %v2370 = vadd.f32 %v2257, %v2369
      %v2371 = vpop.f32.mrb[0].mxu0
      %v2372 = vadd.f32 %v2259, %v2371
      %v2373 = vpop.f32.mrb[0].mxu0
      %v2374 = vadd.f32 %v2261, %v2373
      %v2375 = vpop.f32.mrb[0].mxu0
      %v2376 = vadd.f32 %v2263, %v2375
      %2377 = vmatprep.mubr.bf16.mxu0 0
      %2378 = vmatmul.mubr.bf16.gmra.mrb[0].mxu0 %v1900
      %v2379 = vpop.f32.mrb[0].mxu0
      %v2380 = vadd.f32 %v2267, %v2379
      %v2381 = vpop.f32.mrb[0].mxu0
      %v2382 = vadd.f32 %v2269, %v2381
      %v2383 = vpop.f32.mrb[0].mxu0
      %v2384 = vadd.f32 %v2271, %v2383
      %v2385 = vpop.f32.mrb[0].mxu0
      %v2386 = vadd.f32 %v2273, %v2385
      %2387 = vmatprep.mubr.bf16.mxu0 0
      %2388 = vmatmul.mubr.bf16.gmra.mrb[0].mxu0 %v1903
      %v2389 = vpop.f32.mrb[0].mxu0
      %v2390 = vadd.f32 %v2277, %v2389
      %v2391 = vpop.f32.mrb[0].mxu0
      %v2392 = vadd.f32 %v2279, %v2391
      %v2393 = vpop.f32.mrb[0].mxu0
      %v2394 = vadd.f32 %v2281, %v2393
      %v2395 = vpop.f32.mrb[0].mxu0
      %v2396 = vadd.f32 %v2283, %v2395
      %2397 = vmatprep.mubr.bf16.mxu0 0
      %2398 = vmatmul.mubr.bf16.gmra.mrb[0].mxu0 %v1906
      %v2399 = vpop.f32.mrb[0].mxu0
      %v2400 = vadd.f32 %v2287, %v2399
      %v2401 = vpop.f32.mrb[0].mxu0
      %v2402 = vadd.f32 %v2289, %v2401
      %v2403 = vpop.f32.mrb[0].mxu0
      %v2404 = vadd.f32 %v2291, %v2403
      %v2405 = vpop.f32.mrb[0].mxu0
      %v2406 = vadd.f32 %v2293, %v2405
      %2407 = vmatprep.mubr.bf16.mxu0 0
      %2408 = vmatmul.mubr.bf16.gmra.mrb[0].mxu0 %v1909
      %v2409 = vpop.f32.mrb[0].mxu0
      %v2410 = vadd.f32 %v2297, %v2409
      %v2411 = vpop.f32.mrb[0].mxu0
      %v2412 = vadd.f32 %v2299, %v2411
      %v2413 = vpop.f32.mrb[0].mxu0
      %v2414 = vadd.f32 %v2301, %v2413
      %v2415 = vpop.f32.mrb[0].mxu0
      %v2416 = vadd.f32 %v2303, %v2415
      %2417 = vmatprep.mubr.bf16.mxu0 0
      %2418 = vmatmul.mubr.bf16.gmra.mrb[0].mxu0 %v1912
      %v2419 = vpop.f32.mrb[0].mxu0
      %v2420 = vadd.f32 %v2307, %v2419
      %v2421 = vpop.f32.mrb[0].mxu0
      %v2422 = vadd.f32 %v2309, %v2421
      %v2423 = vpop.f32.mrb[0].mxu0
      %v2424 = vadd.f32 %v2311, %v2423
      %v2425 = vpop.f32.mrb[0].mxu0
      %v2426 = vadd.f32 %v2313, %v2425
      %2427 = vdwg.mxu0
      %v2428 = vadd.f32 %v1807, %v2350
      %v2429 = vadd.f32 %v1809, %v2352
      %v2430 = vadd.f32 %v1811, %v2354
      %v2431 = vadd.f32 %v1813, %v2356
      %v2432 = vadd.f32 %v1817, %v2360
      %v2433 = vadd.f32 %v1819, %v2362
      %v2434 = vadd.f32 %v1821, %v2364
      %v2435 = vadd.f32 %v1823, %v2366
      %v2436 = vadd.f32 %v1827, %v2370
      %v2437 = vadd.f32 %v1829, %v2372
      %v2438 = vadd.f32 %v1831, %v2374
      %v2439 = vadd.f32 %v1833, %v2376
      %v2440 = vadd.f32 %v1837, %v2380
      %v2441 = vadd.f32 %v1839, %v2382
      %v2442 = vadd.f32 %v1841, %v2384
      %v2443 = vadd.f32 %v1843, %v2386
      %v2444 = vadd.f32 %v1847, %v2390
      %v2445 = vadd.f32 %v1849, %v2392
      %v2446 = vadd.f32 %v1851, %v2394
      %v2447 = vadd.f32 %v1853, %v2396
      %v2448 = vadd.f32 %v1857, %v2400
      %v2449 = vadd.f32 %v1859, %v2402
      %v2450 = vadd.f32 %v1861, %v2404
      %v2451 = vadd.f32 %v1863, %v2406
      %v2452 = vadd.f32 %v1867, %v2410
      %v2453 = vadd.f32 %v1869, %v2412
      %v2454 = vadd.f32 %v1871, %v2414
      %v2455 = vadd.f32 %v1873, %v2416
      %v2456 = vadd.f32 %v1877, %v2420
      %v2457 = vadd.f32 %v1879, %v2422
      %v2458 = vadd.f32 %v1881, %v2424
      %v2459 = vadd.f32 %v1883, %v2426
      %v2460 = vld [vmem:[%s474] sm:$0x3]
      %v2462 = vlaneseq
      %v2463 = vshrl.u32 %v2462, 7
      %v2464 = vsub.s32 0, %v2463
      %v2465 = vrot.slane %v2460, %v2464
      %v2466 = vlaneseq
      %v2467 = vshrl.u32 %v2466, 7
      %v2468 = vsub.s32 1, %v2467
      %v2469 = vrot.slane %v2460, %v2468
      %v2472 = vadd.f32 %v2428, %v2465
      %v2473 = vadd.f32 %v2429, %v2469
      %v2474 = vadd.f32 %v2430, %v2465
      %v2475 = vadd.f32 %v2431, %v2469
      %v2476 = vadd.f32 %v2432, %v2465
      %v2477 = vadd.f32 %v2433, %v2469
      %v2478 = vadd.f32 %v2434, %v2465
      %v2479 = vadd.f32 %v2435, %v2469
      %v2480 = vadd.f32 %v2436, %v2465
      %v2481 = vadd.f32 %v2437, %v2469
      %v2482 = vadd.f32 %v2438, %v2465
      %v2483 = vadd.f32 %v2439, %v2469
      %v2484 = vadd.f32 %v2440, %v2465
      %v2485 = vadd.f32 %v2441, %v2469
      %v2486 = vadd.f32 %v2442, %v2465
      %v2487 = vadd.f32 %v2443, %v2469
      %v2488 = vadd.f32 %v2444, %v2465
      %v2489 = vadd.f32 %v2445, %v2469
      %v2490 = vadd.f32 %v2446, %v2465
      %v2491 = vadd.f32 %v2447, %v2469
      %v2492 = vadd.f32 %v2448, %v2465
      %v2493 = vadd.f32 %v2449, %v2469
      %v2494 = vadd.f32 %v2450, %v2465
      %v2495 = vadd.f32 %v2451, %v2469
      %v2496 = vadd.f32 %v2452, %v2465
      %v2497 = vadd.f32 %v2453, %v2469
      %v2498 = vadd.f32 %v2454, %v2465
      %v2499 = vadd.f32 %v2455, %v2469
      %v2500 = vadd.f32 %v2456, %v2465
      %v2501 = vadd.f32 %v2457, %v2469
      %v2502 = vadd.f32 %v2458, %v2465
      %v2503 = vadd.f32 %v2459, %v2469
      %v2504 = vld [vmem:[%s465] sm:$0x3]
      %v2506 = vlaneseq
      %v2507 = vshrl.u32 %v2506, 7
      %v2508 = vsub.s32 0, %v2507
      %v2509 = vrot.slane %v2504, %v2508
      %v2510 = vlaneseq
      %v2511 = vshrl.u32 %v2510, 7
      %v2512 = vsub.s32 1, %v2511
      %v2513 = vrot.slane %v2504, %v2512
      %v2516 = vadd.f32 %v2472, %v2509
      %v2517 = vadd.f32 %v2473, %v2513
      %v2518 = vadd.f32 %v2474, %v2509
      %v2519 = vadd.f32 %v2475, %v2513
      %v2520 = vadd.f32 %v2476, %v2509
      %v2521 = vadd.f32 %v2477, %v2513
      %v2522 = vadd.f32 %v2478, %v2509
      %v2523 = vadd.f32 %v2479, %v2513
      %v2524 = vadd.f32 %v2480, %v2509
      %v2525 = vadd.f32 %v2481, %v2513
      %v2526 = vadd.f32 %v2482, %v2509
      %v2527 = vadd.f32 %v2483, %v2513
      %v2528 = vadd.f32 %v2484, %v2509
      %v2529 = vadd.f32 %v2485, %v2513
      %v2530 = vadd.f32 %v2486, %v2509
      %v2531 = vadd.f32 %v2487, %v2513
      %v2532 = vadd.f32 %v2488, %v2509
      %v2533 = vadd.f32 %v2489, %v2513
      %v2534 = vadd.f32 %v2490, %v2509
      %v2535 = vadd.f32 %v2491, %v2513
      %v2536 = vadd.f32 %v2492, %v2509
      %v2537 = vadd.f32 %v2493, %v2513
      %v2538 = vadd.f32 %v2494, %v2509
      %v2539 = vadd.f32 %v2495, %v2513
      %v2540 = vadd.f32 %v2496, %v2509
      %v2541 = vadd.f32 %v2497, %v2513
      %v2542 = vadd.f32 %v2498, %v2509
      %v2543 = vadd.f32 %v2499, %v2513
      %v2544 = vadd.f32 %v2500, %v2509
      %v2545 = vadd.f32 %v2501, %v2513
      %v2546 = vadd.f32 %v2502, %v2509
      %v2547 = vadd.f32 %v2503, %v2513
      %v2548 = vld [vmem:[%s461] sm:$0xff]
      %v2549 = vld [vmem:[%s461 + $0x8] sm:$0xff]
      %v2550 = vld [vmem:[%s461 + $0x10] sm:$0xff]
      %v2551 = vld [vmem:[%s461 + $0x18] sm:$0xff]
      %v2552 = vld [vmem:[%s461 + $0x20] sm:$0xff]
      %v2553 = vld [vmem:[%s461 + $0x28] sm:$0xff]
      %v2554 = vld [vmem:[%s461 + $0x30] sm:$0xff]
      %v2555 = vld [vmem:[%s461 + $0x38] sm:$0xff]
      %v2556 = vld [vmem:[%s461 + $0x40] sm:$0xff]
      %v2557 = vld [vmem:[%s461 + $0x48] sm:$0xff]
      %v2558 = vld [vmem:[%s461 + $0x50] sm:$0xff]
      %v2559 = vld [vmem:[%s461 + $0x58] sm:$0xff]
      %v2560 = vld [vmem:[%s461 + $0x60] sm:$0xff]
      %v2561 = vld [vmem:[%s461 + $0x68] sm:$0xff]
      %v2562 = vld [vmem:[%s461 + $0x70] sm:$0xff]
      %v2563 = vld [vmem:[%s461 + $0x78] sm:$0xff]
      %v2564 = vld [vmem:[%s479] sm:$0xff]
      %v2565 = vld [vmem:[%s479 + $0x8] sm:$0xff]
      %v2566 = vld [vmem:[%s479 + $0x10] sm:$0xff]
      %v2567 = vld [vmem:[%s479 + $0x18] sm:$0xff]
      %v2568 = vld [vmem:[%s479 + $0x20] sm:$0xff]
      %v2569 = vld [vmem:[%s479 + $0x28] sm:$0xff]
      %v2570 = vld [vmem:[%s479 + $0x30] sm:$0xff]
      %v2571 = vld [vmem:[%s479 + $0x38] sm:$0xff]
      %v2572 = vld [vmem:[%s479 + $0x40] sm:$0xff]
      %v2573 = vld [vmem:[%s479 + $0x48] sm:$0xff]
      %v2574 = vld [vmem:[%s479 + $0x50] sm:$0xff]
      %v2575 = vld [vmem:[%s479 + $0x58] sm:$0xff]
      %v2576 = vld [vmem:[%s479 + $0x60] sm:$0xff]
      %v2577 = vld [vmem:[%s479 + $0x68] sm:$0xff]
      %v2578 = vld [vmem:[%s479 + $0x70] sm:$0xff]
      %v2579 = vld [vmem:[%s479 + $0x78] sm:$0xff]
      %v2580 = vld [vmem:[%s479 + $0x80] sm:$0xff]
      %v2581 = vld [vmem:[%s479 + $0x88] sm:$0xff]
      %v2582 = vld [vmem:[%s479 + $0x90] sm:$0xff]
      %v2583 = vld [vmem:[%s479 + $0x98] sm:$0xff]
      %v2584 = vld [vmem:[%s479 + $0xa0] sm:$0xff]
      %v2585 = vld [vmem:[%s479 + $0xa8] sm:$0xff]
      %v2586 = vld [vmem:[%s479 + $0xb0] sm:$0xff]
      %v2587 = vld [vmem:[%s479 + $0xb8] sm:$0xff]
      %v2588 = vld [vmem:[%s479 + $0xc0] sm:$0xff]
      %v2589 = vld [vmem:[%s479 + $0xc8] sm:$0xff]
      %v2590 = vld [vmem:[%s479 + $0xd0] sm:$0xff]
      %v2591 = vld [vmem:[%s479 + $0xd8] sm:$0xff]
      %v2592 = vld [vmem:[%s479 + $0xe0] sm:$0xff]
      %v2593 = vld [vmem:[%s479 + $0xe8] sm:$0xff]
      %v2594 = vld [vmem:[%s479 + $0xf0] sm:$0xff]
      %v2595 = vld [vmem:[%s479 + $0xf8] sm:$0xff]
      %v2612 = vunpack.c.l.b16 %v2548
      %v2613 = vunpack.c.h.b16 %v2548
      %v2614 = vunpack.c.l.b16 %v2549
      %v2615 = vunpack.c.h.b16 %v2549
      %v2616 = vunpack.c.l.b16 %v2550
      %v2617 = vunpack.c.h.b16 %v2550
      %v2618 = vunpack.c.l.b16 %v2551
      %v2619 = vunpack.c.h.b16 %v2551
      %v2620 = vunpack.c.l.b16 %v2552
      %v2621 = vunpack.c.h.b16 %v2552
      %v2622 = vunpack.c.l.b16 %v2553
      %v2623 = vunpack.c.h.b16 %v2553
      %v2624 = vunpack.c.l.b16 %v2554
      %v2625 = vunpack.c.h.b16 %v2554
      %v2626 = vunpack.c.l.b16 %v2555
      %v2627 = vunpack.c.h.b16 %v2555
      %v2628 = vunpack.c.l.b16 %v2556
      %v2629 = vunpack.c.h.b16 %v2556
      %v2630 = vunpack.c.l.b16 %v2557
      %v2631 = vunpack.c.h.b16 %v2557
      %v2632 = vunpack.c.l.b16 %v2558
      %v2633 = vunpack.c.h.b16 %v2558
      %v2634 = vunpack.c.l.b16 %v2559
      %v2635 = vunpack.c.h.b16 %v2559
      %v2636 = vunpack.c.l.b16 %v2560
      %v2637 = vunpack.c.h.b16 %v2560
      %v2638 = vunpack.c.l.b16 %v2561
      %v2639 = vunpack.c.h.b16 %v2561
      %v2640 = vunpack.c.l.b16 %v2562
      %v2641 = vunpack.c.h.b16 %v2562
      %v2642 = vunpack.c.l.b16 %v2563
      %v2643 = vunpack.c.h.b16 %v2563
      %v2644 = vpack.c.b16 %v2614, %v2612
      %v2645 = vpack.c.b16 %v2615, %v2613
      %v2646 = vpack.c.b16 %v2618, %v2616
      %v2647 = vpack.c.b16 %v2619, %v2617
      %v2648 = vpack.c.b16 %v2622, %v2620
      %v2649 = vpack.c.b16 %v2623, %v2621
      %v2650 = vpack.c.b16 %v2626, %v2624
      %v2651 = vpack.c.b16 %v2627, %v2625
      %v2652 = vpack.c.b16 %v2630, %v2628
      %v2653 = vpack.c.b16 %v2631, %v2629
      %v2654 = vpack.c.b16 %v2634, %v2632
      %v2655 = vpack.c.b16 %v2635, %v2633
      %v2656 = vpack.c.b16 %v2638, %v2636
      %v2657 = vpack.c.b16 %v2639, %v2637
      %v2658 = vpack.c.b16 %v2642, %v2640
      %v2659 = vpack.c.b16 %v2643, %v2641
      %v2708 = vunpack.c.l.b16 %v2564
      %v2709 = vunpack.c.h.b16 %v2564
      %v2710 = vunpack.c.l.b16 %v2565
      %v2711 = vunpack.c.h.b16 %v2565
      %v2712 = vunpack.c.l.b16 %v2566
      %v2713 = vunpack.c.h.b16 %v2566
      %v2714 = vunpack.c.l.b16 %v2567
      %v2715 = vunpack.c.h.b16 %v2567
      %v2716 = vunpack.c.l.b16 %v2568
      %v2717 = vunpack.c.h.b16 %v2568
      %v2718 = vunpack.c.l.b16 %v2569
      %v2719 = vunpack.c.h.b16 %v2569
      %v2720 = vunpack.c.l.b16 %v2570
      %v2721 = vunpack.c.h.b16 %v2570
      %v2722 = vunpack.c.l.b16 %v2571
      %v2723 = vunpack.c.h.b16 %v2571
      %v2724 = vunpack.c.l.b16 %v2572
      %v2725 = vunpack.c.h.b16 %v2572
      %v2726 = vunpack.c.l.b16 %v2573
      %v2727 = vunpack.c.h.b16 %v2573
      %v2728 = vunpack.c.l.b16 %v2574
      %v2729 = vunpack.c.h.b16 %v2574
      %v2730 = vunpack.c.l.b16 %v2575
      %v2731 = vunpack.c.h.b16 %v2575
      %v2732 = vunpack.c.l.b16 %v2576
      %v2733 = vunpack.c.h.b16 %v2576
      %v2734 = vunpack.c.l.b16 %v2577
      %v2735 = vunpack.c.h.b16 %v2577
      %v2736 = vunpack.c.l.b16 %v2578
      %v2737 = vunpack.c.h.b16 %v2578
      %v2738 = vunpack.c.l.b16 %v2579
      %v2739 = vunpack.c.h.b16 %v2579
      %v2740 = vunpack.c.l.b16 %v2580
      %v2741 = vunpack.c.h.b16 %v2580
      %v2742 = vunpack.c.l.b16 %v2581
      %v2743 = vunpack.c.h.b16 %v2581
      %v2744 = vunpack.c.l.b16 %v2582
      %v2745 = vunpack.c.h.b16 %v2582
      %v2746 = vunpack.c.l.b16 %v2583
      %v2747 = vunpack.c.h.b16 %v2583
      %v2748 = vunpack.c.l.b16 %v2584
      %v2749 = vunpack.c.h.b16 %v2584
      %v2750 = vunpack.c.l.b16 %v2585
      %v2751 = vunpack.c.h.b16 %v2585
      %v2752 = vunpack.c.l.b16 %v2586
      %v2753 = vunpack.c.h.b16 %v2586
      %v2754 = vunpack.c.l.b16 %v2587
      %v2755 = vunpack.c.h.b16 %v2587
      %v2756 = vunpack.c.l.b16 %v2588
      %v2757 = vunpack.c.h.b16 %v2588
      %v2758 = vunpack.c.l.b16 %v2589
      %v2759 = vunpack.c.h.b16 %v2589
      %v2760 = vunpack.c.l.b16 %v2590
      %v2761 = vunpack.c.h.b16 %v2590
      %v2762 = vunpack.c.l.b16 %v2591
      %v2763 = vunpack.c.h.b16 %v2591
      %v2764 = vunpack.c.l.b16 %v2592
      %v2765 = vunpack.c.h.b16 %v2592
      %v2766 = vunpack.c.l.b16 %v2593
      %v2767 = vunpack.c.h.b16 %v2593
      %v2768 = vunpack.c.l.b16 %v2594
      %v2769 = vunpack.c.h.b16 %v2594
      %v2770 = vunpack.c.l.b16 %v2595
      %v2771 = vunpack.c.h.b16 %v2595
      %v2772 = vpack.c.b16 %v2710, %v2708
      %v2773 = vpack.c.b16 %v2711, %v2709
      %v2774 = vpack.c.b16 %v2714, %v2712
      %v2775 = vpack.c.b16 %v2715, %v2713
      %v2776 = vpack.c.b16 %v2718, %v2716
      %v2777 = vpack.c.b16 %v2719, %v2717
      %v2778 = vpack.c.b16 %v2722, %v2720
      %v2779 = vpack.c.b16 %v2723, %v2721
      %v2780 = vpack.c.b16 %v2726, %v2724
      %v2781 = vpack.c.b16 %v2727, %v2725
      %v2782 = vpack.c.b16 %v2730, %v2728
      %v2783 = vpack.c.b16 %v2731, %v2729
      %v2784 = vpack.c.b16 %v2734, %v2732
      %v2785 = vpack.c.b16 %v2735, %v2733
      %v2786 = vpack.c.b16 %v2738, %v2736
      %v2787 = vpack.c.b16 %v2739, %v2737
      %v2788 = vpack.c.b16 %v2742, %v2740
      %v2789 = vpack.c.b16 %v2743, %v2741
      %v2790 = vpack.c.b16 %v2746, %v2744
      %v2791 = vpack.c.b16 %v2747, %v2745
      %v2792 = vpack.c.b16 %v2750, %v2748
      %v2793 = vpack.c.b16 %v2751, %v2749
      %v2794 = vpack.c.b16 %v2754, %v2752
      %v2795 = vpack.c.b16 %v2755, %v2753
      %v2796 = vpack.c.b16 %v2758, %v2756
      %v2797 = vpack.c.b16 %v2759, %v2757
      %v2798 = vpack.c.b16 %v2762, %v2760
      %v2799 = vpack.c.b16 %v2763, %v2761
      %v2800 = vpack.c.b16 %v2766, %v2764
      %v2801 = vpack.c.b16 %v2767, %v2765
      %v2802 = vpack.c.b16 %v2770, %v2768
      %v2803 = vpack.c.b16 %v2771, %v2769
      %2836 = vmatprep.subr.bf16.mxu0 %v2773
      %2837 = vmatpush1.bf16.msra.mxu0 %v2772
      %2838 = vmatprep.subr.bf16.mxu0 %v2775
      %2839 = vmatpush1.bf16.msra.mxu0 %v2774
      %2840 = vmatprep.subr.bf16.mxu0 %v2777
      %2841 = vmatpush1.bf16.msra.mxu0 %v2776
      %2842 = vmatprep.subr.bf16.mxu0 %v2779
      %2843 = vmatpush1.bf16.msra.mxu0 %v2778
      %2844 = vmatprep.subr.bf16.mxu0 %v2781
      %2845 = vmatpush1.bf16.msra.mxu0 %v2780
      %2846 = vmatprep.subr.bf16.mxu0 %v2783
      %2847 = vmatpush1.bf16.msra.mxu0 %v2782
      %2848 = vmatprep.subr.bf16.mxu0 %v2785
      %2849 = vmatpush1.bf16.msra.mxu0 %v2784
      %2850 = vmatprep.subr.bf16.mxu0 %v2787
      %2851 = vmatpush1.bf16.msra.mxu0 %v2786
      %2852 = vmatprep.subr.bf16.mxu0 %v2789
      %2853 = vmatpush1.bf16.msra.mxu0 %v2788
      %2854 = vmatprep.subr.bf16.mxu0 %v2791
      %2855 = vmatpush1.bf16.msra.mxu0 %v2790
      %2856 = vmatprep.subr.bf16.mxu0 %v2793
      %2857 = vmatpush1.bf16.msra.mxu0 %v2792
      %2858 = vmatprep.subr.bf16.mxu0 %v2795
      %2859 = vmatpush1.bf16.msra.mxu0 %v2794
      %2860 = vmatprep.subr.bf16.mxu0 %v2797
      %2861 = vmatpush1.bf16.msra.mxu0 %v2796
      %2862 = vmatprep.subr.bf16.mxu0 %v2799
      %2863 = vmatpush1.bf16.msra.mxu0 %v2798
      %2864 = vmatprep.subr.bf16.mxu0 %v2801
      %2865 = vmatpush1.bf16.msra.mxu0 %v2800
      %2866 = vmatprep.subr.bf16.mxu0 %v2803
      %2867 = vmatpush1.bf16.msra.mxu0 %v2802
      %2868 = vmatprep.mubr.bf16.mxu0 %v2645
      %2869 = vmatmul.mubr.bf16.gmra.mrb[0].mxu0 %v2644
      %v2870 = vpop.f32.mrb[0].mxu0
      %v2871 = vadd.f32 0.0, %v2870
      %v2872 = vpop.f32.mrb[0].mxu0
      %v2873 = vadd.f32 0.0, %v2872
      %v2874 = vpop.f32.mrb[0].mxu0
      %v2875 = vadd.f32 0.0, %v2874
      %v2876 = vpop.f32.mrb[0].mxu0
      %v2877 = vadd.f32 0.0, %v2876
      %2878 = vmatprep.mubr.bf16.mxu0 %v2647
      %2879 = vmatmul.mubr.bf16.gmra.mrb[0].mxu0 %v2646
      %v2880 = vpop.f32.mrb[0].mxu0
      %v2881 = vadd.f32 0.0, %v2880
      %v2882 = vpop.f32.mrb[0].mxu0
      %v2883 = vadd.f32 0.0, %v2882
      %v2884 = vpop.f32.mrb[0].mxu0
      %v2885 = vadd.f32 0.0, %v2884
      %v2886 = vpop.f32.mrb[0].mxu0
      %v2887 = vadd.f32 0.0, %v2886
      %2888 = vmatprep.mubr.bf16.mxu0 %v2649
      %2889 = vmatmul.mubr.bf16.gmra.mrb[0].mxu0 %v2648
      %v2890 = vpop.f32.mrb[0].mxu0
      %v2891 = vadd.f32 0.0, %v2890
      %v2892 = vpop.f32.mrb[0].mxu0
      %v2893 = vadd.f32 0.0, %v2892
      %v2894 = vpop.f32.mrb[0].mxu0
      %v2895 = vadd.f32 0.0, %v2894
      %v2896 = vpop.f32.mrb[0].mxu0
      %v2897 = vadd.f32 0.0, %v2896
      %2898 = vmatprep.mubr.bf16.mxu0 %v2651
      %2899 = vmatmul.mubr.bf16.gmra.mrb[0].mxu0 %v2650
      %v2900 = vpop.f32.mrb[0].mxu0
      %v2901 = vadd.f32 0.0, %v2900
      %v2902 = vpop.f32.mrb[0].mxu0
      %v2903 = vadd.f32 0.0, %v2902
      %v2904 = vpop.f32.mrb[0].mxu0
      %v2905 = vadd.f32 0.0, %v2904
      %v2906 = vpop.f32.mrb[0].mxu0
      %v2907 = vadd.f32 0.0, %v2906
      %2908 = vmatprep.mubr.bf16.mxu0 %v2653
      %2909 = vmatmul.mubr.bf16.gmra.mrb[0].mxu0 %v2652
      %v2910 = vpop.f32.mrb[0].mxu0
      %v2911 = vadd.f32 0.0, %v2910
      %v2912 = vpop.f32.mrb[0].mxu0
      %v2913 = vadd.f32 0.0, %v2912
      %v2914 = vpop.f32.mrb[0].mxu0
      %v2915 = vadd.f32 0.0, %v2914
      %v2916 = vpop.f32.mrb[0].mxu0
      %v2917 = vadd.f32 0.0, %v2916
      %2918 = vmatprep.mubr.bf16.mxu0 %v2655
      %2919 = vmatmul.mubr.bf16.gmra.mrb[0].mxu0 %v2654
      %v2920 = vpop.f32.mrb[0].mxu0
      %v2921 = vadd.f32 0.0, %v2920
      %v2922 = vpop.f32.mrb[0].mxu0
      %v2923 = vadd.f32 0.0, %v2922
      %v2924 = vpop.f32.mrb[0].mxu0
      %v2925 = vadd.f32 0.0, %v2924
      %v2926 = vpop.f32.mrb[0].mxu0
      %v2927 = vadd.f32 0.0, %v2926
      %2928 = vmatprep.mubr.bf16.mxu0 %v2657
      %2929 = vmatmul.mubr.bf16.gmra.mrb[0].mxu0 %v2656
      %v2930 = vpop.f32.mrb[0].mxu0
      %v2931 = vadd.f32 0.0, %v2930
      %v2932 = vpop.f32.mrb[0].mxu0
      %v2933 = vadd.f32 0.0, %v2932
      %v2934 = vpop.f32.mrb[0].mxu0
      %v2935 = vadd.f32 0.0, %v2934
      %v2936 = vpop.f32.mrb[0].mxu0
      %v2937 = vadd.f32 0.0, %v2936
      %2938 = vmatprep.mubr.bf16.mxu0 %v2659
      %2939 = vmatmul.mubr.bf16.gmra.mrb[0].mxu0 %v2658
      %v2940 = vpop.f32.mrb[0].mxu0
      %v2941 = vadd.f32 0.0, %v2940
      %v2942 = vpop.f32.mrb[0].mxu0
      %v2943 = vadd.f32 0.0, %v2942
      %v2944 = vpop.f32.mrb[0].mxu0
      %v2945 = vadd.f32 0.0, %v2944
      %v2946 = vpop.f32.mrb[0].mxu0
      %v2947 = vadd.f32 0.0, %v2946
      %2948 = vdwg.mxu0
      %v2949 = vadd.f32 %v2516, %v2871
      %v2950 = vadd.f32 %v2517, %v2873
      %v2951 = vadd.f32 %v2518, %v2875
      %v2952 = vadd.f32 %v2519, %v2877
      %v2953 = vadd.f32 %v2520, %v2881
      %v2954 = vadd.f32 %v2521, %v2883
      %v2955 = vadd.f32 %v2522, %v2885
      %v2956 = vadd.f32 %v2523, %v2887
      %v2957 = vadd.f32 %v2524, %v2891
      %v2958 = vadd.f32 %v2525, %v2893
      %v2959 = vadd.f32 %v2526, %v2895
      %v2960 = vadd.f32 %v2527, %v2897
      %v2961 = vadd.f32 %v2528, %v2901
      %v2962 = vadd.f32 %v2529, %v2903
      %v2963 = vadd.f32 %v2530, %v2905
      %v2964 = vadd.f32 %v2531, %v2907
      %v2965 = vadd.f32 %v2532, %v2911
      %v2966 = vadd.f32 %v2533, %v2913
      %v2967 = vadd.f32 %v2534, %v2915
      %v2968 = vadd.f32 %v2535, %v2917
      %v2969 = vadd.f32 %v2536, %v2921
      %v2970 = vadd.f32 %v2537, %v2923
      %v2971 = vadd.f32 %v2538, %v2925
      %v2972 = vadd.f32 %v2539, %v2927
      %v2973 = vadd.f32 %v2540, %v2931
      %v2974 = vadd.f32 %v2541, %v2933
      %v2975 = vadd.f32 %v2542, %v2935
      %v2976 = vadd.f32 %v2543, %v2937
      %v2977 = vadd.f32 %v2544, %v2941
      %v2978 = vadd.f32 %v2545, %v2943
      %v2979 = vadd.f32 %v2546, %v2945
      %v2980 = vadd.f32 %v2547, %v2947
      %v2981 = vld [vmem:[%s483] sm:$0x3]
      %v2983 = vlaneseq
      %v2984 = vshrl.u32 %v2983, 7
      %v2985 = vsub.s32 0, %v2984
      %v2986 = vrot.slane %v2981, %v2985
      %v2987 = vlaneseq
      %v2988 = vshrl.u32 %v2987, 7
      %v2989 = vsub.s32 1, %v2988
      %v2990 = vrot.slane %v2981, %v2989
      %v2993 = vadd.f32 %v2949, %v2986
      %v2994 = vadd.f32 %v2950, %v2990
      %v2995 = vadd.f32 %v2951, %v2986
      %v2996 = vadd.f32 %v2952, %v2990
      %v2997 = vadd.f32 %v2953, %v2986
      %v2998 = vadd.f32 %v2954, %v2990
      %v2999 = vadd.f32 %v2955, %v2986
      %v3000 = vadd.f32 %v2956, %v2990
      %v3001 = vadd.f32 %v2957, %v2986
      %v3002 = vadd.f32 %v2958, %v2990
      %v3003 = vadd.f32 %v2959, %v2986
      %v3004 = vadd.f32 %v2960, %v2990
      %v3005 = vadd.f32 %v2961, %v2986
      %v3006 = vadd.f32 %v2962, %v2990
      %v3007 = vadd.f32 %v2963, %v2986
      %v3008 = vadd.f32 %v2964, %v2990
      %v3009 = vadd.f32 %v2965, %v2986
      %v3010 = vadd.f32 %v2966, %v2990
      %v3011 = vadd.f32 %v2967, %v2986
      %v3012 = vadd.f32 %v2968, %v2990
      %v3013 = vadd.f32 %v2969, %v2986
      %v3014 = vadd.f32 %v2970, %v2990
      %v3015 = vadd.f32 %v2971, %v2986
      %v3016 = vadd.f32 %v2972, %v2990
      %v3017 = vadd.f32 %v2973, %v2986
      %v3018 = vadd.f32 %v2974, %v2990
      %v3019 = vadd.f32 %v2975, %v2986
      %v3020 = vadd.f32 %v2976, %v2990
      %v3021 = vadd.f32 %v2977, %v2986
      %v3022 = vadd.f32 %v2978, %v2990
      %v3023 = vadd.f32 %v2979, %v2986
      %v3024 = vadd.f32 %v2980, %v2990
      %v3025 = vtanh.pop %v2993
      %v3026 = vtanh.pop %v2994
      %v3027 = vtanh.pop %v2995
      %v3028 = vtanh.pop %v2996
      %v3029 = vtanh.pop %v2997
      %v3030 = vtanh.pop %v2998
      %v3031 = vtanh.pop %v2999
      %v3032 = vtanh.pop %v3000
      %v3033 = vtanh.pop %v3001
      %v3034 = vtanh.pop %v3002
      %v3035 = vtanh.pop %v3003
      %v3036 = vtanh.pop %v3004
      %v3037 = vtanh.pop %v3005
      %v3038 = vtanh.pop %v3006
      %v3039 = vtanh.pop %v3007
      %v3040 = vtanh.pop %v3008
      %v3041 = vtanh.pop %v3009
      %v3042 = vtanh.pop %v3010
      %v3043 = vtanh.pop %v3011
      %v3044 = vtanh.pop %v3012
      %v3045 = vtanh.pop %v3013
      %v3046 = vtanh.pop %v3014
      %v3047 = vtanh.pop %v3015
      %v3048 = vtanh.pop %v3016
      %v3049 = vtanh.pop %v3017
      %v3050 = vtanh.pop %v3018
      %v3051 = vtanh.pop %v3019
      %v3052 = vtanh.pop %v3020
      %v3053 = vtanh.pop %v3021
      %v3054 = vtanh.pop %v3022
      %v3055 = vtanh.pop %v3023
      %v3056 = vtanh.pop %v3024
      %v3057 = vxor.u32 %v2993, 2147483648
      %v3058 = vxor.u32 %v2994, 2147483648
      %v3059 = vxor.u32 %v2995, 2147483648
      %v3060 = vxor.u32 %v2996, 2147483648
      %v3061 = vxor.u32 %v2997, 2147483648
      %v3062 = vxor.u32 %v2998, 2147483648
      %v3063 = vxor.u32 %v2999, 2147483648
      %v3064 = vxor.u32 %v3000, 2147483648
      %v3065 = vxor.u32 %v3001, 2147483648
      %v3066 = vxor.u32 %v3002, 2147483648
      %v3067 = vxor.u32 %v3003, 2147483648
      %v3068 = vxor.u32 %v3004, 2147483648
      %v3069 = vxor.u32 %v3005, 2147483648
      %v3070 = vxor.u32 %v3006, 2147483648
      %v3071 = vxor.u32 %v3007, 2147483648
      %v3072 = vxor.u32 %v3008, 2147483648
      %v3073 = vxor.u32 %v3009, 2147483648
      %v3074 = vxor.u32 %v3010, 2147483648
      %v3075 = vxor.u32 %v3011, 2147483648
      %v3076 = vxor.u32 %v3012, 2147483648
      %v3077 = vxor.u32 %v3013, 2147483648
      %v3078 = vxor.u32 %v3014, 2147483648
      %v3079 = vxor.u32 %v3015, 2147483648
      %v3080 = vxor.u32 %v3016, 2147483648
      %v3081 = vxor.u32 %v3017, 2147483648
      %v3082 = vxor.u32 %v3018, 2147483648
      %v3083 = vxor.u32 %v3019, 2147483648
      %v3084 = vxor.u32 %v3020, 2147483648
      %v3085 = vxor.u32 %v3021, 2147483648
      %v3086 = vxor.u32 %v3022, 2147483648
      %v3087 = vxor.u32 %v3023, 2147483648
      %v3088 = vxor.u32 %v3024, 2147483648
      %v3089 = vmul.f32 %v3057, 1.442695
      %v3090 = vpow.pop %v3089
      %v3091 = vmul.f32 %v3058, 1.442695
      %v3092 = vpow.pop %v3091
      %v3093 = vmul.f32 %v3059, 1.442695
      %v3094 = vpow.pop %v3093
      %v3095 = vmul.f32 %v3060, 1.442695
      %v3096 = vpow.pop %v3095
      %v3097 = vmul.f32 %v3061, 1.442695
      %v3098 = vpow.pop %v3097
      %v3099 = vmul.f32 %v3062, 1.442695
      %v3100 = vpow.pop %v3099
      %v3101 = vmul.f32 %v3063, 1.442695
      %v3102 = vpow.pop %v3101
      %v3103 = vmul.f32 %v3064, 1.442695
      %v3104 = vpow.pop %v3103
      %v3105 = vmul.f32 %v3065, 1.442695
      %v3106 = vpow.pop %v3105
      %v3107 = vmul.f32 %v3066, 1.442695
      %v3108 = vpow.pop %v3107
      %v3109 = vmul.f32 %v3067, 1.442695
      %v3110 = vpow.pop %v3109
      %v3111 = vmul.f32 %v3068, 1.442695
      %v3112 = vpow.pop %v3111
      %v3113 = vmul.f32 %v3069, 1.442695
      %v3114 = vpow.pop %v3113
      %v3115 = vmul.f32 %v3070, 1.442695
      %v3116 = vpow.pop %v3115
      %v3117 = vmul.f32 %v3071, 1.442695
      %v3118 = vpow.pop %v3117
      %v3119 = vmul.f32 %v3072, 1.442695
      %v3120 = vpow.pop %v3119
      %v3121 = vmul.f32 %v3073, 1.442695
      %v3122 = vpow.pop %v3121
      %v3123 = vmul.f32 %v3074, 1.442695
      %v3124 = vpow.pop %v3123
      %v3125 = vmul.f32 %v3075, 1.442695
      %v3126 = vpow.pop %v3125
      %v3127 = vmul.f32 %v3076, 1.442695
      %v3128 = vpow.pop %v3127
      %v3129 = vmul.f32 %v3077, 1.442695
      %v3130 = vpow.pop %v3129
      %v3131 = vmul.f32 %v3078, 1.442695
      %v3132 = vpow.pop %v3131
      %v3133 = vmul.f32 %v3079, 1.442695
      %v3134 = vpow.pop %v3133
      %v3135 = vmul.f32 %v3080, 1.442695
      %v3136 = vpow.pop %v3135
      %v3137 = vmul.f32 %v3081, 1.442695
      %v3138 = vpow.pop %v3137
      %v3139 = vmul.f32 %v3082, 1.442695
      %v3140 = vpow.pop %v3139
      %v3141 = vmul.f32 %v3083, 1.442695
      %v3142 = vpow.pop %v3141
      %v3143 = vmul.f32 %v3084, 1.442695
      %v3144 = vpow.pop %v3143
      %v3145 = vmul.f32 %v3085, 1.442695
      %v3146 = vpow.pop %v3145
      %v3147 = vmul.f32 %v3086, 1.442695
      %v3148 = vpow.pop %v3147
      %v3149 = vmul.f32 %v3087, 1.442695
      %v3150 = vpow.pop %v3149
      %v3151 = vmul.f32 %v3088, 1.442695
      %v3152 = vpow.pop %v3151
      %v3153 = vadd.f32 %v3090, 1.0
      %v3154 = vadd.f32 %v3092, 1.0
      %v3155 = vadd.f32 %v3094, 1.0
      %v3156 = vadd.f32 %v3096, 1.0
      %v3157 = vadd.f32 %v3098, 1.0
      %v3158 = vadd.f32 %v3100, 1.0
      %v3159 = vadd.f32 %v3102, 1.0
      %v3160 = vadd.f32 %v3104, 1.0
      %v3161 = vadd.f32 %v3106, 1.0
      %v3162 = vadd.f32 %v3108, 1.0
      %v3163 = vadd.f32 %v3110, 1.0
      %v3164 = vadd.f32 %v3112, 1.0
      %v3165 = vadd.f32 %v3114, 1.0
      %v3166 = vadd.f32 %v3116, 1.0
      %v3167 = vadd.f32 %v3118, 1.0
      %v3168 = vadd.f32 %v3120, 1.0
      %v3169 = vadd.f32 %v3122, 1.0
      %v3170 = vadd.f32 %v3124, 1.0
      %v3171 = vadd.f32 %v3126, 1.0
      %v3172 = vadd.f32 %v3128, 1.0
      %v3173 = vadd.f32 %v3130, 1.0
      %v3174 = vadd.f32 %v3132, 1.0
      %v3175 = vadd.f32 %v3134, 1.0
      %v3176 = vadd.f32 %v3136, 1.0
      %v3177 = vadd.f32 %v3138, 1.0
      %v3178 = vadd.f32 %v3140, 1.0
      %v3179 = vadd.f32 %v3142, 1.0
      %v3180 = vadd.f32 %v3144, 1.0
      %v3181 = vadd.f32 %v3146, 1.0
      %v3182 = vadd.f32 %v3148, 1.0
      %v3183 = vadd.f32 %v3150, 1.0
      %v3184 = vadd.f32 %v3152, 1.0
      %v3185 = vrcp.pop %v3153
      %v3186 = vmul.f32 1.0, %v3185
      %v3187 = vrcp.pop %v3154
      %v3188 = vmul.f32 1.0, %v3187
      %v3189 = vrcp.pop %v3155
      %v3190 = vmul.f32 1.0, %v3189
      %v3191 = vrcp.pop %v3156
      %v3192 = vmul.f32 1.0, %v3191
      %v3193 = vrcp.pop %v3157
      %v3194 = vmul.f32 1.0, %v3193
      %v3195 = vrcp.pop %v3158
      %v3196 = vmul.f32 1.0, %v3195
      %v3197 = vrcp.pop %v3159
      %v3198 = vmul.f32 1.0, %v3197
      %v3199 = vrcp.pop %v3160
      %v3200 = vmul.f32 1.0, %v3199
      %v3201 = vrcp.pop %v3161
      %v3202 = vmul.f32 1.0, %v3201
      %v3203 = vrcp.pop %v3162
      %v3204 = vmul.f32 1.0, %v3203
      %v3205 = vrcp.pop %v3163
      %v3206 = vmul.f32 1.0, %v3205
      %v3207 = vrcp.pop %v3164
      %v3208 = vmul.f32 1.0, %v3207
      %v3209 = vrcp.pop %v3165
      %v3210 = vmul.f32 1.0, %v3209
      %v3211 = vrcp.pop %v3166
      %v3212 = vmul.f32 1.0, %v3211
      %v3213 = vrcp.pop %v3167
      %v3214 = vmul.f32 1.0, %v3213
      %v3215 = vrcp.pop %v3168
      %v3216 = vmul.f32 1.0, %v3215
      %v3217 = vrcp.pop %v3169
      %v3218 = vmul.f32 1.0, %v3217
      %v3219 = vrcp.pop %v3170
      %v3220 = vmul.f32 1.0, %v3219
      %v3221 = vrcp.pop %v3171
      %v3222 = vmul.f32 1.0, %v3221
      %v3223 = vrcp.pop %v3172
      %v3224 = vmul.f32 1.0, %v3223
      %v3225 = vrcp.pop %v3173
      %v3226 = vmul.f32 1.0, %v3225
      %v3227 = vrcp.pop %v3174
      %v3228 = vmul.f32 1.0, %v3227
      %v3229 = vrcp.pop %v3175
      %v3230 = vmul.f32 1.0, %v3229
      %v3231 = vrcp.pop %v3176
      %v3232 = vmul.f32 1.0, %v3231
      %v3233 = vrcp.pop %v3177
      %v3234 = vmul.f32 1.0, %v3233
      %v3235 = vrcp.pop %v3178
      %v3236 = vmul.f32 1.0, %v3235
      %v3237 = vrcp.pop %v3179
      %v3238 = vmul.f32 1.0, %v3237
      %v3239 = vrcp.pop %v3180
      %v3240 = vmul.f32 1.0, %v3239
      %v3241 = vrcp.pop %v3181
      %v3242 = vmul.f32 1.0, %v3241
      %v3243 = vrcp.pop %v3182
      %v3244 = vmul.f32 1.0, %v3243
      %v3245 = vrcp.pop %v3183
      %v3246 = vmul.f32 1.0, %v3245
      %v3247 = vrcp.pop %v3184
      %v3248 = vmul.f32 1.0, %v3247
      %v3249 = vmul.f32 %v3025, %v3186
      %v3250 = vmul.f32 %v3026, %v3188
      %v3251 = vmul.f32 %v3027, %v3190
      %v3252 = vmul.f32 %v3028, %v3192
      %v3253 = vmul.f32 %v3029, %v3194
      %v3254 = vmul.f32 %v3030, %v3196
      %v3255 = vmul.f32 %v3031, %v3198
      %v3256 = vmul.f32 %v3032, %v3200
      %v3257 = vmul.f32 %v3033, %v3202
      %v3258 = vmul.f32 %v3034, %v3204
      %v3259 = vmul.f32 %v3035, %v3206
      %v3260 = vmul.f32 %v3036, %v3208
      %v3261 = vmul.f32 %v3037, %v3210
      %v3262 = vmul.f32 %v3038, %v3212
      %v3263 = vmul.f32 %v3039, %v3214
      %v3264 = vmul.f32 %v3040, %v3216
      %v3265 = vmul.f32 %v3041, %v3218
      %v3266 = vmul.f32 %v3042, %v3220
      %v3267 = vmul.f32 %v3043, %v3222
      %v3268 = vmul.f32 %v3044, %v3224
      %v3269 = vmul.f32 %v3045, %v3226
      %v3270 = vmul.f32 %v3046, %v3228
      %v3271 = vmul.f32 %v3047, %v3230
      %v3272 = vmul.f32 %v3048, %v3232
      %v3273 = vmul.f32 %v3049, %v3234
      %v3274 = vmul.f32 %v3050, %v3236
      %v3275 = vmul.f32 %v3051, %v3238
      %v3276 = vmul.f32 %v3052, %v3240
      %v3277 = vmul.f32 %v3053, %v3242
      %v3278 = vmul.f32 %v3054, %v3244
      %v3279 = vmul.f32 %v3055, %v3246
      %v3280 = vmul.f32 %v3056, %v3248
      %v3281 = vpack.c.bf16 %v3251, %v3249
      %v3282 = vpack.c.bf16 %v3252, %v3250
      %v3283 = vpack.c.bf16 %v3255, %v3253
      %v3284 = vpack.c.bf16 %v3256, %v3254
      %v3285 = vpack.c.bf16 %v3259, %v3257
      %v3286 = vpack.c.bf16 %v3260, %v3258
      %v3287 = vpack.c.bf16 %v3263, %v3261
      %v3288 = vpack.c.bf16 %v3264, %v3262
      %v3289 = vpack.c.bf16 %v3267, %v3265
      %v3290 = vpack.c.bf16 %v3268, %v3266
      %v3291 = vpack.c.bf16 %v3271, %v3269
      %v3292 = vpack.c.bf16 %v3272, %v3270
      %v3293 = vpack.c.bf16 %v3275, %v3273
      %v3294 = vpack.c.bf16 %v3276, %v3274
      %v3295 = vpack.c.bf16 %v3279, %v3277
      %v3296 = vpack.c.bf16 %v3280, %v3278
      %v3297 = vld [vmem:[%s488] sm:$0xf]
      %v3298 = vld [vmem:[%s488 + $0x4] sm:$0xf]
      %v3299 = vld [vmem:[%s488 + $0x8] sm:$0xf]
      %v3300 = vld [vmem:[%s488 + $0xc] sm:$0xf]
      %v3301 = vld [vmem:[%s488 + $0x10] sm:$0xf]
      %v3302 = vld [vmem:[%s488 + $0x14] sm:$0xf]
      %v3303 = vld [vmem:[%s488 + $0x18] sm:$0xf]
      %v3304 = vld [vmem:[%s488 + $0x1c] sm:$0xf]
      %v3305 = vld [vmem:[%s488 + $0x20] sm:$0xf]
      %v3306 = vld [vmem:[%s488 + $0x24] sm:$0xf]
      %v3307 = vld [vmem:[%s488 + $0x28] sm:$0xf]
      %v3308 = vld [vmem:[%s488 + $0x2c] sm:$0xf]
      %v3309 = vld [vmem:[%s488 + $0x30] sm:$0xf]
      %v3310 = vld [vmem:[%s488 + $0x34] sm:$0xf]
      %v3311 = vld [vmem:[%s488 + $0x38] sm:$0xf]
      %v3312 = vld [vmem:[%s488 + $0x3c] sm:$0xf]
      %v3313 = vld [vmem:[%s488 + $0x40] sm:$0xf]
      %v3314 = vld [vmem:[%s488 + $0x44] sm:$0xf]
      %v3315 = vld [vmem:[%s488 + $0x48] sm:$0xf]
      %v3316 = vld [vmem:[%s488 + $0x4c] sm:$0xf]
      %v3317 = vld [vmem:[%s488 + $0x50] sm:$0xf]
      %v3318 = vld [vmem:[%s488 + $0x54] sm:$0xf]
      %v3319 = vld [vmem:[%s488 + $0x58] sm:$0xf]
      %v3320 = vld [vmem:[%s488 + $0x5c] sm:$0xf]
      %v3321 = vld [vmem:[%s488 + $0x60] sm:$0xf]
      %v3322 = vld [vmem:[%s488 + $0x64] sm:$0xf]
      %v3323 = vld [vmem:[%s488 + $0x68] sm:$0xf]
      %v3324 = vld [vmem:[%s488 + $0x6c] sm:$0xf]
      %v3325 = vld [vmem:[%s488 + $0x70] sm:$0xf]
      %v3326 = vld [vmem:[%s488 + $0x74] sm:$0xf]
      %v3327 = vld [vmem:[%s488 + $0x78] sm:$0xf]
      %v3328 = vld [vmem:[%s488 + $0x7c] sm:$0xf]
      %v3329 = vld [vmem:[%s491] sm:$0x1]
      %v3331 = vlaneseq
      %v3332 = vshrl.u32 %v3331, 7
      %v3333 = vsub.s32 0, %v3332
      %v3334 = vrot.slane %v3329, %v3333
      %v3368 = vunpack.c.l.b16 %v3297
      %v3369 = vunpack.c.l.b16 %v3298
      %v3370 = vunpack.c.l.b16 %v3299
      %v3371 = vunpack.c.l.b16 %v3300
      %v3372 = vunpack.c.l.b16 %v3301
      %v3373 = vunpack.c.l.b16 %v3302
      %v3374 = vunpack.c.l.b16 %v3303
      %v3375 = vunpack.c.l.b16 %v3304
      %v3376 = vunpack.c.l.b16 %v3305
      %v3377 = vunpack.c.l.b16 %v3306
      %v3378 = vunpack.c.l.b16 %v3307
      %v3379 = vunpack.c.l.b16 %v3308
      %v3380 = vunpack.c.l.b16 %v3309
      %v3381 = vunpack.c.l.b16 %v3310
      %v3382 = vunpack.c.l.b16 %v3311
      %v3383 = vunpack.c.l.b16 %v3312
      %v3384 = vunpack.c.l.b16 %v3313
      %v3385 = vunpack.c.l.b16 %v3314
      %v3386 = vunpack.c.l.b16 %v3315
      %v3387 = vunpack.c.l.b16 %v3316
      %v3388 = vunpack.c.l.b16 %v3317
      %v3389 = vunpack.c.l.b16 %v3318
      %v3390 = vunpack.c.l.b16 %v3319
      %v3391 = vunpack.c.l.b16 %v3320
      %v3392 = vunpack.c.l.b16 %v3321
      %v3393 = vunpack.c.l.b16 %v3322
      %v3394 = vunpack.c.l.b16 %v3323
      %v3395 = vunpack.c.l.b16 %v3324
      %v3396 = vunpack.c.l.b16 %v3325
      %v3397 = vunpack.c.l.b16 %v3326
      %v3398 = vunpack.c.l.b16 %v3327
      %v3399 = vunpack.c.l.b16 %v3328
      %v3400 = vpack.c.b16 %v3369, %v3368
      %v3401 = vpack.c.b16 %v3371, %v3370
      %v3402 = vpack.c.b16 %v3373, %v3372
      %v3403 = vpack.c.b16 %v3375, %v3374
      %v3404 = vpack.c.b16 %v3377, %v3376
      %v3405 = vpack.c.b16 %v3379, %v3378
      %v3406 = vpack.c.b16 %v3381, %v3380
      %v3407 = vpack.c.b16 %v3383, %v3382
      %v3408 = vpack.c.b16 %v3385, %v3384
      %v3409 = vpack.c.b16 %v3387, %v3386
      %v3410 = vpack.c.b16 %v3389, %v3388
      %v3411 = vpack.c.b16 %v3391, %v3390
      %v3412 = vpack.c.b16 %v3393, %v3392
      %v3413 = vpack.c.b16 %v3395, %v3394
      %v3414 = vpack.c.b16 %v3397, %v3396
      %v3415 = vpack.c.b16 %v3399, %v3398
      %3432 = vmatprep.subr.bf16.mxu0 0
      %3433 = vmatpush1.bf16.msra.mxu0 %v3400
      %3434 = vmatprep.subr.bf16.mxu0 0
      %3435 = vmatpush1.bf16.msra.mxu0 %v3401
      %3436 = vmatprep.subr.bf16.mxu0 0
      %3437 = vmatpush1.bf16.msra.mxu0 %v3402
      %3438 = vmatprep.subr.bf16.mxu0 0
      %3439 = vmatpush1.bf16.msra.mxu0 %v3403
      %3440 = vmatprep.subr.bf16.mxu0 0
      %3441 = vmatpush1.bf16.msra.mxu0 %v3404
      %3442 = vmatprep.subr.bf16.mxu0 0
      %3443 = vmatpush1.bf16.msra.mxu0 %v3405
      %3444 = vmatprep.subr.bf16.mxu0 0
      %3445 = vmatpush1.bf16.msra.mxu0 %v3406
      %3446 = vmatprep.subr.bf16.mxu0 0
      %3447 = vmatpush1.bf16.msra.mxu0 %v3407
      %3448 = vmatprep.subr.bf16.mxu0 0
      %3449 = vmatpush1.bf16.msra.mxu0 %v3408
      %3450 = vmatprep.subr.bf16.mxu0 0
      %3451 = vmatpush1.bf16.msra.mxu0 %v3409
      %3452 = vmatprep.subr.bf16.mxu0 0
      %3453 = vmatpush1.bf16.msra.mxu0 %v3410
      %3454 = vmatprep.subr.bf16.mxu0 0
      %3455 = vmatpush1.bf16.msra.mxu0 %v3411
      %3456 = vmatprep.subr.bf16.mxu0 0
      %3457 = vmatpush1.bf16.msra.mxu0 %v3412
      %3458 = vmatprep.subr.bf16.mxu0 0
      %3459 = vmatpush1.bf16.msra.mxu0 %v3413
      %3460 = vmatprep.subr.bf16.mxu0 0
      %3461 = vmatpush1.bf16.msra.mxu0 %v3414
      %3462 = vmatprep.subr.bf16.mxu0 0
      %3463 = vmatpush1.bf16.msra.mxu0 %v3415
      %3464 = vmatprep.mubr.bf16.mxu0 %v3282
      %3465 = vmatmul.mubr.bf16.gmra.mrb[0].mxu0 %v3281
      %v3466 = vpop.f32.mrb[0].mxu0
      %v3467 = vadd.f32 %v3334, %v3466
      %v3468 = vpop.f32.mrb[0].mxu0
      %v3469 = vpop.f32.mrb[0].mxu0
      %v3470 = vadd.f32 %v3334, %v3469
      %v3471 = vpop.f32.mrb[0].mxu0
      %3472 = vmatprep.mubr.bf16.mxu0 %v3284
      %3473 = vmatmul.mubr.bf16.gmra.mrb[0].mxu0 %v3283
      %v3474 = vpop.f32.mrb[0].mxu0
      %v3475 = vadd.f32 %v3334, %v3474
      %v3476 = vpop.f32.mrb[0].mxu0
      %v3477 = vpop.f32.mrb[0].mxu0
      %v3478 = vadd.f32 %v3334, %v3477
      %v3479 = vpop.f32.mrb[0].mxu0
      %3480 = vmatprep.mubr.bf16.mxu0 %v3286
      %3481 = vmatmul.mubr.bf16.gmra.mrb[0].mxu0 %v3285
      %v3482 = vpop.f32.mrb[0].mxu0
      %v3483 = vadd.f32 %v3334, %v3482
      %v3484 = vpop.f32.mrb[0].mxu0
      %v3485 = vpop.f32.mrb[0].mxu0
      %v3486 = vadd.f32 %v3334, %v3485
      %v3487 = vpop.f32.mrb[0].mxu0
      %3488 = vmatprep.mubr.bf16.mxu0 %v3288
      %3489 = vmatmul.mubr.bf16.gmra.mrb[0].mxu0 %v3287
      %v3490 = vpop.f32.mrb[0].mxu0
      %v3491 = vadd.f32 %v3334, %v3490
      %v3492 = vpop.f32.mrb[0].mxu0
      %v3493 = vpop.f32.mrb[0].mxu0
      %v3494 = vadd.f32 %v3334, %v3493
      %v3495 = vpop.f32.mrb[0].mxu0
      %3496 = vmatprep.mubr.bf16.mxu0 %v3290
      %3497 = vmatmul.mubr.bf16.gmra.mrb[0].mxu0 %v3289
      %v3498 = vpop.f32.mrb[0].mxu0
      %v3499 = vadd.f32 %v3334, %v3498
      %v3500 = vpop.f32.mrb[0].mxu0
      %v3501 = vpop.f32.mrb[0].mxu0
      %v3502 = vadd.f32 %v3334, %v3501
      %v3503 = vpop.f32.mrb[0].mxu0
      %3504 = vmatprep.mubr.bf16.mxu0 %v3292
      %3505 = vmatmul.mubr.bf16.gmra.mrb[0].mxu0 %v3291
      %v3506 = vpop.f32.mrb[0].mxu0
      %v3507 = vadd.f32 %v3334, %v3506
      %v3508 = vpop.f32.mrb[0].mxu0
      %v3509 = vpop.f32.mrb[0].mxu0
      %v3510 = vadd.f32 %v3334, %v3509
      %v3511 = vpop.f32.mrb[0].mxu0
      %3512 = vmatprep.mubr.bf16.mxu0 %v3294
      %3513 = vmatmul.mubr.bf16.gmra.mrb[0].mxu0 %v3293
      %v3514 = vpop.f32.mrb[0].mxu0
      %v3515 = vadd.f32 %v3334, %v3514
      %v3516 = vpop.f32.mrb[0].mxu0
      %v3517 = vpop.f32.mrb[0].mxu0
      %v3518 = vadd.f32 %v3334, %v3517
      %v3519 = vpop.f32.mrb[0].mxu0
      %3520 = vmatprep.mubr.bf16.mxu0 %v3296
      %3521 = vmatmul.mubr.bf16.gmra.mrb[0].mxu0 %v3295
      %v3522 = vpop.f32.mrb[0].mxu0
      %v3523 = vadd.f32 %v3334, %v3522
      %v3524 = vpop.f32.mrb[0].mxu0
      %v3525 = vpop.f32.mrb[0].mxu0
      %v3526 = vadd.f32 %v3334, %v3525
      %v3527 = vpop.f32.mrb[0].mxu0
      %3528 = vdwg.mxu0
      %s3529 = scalar_lea.vmem [#allocation2], 96
      %v3530 = vld [vmem:[%s3529 + $0x4] sm:$0xff]
      %v3531 = vld [vmem:[%s3529 + $0xc] sm:$0xff]
      %v3532 = vld [vmem:[%s3529 + $0x1c] sm:$0xff]
      %v3533 = vld [vmem:[%s3529 + $0x24] sm:$0xff]
      %v3534 = vld [vmem:[%s3529 + $0x34] sm:$0xff]
      %v3535 = vld [vmem:[%s3529 + $0x3c] sm:$0xff]
      %v3536 = vld [vmem:[%s3529 + $0x4c] sm:$0xff]
      %v3537 = vld [vmem:[%s3529 + $0x54] sm:$0xff]
      %v3538 = vld [vmem:[%s3529 + $0x64] sm:$0xff]
      %v3539 = vld [vmem:[%s3529 + $0x6c] sm:$0xff]
      %v3540 = vld [vmem:[%s3529 + $0x7c] sm:$0xff]
      %v3541 = vld [vmem:[%s3529 + $0x84] sm:$0xff]
      %v3542 = vld [vmem:[%s3529 + $0x94] sm:$0xff]
      %v3543 = vld [vmem:[%s3529 + $0x9c] sm:$0xff]
      %v3544 = vld [vmem:[%s3529 + $0xac] sm:$0xff]
      %v3545 = vld [vmem:[%s3529 + $0xb4] sm:$0xff]
      %v3546 = vadd.f32 %v3530, %v3467
      %v3547 = vadd.f32 %v3531, %v3470
      %v3548 = vadd.f32 %v3532, %v3475
      %v3549 = vadd.f32 %v3533, %v3478
      %v3550 = vadd.f32 %v3534, %v3483
      %v3551 = vadd.f32 %v3535, %v3486
      %v3552 = vadd.f32 %v3536, %v3491
      %v3553 = vadd.f32 %v3537, %v3494
      %v3554 = vadd.f32 %v3538, %v3499
      %v3555 = vadd.f32 %v3539, %v3502
      %v3556 = vadd.f32 %v3540, %v3507
      %v3557 = vadd.f32 %v3541, %v3510
      %v3558 = vadd.f32 %v3542, %v3515
      %v3559 = vadd.f32 %v3543, %v3518
      %v3560 = vadd.f32 %v3544, %v3523
      %v3561 = vadd.f32 %v3545, %v3526
      %3562 = vst [vmem:[%s3529 + $0x4] sm:$0xff] %v3546
      %3563 = vst [vmem:[%s3529 + $0xc] sm:$0xff] %v3547
      %3564 = vst [vmem:[%s3529 + $0x1c] sm:$0xff] %v3548
      %3565 = vst [vmem:[%s3529 + $0x24] sm:$0xff] %v3549
      %3566 = vst [vmem:[%s3529 + $0x34] sm:$0xff] %v3550
      %3567 = vst [vmem:[%s3529 + $0x3c] sm:$0xff] %v3551
      %3568 = vst [vmem:[%s3529 + $0x4c] sm:$0xff] %v3552
      %3569 = vst [vmem:[%s3529 + $0x54] sm:$0xff] %v3553
      %3570 = vst [vmem:[%s3529 + $0x64] sm:$0xff] %v3554
      %3571 = vst [vmem:[%s3529 + $0x6c] sm:$0xff] %v3555
      %3572 = vst [vmem:[%s3529 + $0x7c] sm:$0xff] %v3556
      %3573 = vst [vmem:[%s3529 + $0x84] sm:$0xff] %v3557
      %3574 = vst [vmem:[%s3529 + $0x94] sm:$0xff] %v3558
      %3575 = vst [vmem:[%s3529 + $0x9c] sm:$0xff] %v3559
      %3576 = vst [vmem:[%s3529 + $0xac] sm:$0xff] %v3560
      %3577 = vst [vmem:[%s3529 + $0xb4] sm:$0xff] %v3561
      %v3578 = vld [vmem:[%s496] sm:$0xff]
      %v3579 = vld [vmem:[%s496 + $0x8] sm:$0xff]
      %v3580 = vld [vmem:[%s496 + $0x10] sm:$0xff]
      %v3581 = vld [vmem:[%s496 + $0x18] sm:$0xff]
      %v3582 = vld [vmem:[%s496 + $0x20] sm:$0xff]
      %v3583 = vld [vmem:[%s496 + $0x28] sm:$0xff]
      %v3584 = vld [vmem:[%s496 + $0x30] sm:$0xff]
      %v3585 = vld [vmem:[%s496 + $0x38] sm:$0xff]
      %v3586 = vld [vmem:[%s496 + $0x40] sm:$0xff]
      %v3587 = vld [vmem:[%s496 + $0x48] sm:$0xff]
      %v3588 = vld [vmem:[%s496 + $0x50] sm:$0xff]
      %v3589 = vld [vmem:[%s496 + $0x58] sm:$0xff]
      %v3590 = vld [vmem:[%s496 + $0x60] sm:$0xff]
      %v3591 = vld [vmem:[%s496 + $0x68] sm:$0xff]
      %v3592 = vld [vmem:[%s496 + $0x70] sm:$0xff]
      %v3593 = vld [vmem:[%s496 + $0x78] sm:$0xff]
      %v3594 = vadd.f32 %v3578, %v3467
      %v3595 = vadd.f32 %v3579, %v3470
      %v3596 = vadd.f32 %v3580, %v3475
      %v3597 = vadd.f32 %v3581, %v3478
      %v3598 = vadd.f32 %v3582, %v3483
      %v3599 = vadd.f32 %v3583, %v3486
      %v3600 = vadd.f32 %v3584, %v3491
      %v3601 = vadd.f32 %v3585, %v3494
      %v3602 = vadd.f32 %v3586, %v3499
      %v3603 = vadd.f32 %v3587, %v3502
      %v3604 = vadd.f32 %v3588, %v3507
      %v3605 = vadd.f32 %v3589, %v3510
      %v3606 = vadd.f32 %v3590, %v3515
      %v3607 = vadd.f32 %v3591, %v3518
      %v3608 = vadd.f32 %v3592, %v3523
      %v3609 = vadd.f32 %v3593, %v3526
      %3610 = vst [vmem:[%s496] sm:$0xff] %v3594
      %3611 = vst [vmem:[%s496 + $0x8] sm:$0xff] %v3595
      %3612 = vst [vmem:[%s496 + $0x10] sm:$0xff] %v3596
      %3613 = vst [vmem:[%s496 + $0x18] sm:$0xff] %v3597
      %3614 = vst [vmem:[%s496 + $0x20] sm:$0xff] %v3598
      %3615 = vst [vmem:[%s496 + $0x28] sm:$0xff] %v3599
      %3616 = vst [vmem:[%s496 + $0x30] sm:$0xff] %v3600
      %3617 = vst [vmem:[%s496 + $0x38] sm:$0xff] %v3601
      %3618 = vst [vmem:[%s496 + $0x40] sm:$0xff] %v3602
      %3619 = vst [vmem:[%s496 + $0x48] sm:$0xff] %v3603
      %3620 = vst [vmem:[%s496 + $0x50] sm:$0xff] %v3604
      %3621 = vst [vmem:[%s496 + $0x58] sm:$0xff] %v3605
      %3622 = vst [vmem:[%s496 + $0x60] sm:$0xff] %v3606
      %3623 = vst [vmem:[%s496 + $0x68] sm:$0xff] %v3607
      %3624 = vst [vmem:[%s496 + $0x70] sm:$0xff] %v3608
      %3625 = vst [vmem:[%s496 + $0x78] sm:$0xff] %v3609
      %p3626 = scmp.lt.s32.totalorder %s31, 1
      %s3627 = scalar_select %p3626, %s31, 1
      %s3628 = smul.addr %s3627, 16
      %s3629 = smul.addr %s3628, 8
      %s3630 = scalar_lea.vmem %s10, %s3629
      // Predicated region
      $region61: #{diffeeg_forward.4} parent=55 // pred_check
        %p3631 = pneg %p291
      $region62: #{diffeeg_forward.4} parent=55 // pred_check_branch
        %3633 = sbr.rel (%p3631) target = $region64
      $region63: #{diffeeg_forward.4} parent=55 // pred_region
        _
      $region64: #{diffeeg_forward.4} parent=55 // pred_fallthru
        _
    $region56: #{diffeeg_forward.4} parent=5 // pred_fallthru
      _
    %p3634 = scmp.le.s32.totalorder 2, %s22
    // Predicated region
    $region65: #{diffeeg_forward.4} parent=5 // pred_check
      %p3635 = pneg %p3634
    $region66: #{diffeeg_forward.4} parent=5 // pred_check_branch
      %3637 = sbr.rel (%p3635) target = $region68
    $region67: #{diffeeg_forward.4} parent=5 // pred_region
      %s3638 = ssub.s32 %s22, 2
      // Predicated region
      $region69: #{diffeeg_forward.4} parent=67 // pred_check
        %p3639 = pneg %p297
      $region70: #{diffeeg_forward.4} parent=67 // pred_check_branch
        %3641 = sbr.rel (%p3639) target = $region72
      $region71: #{diffeeg_forward.4} parent=67 // pred_region
        %p3642 = scmp.lt.s32.totalorder %s33, 1
        %s3643 = scalar_select %p3642, %s33, 1
        %s3644 = smul.addr %s3643, 16
        %s3645 = smul.addr %s3644, 8
        %s3646 = scalar_lea.vmem %s10, %s3645
      $region72: #{diffeeg_forward.4} parent=67 // pred_fallthru
        _
    $region68: #{diffeeg_forward.4} parent=5 // pred_fallthru
      _
  $region6: #{diffeeg_forward.4} parent=0 // loop_footer
    %s26 = sadd.s32 1, %s22
  $region7: #{diffeeg_forward.4} parent=0 // loop_footer_branch
    %21 = sbr.rel target = $region3
  $region8: #{diffeeg_forward.4} parent=0 // loop_exit
    _

</llo_original>
